<compile_context>
chip_gen: v7x
topology: tpu7x:2x2x1
jax: 0.10.0
libtpu: 0.0.40
codegen_flags: <defaults>
</compile_context>

<pallas_src>
import functools
import math

import numpy as np
import jax
import jax.numpy as jnp
from jax.experimental import pallas as pl
from jax.experimental.pallas import tpu as pltpu


_LEAKY_SLOPE = 0.01                      # nn.LeakyReLU() default


# ------------------------------------------------------------------ helpers

def _vmem_limit():
    """Per-generation scoped-VMEM budget (<=48 MiB on v7x, ~96 MiB on v5e/v6e)."""
    try:
        cap = int(pltpu.get_tpu_info().vmem_capacity_bytes)
    except Exception:
        cap = 128 * 1024 * 1024
    return int(min(100 * 1024 * 1024, max(32 * 1024 * 1024, cap * 3 // 4)))


def _pick_tile(total, cap, mult):
    """Largest divisor of `total` <= cap that is a multiple of `mult` (else `total`)."""
    if total <= cap:
        return total
    for t in range(cap, mult - 1, -1):
        if total % t == 0 and t % mult == 0:
            return t
    return total


def _pick_div(total, cap):
    for c in range(min(cap, total), 0, -1):
        if total % c == 0:
            return c
    return 1


def _bilinear_up_matrix(n):
    """(2n, n) operator of PyTorch bilinear x2 upsample, align_corners=False."""
    U = np.zeros((2 * n, n), dtype=np.float32)
    for i in range(n):
        U[2 * i, max(i - 1, 0)] += 0.25
        U[2 * i, i] += 0.75
        U[2 * i + 1, i] += 0.75
        U[2 * i + 1, min(i + 1, n - 1)] += 0.25
    return U


# ------------------------------------------------------------------ kernel 1
# conv1 (im2col matmul) + LeakyReLU + fused QKV + flash-style attention.

def _conv_attn_kernel(pq_ref, pkv_ref, wc_ref, bc_ref, wqkv_ref, bqkv_ref,
                      o_ref, q_scr, m_scr, l_scr, acc_scr, *, scale, c8):
    ki = pl.program_id(2)

    @pl.when(ki == 0)
    def _init():
        # conv1 + LeakyReLU + q projection for this q tile (once per (b, qi)).
        y_q = jnp.dot(pq_ref[0], wc_ref[...],
                      preferred_element_type=jnp.float32) + bc_ref[...]
        y_q = jnp.where(y_q >= 0, y_q, _LEAKY_SLOPE * y_q).astype(jnp.bfloat16)
        qkv_q = jnp.dot(y_q, wqkv_ref[...],
                        preferred_element_type=jnp.float32) + bqkv_ref[...]
        q_scr[...] = qkv_q[:, :c8].astype(jnp.bfloat16)
        m_scr[...] = jnp.full_like(m_scr, -jnp.inf)
        l_scr[...] = jnp.zeros_like(l_scr)
        acc_scr[...] = jnp.zeros_like(acc_scr)

    # conv1 + LeakyReLU + k/v projection for the current kv tile.
    y_kv = jnp.dot(pkv_ref[0], wc_ref[...],
                   preferred_element_type=jnp.float32) + bc_ref[...]
    y_kv = jnp.where(y_kv >= 0, y_kv, _LEAKY_SLOPE * y_kv).astype(jnp.bfloat16)
    kv = jnp.dot(y_kv, wqkv_ref[...],
                 preferred_element_type=jnp.float32) + bqkv_ref[...]
    k_t = kv[:, c8:2 * c8].astype(jnp.bfloat16)          # (tk, C8)
    v_t = kv[:, 2 * c8:].astype(jnp.bfloat16)            # (tk, Cout)

    # online-softmax update (energy[i,j] = sum_c q[i,c] k[j,c], scaled by 1/sqrt(HW))
    s = jax.lax.dot_general(q_scr[...], k_t, (((1,), (1,)), ((), ())),
                            preferred_element_type=jnp.float32) * scale
    m_new = jnp.maximum(m_scr[...], jnp.max(s, axis=-1, keepdims=True))
    alpha = jnp.exp(m_scr[...] - m_new)
    p = jnp.exp(s - m_new)
    l_scr[...] = alpha * l_scr[...] + jnp.sum(p, axis=-1, keepdims=True)
    acc_scr[...] = alpha * acc_scr[...] + jnp.dot(
        p.astype(jnp.bfloat16), v_t, preferred_element_type=jnp.float32)
    m_scr[...] = m_new

    @pl.when(ki == pl.num_programs(2) - 1)
    def _fin():
        o_ref[0] = (acc_scr[...] *
                    pl.reciprocal(l_scr[...], approx=True)).astype(o_ref.dtype)


def conv1_attention(P, Wc, bc, Wqkv, bqkv, *, c8, tq, tk):
    B, HW, K = P.shape
    Cout = Wc.shape[1]
    nqkv = Wqkv.shape[1]
    scale = 1.0 / math.sqrt(HW)
    qt, kt = HW // tq, HW // tk

    flops = (B * qt * kt * 2 * tk * (K * Cout + Cout * nqkv)     # kv conv + proj
             + B * qt * 2 * tq * (K * Cout + Cout * nqkv)        # q conv + proj
             + B * qt * kt * 2 * tq * tk * (c8 + Cout))          # energy + attn @ v
    cost = pl.CostEstimate(
        flops=int(flops),
        transcendentals=int(B * qt * kt * tq * (tk + 1)),
        bytes_accessed=int(P.size * P.dtype.itemsize * (1 + qt) + B * HW * Cout * 2))

    def const(shape):
        return pl.BlockSpec(shape, lambda b, qi, ki: (0, 0))

    return pl.pallas_call(
        functools.partial(_conv_attn_kernel, scale=scale, c8=c8),
        out_shape=jax.ShapeDtypeStruct((B, HW, Cout), jnp.bfloat16),
        grid=(B, qt, kt),
        in_specs=[
            pl.BlockSpec((1, tq, K), lambda b, qi, ki: (b, qi, 0)),   # patches, q tile
            pl.BlockSpec((1, tk, K), lambda b, qi, ki: (b, ki, 0)),   # patches, kv tile
            const(Wc.shape), const(bc.shape), const(Wqkv.shape), const(bqkv.shape),
        ],
        out_specs=pl.BlockSpec((1, tq, Cout), lambda b, qi, ki: (b, qi, 0)),
        scratch_shapes=[
            pltpu.VMEM((tq, c8), jnp.bfloat16),    # q tile
            pltpu.VMEM((tq, 1), jnp.float32),      # running max
            pltpu.VMEM((tq, 1), jnp.float32),      # running sum
            pltpu.VMEM((tq, Cout), jnp.float32),   # output accumulator
        ],
        compiler_params=pltpu.CompilerParams(
            dimension_semantics=("parallel", "parallel", "arbitrary"),
            vmem_limit_bytes=_vmem_limit()),
        cost_estimate=cost,
    )(P, P, Wc, bc, Wqkv, bqkv)


# ------------------------------------------------------------------ kernel 2
# Residual 1x1 conv as a true (Cout, Cin) @ (Cin, H*W) matmul (no kron expansion).

def _residual_conv_kernel(x_ref, wr_ref, br_ref, o_ref):
    o_ref[0] = jnp.dot(wr_ref[...], x_ref[0],
                       preferred_element_type=jnp.float32) + br_ref[...]


def residual_conv(xf, Wr, br):
    B, Cin, HWx = xf.shape
    Cout = Wr.shape[0]
    ts = _pick_tile(HWx, 4096, 128)
    return pl.pallas_call(
        _residual_conv_kernel,
        out_shape=jax.ShapeDtypeStruct((B, Cout, HWx), jnp.float32),
        grid=(B, HWx // ts),
        in_specs=[
            pl.BlockSpec((1, Cin, ts), lambda b, t: (b, 0, t)),
            pl.BlockSpec(Wr.shape, lambda b, t: (0, 0)),
            pl.BlockSpec(br.shape, lambda b, t: (0, 0)),
        ],
        out_specs=pl.BlockSpec((1, Cout, ts), lambda b, t: (b, 0, t)),
        compiler_params=pltpu.CompilerParams(
            dimension_semantics=("parallel", "parallel"),
            vmem_limit_bytes=_vmem_limit()),
    )(xf, Wr, br)


# ------------------------------------------------------------------ kernel 3
# Bilinear x2 upsample (separable, per-channel UH @ A_c @ UW^T) + residual add, NCHW out.

def _upsample_add_kernel(a_ref, r_ref, uh_ref, uwt_ref, o_ref, *, cb):
    for j in range(cb):                                   # static, unrolled channel loop
        t = jnp.dot(uh_ref[...], a_ref[0, j],
                    preferred_element_type=jnp.float32)            # (H, Wo)
        up = jnp.dot(t.astype(jnp.bfloat16), uwt_ref[...],
                     preferred_element_type=jnp.float32)           # (H, W)
        o_ref[0, j] = up + r_ref[0, j]


def upsample_add(a, res, UH, UWt):
    B, Cout, Ho, Wo = a.shape
    H, W = UH.shape[0], UWt.shape[1]
    cb = _pick_div(Cout, 8)
    return pl.pallas_call(
        functools.partial(_upsample_add_kernel, cb=cb),
        out_shape=jax.ShapeDtypeStruct((B, Cout, H, W), jnp.float32),
        grid=(B, Cout // cb),
        in_specs=[
            pl.BlockSpec((1, cb, Ho, Wo), lambda b, c: (b, c, 0, 0)),
            pl.BlockSpec((1, cb, H, W), lambda b, c: (b, c, 0, 0)),
            pl.BlockSpec(UH.shape, lambda b, c: (0, 0)),
            pl.BlockSpec(UWt.shape, lambda b, c: (0, 0)),
        ],
        out_specs=pl.BlockSpec((1, cb, H, W), lambda b, c: (b, c, 0, 0)),
        compiler_params=pltpu.CompilerParams(
            dimension_semantics=("parallel", "parallel"),
            vmem_limit_bytes=_vmem_limit()),
    )(a, res, UH, UWt)


# ------------------------------------------------------------------ wrapper

def residual_block_forward(params, x, *, kernel_size, stride, dilation,
                           q_tile=512, kv_tile=512):
    B, Cin, H, W = x.shape
    Cout = params["conv1_w"].shape[0]
    C8 = params["q_w"].shape[0]
    k, d, s = kernel_size, dilation, stride

    # conv1 geometry: ReflectionPad2d(d*(k-1)//2) + Conv2d(k, stride, pad=0, dilation)
    pad = d * (k - 1) // 2
    xp = jnp.pad(x, ((0, 0), (0, 0), (pad, pad), (pad, pad)), mode="reflect")
    Hp, Wp = H + 2 * pad, W + 2 * pad
    Ho = (Hp - d * (k - 1) - 1) // s + 1
    Wo = (Wp - d * (k - 1) - 1) // s + 1
    HW = Ho * Wo

    # TODO(synk): build im2col windows inside kernel 1 (pl.ds on the padded input) to
    # avoid this k*k HBM expansion; kept as XLA slicing here for lowering safety.
    xp_nhwc = xp.transpose(0, 2, 3, 1)
    cols = [xp_nhwc[:, kh * d: kh * d + (Ho - 1) * s + 1: s,
                    kw * d: kw * d + (Wo - 1) * s + 1: s, :]
            for kh in range(k) for kw in range(k)]
    K = Cin * k * k
    P = jnp.concatenate(cols, axis=-1).reshape(B, HW, K).astype(jnp.bfloat16)

    Wc = params["conv1_w"].transpose(2, 3, 1, 0).reshape(K, Cout).astype(jnp.bfloat16)
    bc = params["conv1_b"].reshape(1, Cout)
    Wq = params["q_w"].reshape(C8, Cout)
    Wk = params["k_w"].reshape(C8, Cout)
    Wv = params["v_w"].reshape(Cout, Cout)
    Wqkv = jnp.concatenate([Wq.T, Wk.T, Wv.T], axis=1).astype(jnp.bfloat16)
    bqkv = jnp.concatenate([params["q_b"], params["k_b"],
                            params["v_b"]]).reshape(1, 2 * C8 + Cout)

    tq = _pick_tile(HW, q_tile, 8)
    tk = _pick_tile(HW, kv_tile, 8)
    attn = conv1_attention(P, Wc, bc, Wqkv, bqkv, c8=C8, tq=tq, tk=tk)  # (B,HW,Cout) bf16

    # PyTorch: out.view(B, C, H, W) of the (B, HW, C) tensor is a raw reshape of the
    # same contiguous buffer -> free XLA reshape, no transpose.
    attn_nchw = attn.reshape(B, Cout, Ho, Wo)

    # `out += residual` requires upsample(2x) of (Ho, Wo) == (H, W).
    assert 2 * Ho == H and 2 * Wo == W, \
        "residual add requires the 2x upsample to restore (H, W) (use stride=2)"

    UH = jnp.asarray(_bilinear_up_matrix(Ho), dtype=jnp.bfloat16)       # (H, Ho)
    UWt = jnp.asarray(_bilinear_up_matrix(Wo).T, dtype=jnp.bfloat16)    # (Wo, W)

    if "res_w" in params:
        Wr = params["res_w"].reshape(Cout, Cin).astype(jnp.bfloat16)
        br = params["res_b"].reshape(Cout, 1)
        res = residual_conv(x.reshape(B, Cin, H * W).astype(jnp.bfloat16), Wr, br)
        res = res.reshape(B, Cout, H, W)                 # free contiguous reshape
    else:
        res = x                                          # exact f32 skip add

    return upsample_add(attn_nchw, res, UH, UWt)         # (B, Cout, H, W) f32, NCHW


# ------------------------------------------------------------------ reference (XLA, f32)

def _reference_forward(params, x, *, kernel_size, stride, dilation):
    hi = jax.lax.Precision.HIGHEST
    k, d, s = kernel_size, dilation, stride
    Cout = params["conv1_w"].shape[0]
    Cin = x.shape[1]
    pad = d * (k - 1) // 2
    xp = jnp.pad(x, ((0, 0), (0, 0), (pad, pad), (pad, pad)), mode="reflect")
    y = jax.lax.conv_general_dilated(
        xp, params["conv1_w"], (s, s), "VALID", rhs_dilation=(d, d),
        dimension_numbers=("NCHW", "OIHW", "NCHW"), precision=hi)
    y = y + params["conv1_b"][None, :, None, None]
    y = jnp.where(y >= 0, y, _LEAKY_SLOPE * y)
    B, C, Ho, Wo = y.shape
    HW = Ho * Wo
    yf = y.reshape(B, C, HW)

    def proj(w, b):
        return jnp.einsum("oc,bcp->bop", w.reshape(w.shape[0], C), yf,
                          precision=hi) + b[None, :, None]

    q = proj(params["q_w"], params["q_b"])
    kk = proj(params["k_w"], params["k_b"])
    v = proj(params["v_w"], params["v_b"])
    energy = jnp.einsum("bcp,bcq->bpq", q, kk, precision=hi)
    attn = jax.nn.softmax(energy / math.sqrt(HW), axis=-1)
    out = jnp.einsum("bpq,bcq->bpc", attn, v, precision=hi)       # (B, HW, C)
    out = out.reshape(B, C, Ho, Wo)                               # raw view quirk
    UH = jnp.asarray(_bilinear_up_matrix(Ho))
    UW = jnp.asarray(_bilinear_up_matrix(Wo))
    up = jnp.einsum("hH,bcHW,wW->bchw", UH, out, UW, precision=hi)
    if "res_w" in params:
        res = jnp.einsum("oi,bihw->bohw", params["res_w"].reshape(Cout, Cin), x,
                         precision=hi) + params["res_b"][None, :, None, None]
    else:
        res = x
    return up + res


# ------------------------------------------------------------------ params / demo

def init_params(key, in_channels, out_channels, kernel_size):
    keys = jax.random.split(key, 10)

    def n(kk, shape, scale=0.1):
        return scale * jax.random.normal(kk, shape, dtype=jnp.float32)

    p = {
        "conv1_w": n(keys[0], (out_channels, in_channels, kernel_size, kernel_size)),
        "conv1_b": n(keys[1], (out_channels,)),
        "q_w": n(keys[2], (out_channels // 8, out_channels, 1, 1)),
        "q_b": n(keys[3], (out_channels // 8,)),
        "k_w": n(keys[4], (out_channels // 8, out_channels, 1, 1)),
        "k_b": n(keys[5], (out_channels // 8,)),
        "v_w": n(keys[6], (out_channels, out_channels, 1, 1)),
        "v_b": n(keys[7], (out_channels,)),
    }
    if in_channels != out_channels:
        p["res_w"] = n(keys[8], (out_channels, in_channels, 1, 1))
        p["res_b"] = n(keys[9], (out_channels,))
    return p


if __name__ == "__main__":
    def run_case(seed, cin, cout, hw, ksz, stride, dilation, q_tile, kv_tile):
        kx, kp = jax.random.split(jax.random.PRNGKey(seed))
        x = jax.random.normal(kx, (2, cin, hw, hw), dtype=jnp.float32)
        params = init_params(kp, cin, cout, ksz)
        fwd = jax.jit(functools.partial(
            residual_block_forward, kernel_size=ksz, stride=stride,
            dilation=dilation, q_tile=q_tile, kv_tile=kv_tile))
        out = jax.block_until_ready(fwd(params, x))
        ref = jax.block_until_ready(_reference_forward(
            params, x, kernel_size=ksz, stride=stride, dilation=dilation))
        assert out.shape == (2, cout, hw, hw) and out.dtype == jnp.float32
        err = float(jnp.max(jnp.abs(out - ref)))
        bound = 5e-2 * (1.0 + float(jnp.max(jnp.abs(ref))))
        assert err <= bound, f"mismatch: max|diff|={err:.3e} > {bound:.3e}"

    # 1) default tiling (single q/kv tile), Cin != Cout -> residual 1x1 conv path
    run_case(0, 4, 16, 16, 3, 2, 1, 512, 512)
    # 2) forced multi-tile flash-attention path (q_tiles=4, kv_tiles=2) + dilation=2
    run_case(1, 4, 16, 16, 3, 2, 2, 16, 32)
    # 3) Cin == Cout -> exact f32 skip-add path, mixed q/kv tiling
    run_case(2, 16, 16, 16, 3, 2, 1, 32, 16)

    print("KERNEL_OK")
</pallas_src>

<mosaic_0001>
module attributes {stable_mosaic.version = 11 : i64} {
  func.func @_residual_conv_kernel(%arg0: i32, %arg1: i32, %arg2: memref<1x4x256xbf16, #tpu.memory_space<vmem>>, %arg3: memref<16x4xbf16, #tpu.memory_space<vmem>>, %arg4: memref<16x1xf32, #tpu.memory_space<vmem>>, %arg5: memref<1x16x256xf32, #tpu.memory_space<vmem>>) attributes {dimension_semantics = [#tpu.dimension_semantics<parallel>, #tpu.dimension_semantics<parallel>], iteration_bounds = array<i64: 2, 1>, scalar_prefetch = 0 : i64, scratch_operands = 0 : i64, tpu.core_type = #tpu.core_type<tc>, window_params = [{transform_indices = @transform_0, window_bounds = array<i64: 1, 4, 256>}, {pipeline_mode = #tpu.pipeline_mode<synchronous>, transform_indices = @transform_1, window_bounds = array<i64: 16, 4>}, {pipeline_mode = #tpu.pipeline_mode<synchronous>, transform_indices = @transform_2, window_bounds = array<i64: 16, 1>}, {transform_indices = @transform_3, window_bounds = array<i64: 1, 16, 256>}]} {
    %c0 = arith.constant 0 : index
    %c0_0 = arith.constant 0 : index
    %0 = vector.load %arg3[%c0, %c0_0] : memref<16x4xbf16, #tpu.memory_space<vmem>>, vector<16x4xbf16>
    %c0_1 = arith.constant 0 : index
    %c0_2 = arith.constant 0 : index
    %c0_3 = arith.constant 0 : index
    %1 = vector.load %arg2[%c0_1, %c0_2, %c0_3] : memref<1x4x256xbf16, #tpu.memory_space<vmem>>, vector<1x4x256xbf16>
    %2 = vector.shape_cast %1 : vector<1x4x256xbf16> to vector<4x256xbf16>
    %cst = arith.constant dense<0.000000e+00> : vector<16x256xf32>
    %3 = tpu.matmul %0, %2, %cst {dimension_numbers = #tpu.dot_dimension_numbers<[1], [0], [0], [1], [0, 0, 1, 1], [], []>} : vector<16x4xbf16>, vector<4x256xbf16>, vector<16x256xf32> -> vector<16x256xf32>
    %c0_4 = arith.constant 0 : index
    %c0_5 = arith.constant 0 : index
    %4 = vector.load %arg4[%c0_4, %c0_5] : memref<16x1xf32, #tpu.memory_space<vmem>>, vector<16x1xf32>
    %5 = vector.broadcast %4 : vector<16x1xf32> to vector<16x256xf32>
    %6 = arith.addf %3, %5 : vector<16x256xf32>
    %c0_6 = arith.constant 0 : index
    %c0_7 = arith.constant 0 : index
    %c0_8 = arith.constant 0 : index
    %7 = vector.load %arg5[%c0_6, %c0_7, %c0_8] : memref<1x16x256xf32, #tpu.memory_space<vmem>>, vector<1x16x256xf32>
    %8 = vector.shape_cast %7 : vector<1x16x256xf32> to vector<16x256xf32>
    %9 = vector.shape_cast %6 : vector<16x256xf32> to vector<1x16x256xf32>
    tpu.vector_store %arg5[%c0_6, %c0_7, %c0_8], %9 {strides = array<i32>} : memref<1x16x256xf32, #tpu.memory_space<vmem>>, vector<1x16x256xf32>,
    return
  }
  func.func @transform_0(%arg0: i32, %arg1: i32) -> (i32, i32, i32) {
    %c0_i32 = arith.constant 0 : i32
    %c0_i32_0 = arith.constant 0 : i32
    return %arg0, %c0_i32, %arg1 : i32, i32, i32
  }
  func.func @transform_1(%arg0: i32, %arg1: i32) -> (i32, i32) {
    %c0_i32 = arith.constant 0 : i32
    %c0_i32_0 = arith.constant 0 : i32
    %c0_i32_1 = arith.constant 0 : i32
    return %c0_i32, %c0_i32_0 : i32, i32
  }
  func.func @transform_2(%arg0: i32, %arg1: i32) -> (i32, i32) {
    %c0_i32 = arith.constant 0 : i32
    %c0_i32_0 = arith.constant 0 : i32
    %c0_i32_1 = arith.constant 0 : i32
    return %c0_i32, %c0_i32_0 : i32, i32
  }
  func.func @transform_3(%arg0: i32, %arg1: i32) -> (i32, i32, i32) {
    %c0_i32 = arith.constant 0 : i32
    %c0_i32_0 = arith.constant 0 : i32
    return %arg0, %c0_i32, %arg1 : i32, i32, i32
  }
}

module attributes {stable_mosaic.version = 11 : i64} {
  func.func @_conv_attn_kernel(%arg0: i32, %arg1: i32, %arg2: i32, %arg3: memref<1x64x36xbf16, #tpu.memory_space<vmem>>, %arg4: memref<1x64x36xbf16, #tpu.memory_space<vmem>>, %arg5: memref<36x16xbf16, #tpu.memory_space<vmem>>, %arg6: memref<1x16xf32, #tpu.memory_space<vmem>>, %arg7: memref<16x20xbf16, #tpu.memory_space<vmem>>, %arg8: memref<1x20xf32, #tpu.memory_space<vmem>>, %arg9: memref<1x64x16xbf16, #tpu.memory_space<vmem>>, %arg10: memref<64x2xbf16, #tpu.memory_space<vmem>>, %arg11: memref<64x1xf32, #tpu.memory_space<vmem>>, %arg12: memref<64x1xf32, #tpu.memory_space<vmem>>, %arg13: memref<64x16xf32, #tpu.memory_space<vmem>>) attributes {dimension_semantics = [#tpu.dimension_semantics<parallel>, #tpu.dimension_semantics<parallel>, #tpu.dimension_semantics<arbitrary>], iteration_bounds = array<i64: 2, 1, 1>, scalar_prefetch = 0 : i64, scratch_operands = 4 : i64, tpu.core_type = #tpu.core_type<tc>, window_params = [{transform_indices = @transform_0, window_bounds = array<i64: 1, 64, 36>}, {transform_indices = @transform_1, window_bounds = array<i64: 1, 64, 36>}, {pipeline_mode = #tpu.pipeline_mode<synchronous>, transform_indices = @transform_2, window_bounds = array<i64: 36, 16>}, {pipeline_mode = #tpu.pipeline_mode<synchronous>, transform_indices = @transform_3, window_bounds = array<i64: 1, 16>}, {pipeline_mode = #tpu.pipeline_mode<synchronous>, transform_indices = @transform_4, window_bounds = array<i64: 16, 20>}, {pipeline_mode = #tpu.pipeline_mode<synchronous>, transform_indices = @transform_5, window_bounds = array<i64: 1, 20>}, {transform_indices = @transform_6, window_bounds = array<i64: 1, 64, 16>}]} {
    %c0_i32 = arith.constant 0 : i32
    %0 = arith.cmpi eq, %arg2, %c0_i32 : i32
    %1 = arith.extui %0 : i1 to i32
    %c0_i32_0 = arith.constant 0 : i32
    %2 = arith.cmpi ne, %1, %c0_i32_0 : i32
    scf.if %2 {
      %c0_37 = arith.constant 0 : index
      %c0_38 = arith.constant 0 : index
      %c0_39 = arith.constant 0 : index
      %56 = vector.load %arg3[%c0_37, %c0_38, %c0_39] : memref<1x64x36xbf16, #tpu.memory_space<vmem>>, vector<1x64x36xbf16>
      %57 = vector.shape_cast %56 : vector<1x64x36xbf16> to vector<64x36xbf16>
      %c0_40 = arith.constant 0 : index
      %c0_41 = arith.constant 0 : index
      %58 = vector.load %arg5[%c0_40, %c0_41] : memref<36x16xbf16, #tpu.memory_space<vmem>>, vector<36x16xbf16>
      %cst_42 = arith.constant dense<0.000000e+00> : vector<64x16xf32>
      %59 = tpu.matmul %57, %58, %cst_42 {dimension_numbers = #tpu.dot_dimension_numbers<[1], [0], [0], [1], [0, 0, 1, 1], [], []>} : vector<64x36xbf16>, vector<36x16xbf16>, vector<64x16xf32> -> vector<64x16xf32>
      %c0_43 = arith.constant 0 : index
      %c0_44 = arith.constant 0 : index
      %60 = vector.load %arg6[%c0_43, %c0_44] : memref<1x16xf32, #tpu.memory_space<vmem>>, vector<1x16xf32>
      %61 = vector.broadcast %60 : vector<1x16xf32> to vector<64x16xf32>
      %62 = arith.addf %59, %61 : vector<64x16xf32>
      %cst_45 = arith.constant 0.000000e+00 : f32
      %63 = vector.broadcast %cst_45 : f32 to vector<64x16xf32>
      %64 = arith.cmpf oge, %62, %63 : vector<64x16xf32>
      %cst_46 = arith.constant 0.00999999977 : f32
      %65 = vector.broadcast %cst_46 : f32 to vector<64x16xf32>
      %66 = arith.mulf %65, %62 : vector<64x16xf32>
      %67 = arith.select %64, %62, %66 : vector<64x16xi1>, vector<64x16xf32>
      %68 = arith.truncf %67 : vector<64x16xf32> to vector<64x16xbf16>
      %c0_47 = arith.constant 0 : index
      %c0_48 = arith.constant 0 : index
      %69 = vector.load %arg7[%c0_47, %c0_48] : memref<16x20xbf16, #tpu.memory_space<vmem>>, vector<16x20xbf16>
      %cst_49 = arith.constant dense<0.000000e+00> : vector<64x20xf32>
      %70 = tpu.matmul %68, %69, %cst_49 {dimension_numbers = #tpu.dot_dimension_numbers<[1], [0], [0], [1], [0, 0, 1, 1], [], []>} : vector<64x16xbf16>, vector<16x20xbf16>, vector<64x20xf32> -> vector<64x20xf32>
      %c0_50 = arith.constant 0 : index
      %c0_51 = arith.constant 0 : index
      %71 = vector.load %arg8[%c0_50, %c0_51] : memref<1x20xf32, #tpu.memory_space<vmem>>, vector<1x20xf32>
      %72 = vector.broadcast %71 : vector<1x20xf32> to vector<64x20xf32>
      %73 = arith.addf %70, %72 : vector<64x20xf32>
      %74 = vector.extract_strided_slice %73 {offsets = [0, 0], sizes = [64, 2], strides = [1, 1]} : vector<64x20xf32> to vector<64x2xf32>
      %75 = arith.truncf %74 : vector<64x2xf32> to vector<64x2xbf16>
      %c0_52 = arith.constant 0 : index
      %c0_53 = arith.constant 0 : index
      %76 = vector.load %arg10[%c0_52, %c0_53] : memref<64x2xbf16, #tpu.memory_space<vmem>>, vector<64x2xbf16>
      tpu.vector_store %arg10[%c0_52, %c0_53], %75 {strides = array<i32>} : memref<64x2xbf16, #tpu.memory_space<vmem>>, vector<64x2xbf16>,
      %cst_54 = arith.constant 0xFF800000 : f32
      %77 = vector.broadcast %cst_54 : f32 to vector<64x1xf32>
      %c0_55 = arith.constant 0 : index
      %c0_56 = arith.constant 0 : index
      %78 = vector.load %arg11[%c0_55, %c0_56] : memref<64x1xf32, #tpu.memory_space<vmem>>, vector<64x1xf32>
      tpu.vector_store %arg11[%c0_55, %c0_56], %77 {strides = array<i32>} : memref<64x1xf32, #tpu.memory_space<vmem>>, vector<64x1xf32>,
      %cst_57 = arith.constant 0.000000e+00 : f32
      %79 = vector.broadcast %cst_57 : f32 to vector<64x1xf32>
      %c0_58 = arith.constant 0 : index
      %c0_59 = arith.constant 0 : index
      %80 = vector.load %arg12[%c0_58, %c0_59] : memref<64x1xf32, #tpu.memory_space<vmem>>, vector<64x1xf32>
      tpu.vector_store %arg12[%c0_58, %c0_59], %79 {strides = array<i32>} : memref<64x1xf32, #tpu.memory_space<vmem>>, vector<64x1xf32>,
      %cst_60 = arith.constant 0.000000e+00 : f32
      %81 = vector.broadcast %cst_60 : f32 to vector<64x16xf32>
      %c0_61 = arith.constant 0 : index
      %c0_62 = arith.constant 0 : index
      %82 = vector.load %arg13[%c0_61, %c0_62] : memref<64x16xf32, #tpu.memory_space<vmem>>, vector<64x16xf32>
      tpu.vector_store %arg13[%c0_61, %c0_62], %81 {strides = array<i32>} : memref<64x16xf32, #tpu.memory_space<vmem>>, vector<64x16xf32>,
    } else {
    }
    %c0 = arith.constant 0 : index
    %c0_1 = arith.constant 0 : index
    %c0_2 = arith.constant 0 : index
    %3 = vector.load %arg4[%c0, %c0_1, %c0_2] : memref<1x64x36xbf16, #tpu.memory_space<vmem>>, vector<1x64x36xbf16>
    %4 = vector.shape_cast %3 : vector<1x64x36xbf16> to vector<64x36xbf16>
    %c0_3 = arith.constant 0 : index
    %c0_4 = arith.constant 0 : index
    %5 = vector.load %arg5[%c0_3, %c0_4] : memref<36x16xbf16, #tpu.memory_space<vmem>>, vector<36x16xbf16>
    %cst = arith.constant dense<0.000000e+00> : vector<64x16xf32>
    %6 = tpu.matmul %4, %5, %cst {dimension_numbers = #tpu.dot_dimension_numbers<[1], [0], [0], [1], [0, 0, 1, 1], [], []>} : vector<64x36xbf16>, vector<36x16xbf16>, vector<64x16xf32> -> vector<64x16xf32>
    %c0_5 = arith.constant 0 : index
    %c0_6 = arith.constant 0 : index
    %7 = vector.load %arg6[%c0_5, %c0_6] : memref<1x16xf32, #tpu.memory_space<vmem>>, vector<1x16xf32>
    %8 = vector.broadcast %7 : vector<1x16xf32> to vector<64x16xf32>
    %9 = arith.addf %6, %8 : vector<64x16xf32>
    %cst_7 = arith.constant 0.000000e+00 : f32
    %10 = vector.broadcast %cst_7 : f32 to vector<64x16xf32>
    %11 = arith.cmpf oge, %9, %10 : vector<64x16xf32>
    %cst_8 = arith.constant 0.00999999977 : f32
    %12 = vector.broadcast %cst_8 : f32 to vector<64x16xf32>
    %13 = arith.mulf %12, %9 : vector<64x16xf32>
    %14 = arith.select %11, %9, %13 : vector<64x16xi1>, vector<64x16xf32>
    %15 = arith.truncf %14 : vector<64x16xf32> to vector<64x16xbf16>
    %c0_9 = arith.constant 0 : index
    %c0_10 = arith.constant 0 : index
    %16 = vector.load %arg7[%c0_9, %c0_10] : memref<16x20xbf16, #tpu.memory_space<vmem>>, vector<16x20xbf16>
    %cst_11 = arith.constant dense<0.000000e+00> : vector<64x20xf32>
    %17 = tpu.matmul %15, %16, %cst_11 {dimension_numbers = #tpu.dot_dimension_numbers<[1], [0], [0], [1], [0, 0, 1, 1], [], []>} : vector<64x16xbf16>, vector<16x20xbf16>, vector<64x20xf32> -> vector<64x20xf32>
    %c0_12 = arith.constant 0 : index
    %c0_13 = arith.constant 0 : index
    %18 = vector.load %arg8[%c0_12, %c0_13] : memref<1x20xf32, #tpu.memory_space<vmem>>, vector<1x20xf32>
    %19 = vector.broadcast %18 : vector<1x20xf32> to vector<64x20xf32>
    %20 = arith.addf %17, %19 : vector<64x20xf32>
    %21 = vector.extract_strided_slice %20 {offsets = [0, 2], sizes = [64, 2], strides = [1, 1]} : vector<64x20xf32> to vector<64x2xf32>
    %22 = arith.truncf %21 : vector<64x2xf32> to vector<64x2xbf16>
    %23 = vector.extract_strided_slice %20 {offsets = [0, 4], sizes = [64, 16], strides = [1, 1]} : vector<64x20xf32> to vector<64x16xf32>
    %24 = arith.truncf %23 : vector<64x16xf32> to vector<64x16xbf16>
    %c0_14 = arith.constant 0 : index
    %c0_15 = arith.constant 0 : index
    %25 = vector.load %arg10[%c0_14, %c0_15] : memref<64x2xbf16, #tpu.memory_space<vmem>>, vector<64x2xbf16>
    %cst_16 = arith.constant dense<0.000000e+00> : vector<64x64xf32>
    %26 = tpu.matmul %25, %22, %cst_16 {dimension_numbers = #tpu.dot_dimension_numbers<[1], [1], [0], [0], [0, 0, 1, 0], [], []>} : vector<64x2xbf16>, vector<64x2xbf16>, vector<64x64xf32> -> vector<64x64xf32>
    %cst_17 = arith.constant 1.250000e-01 : f32
    %27 = vector.broadcast %cst_17 : f32 to vector<64x64xf32>
    %28 = arith.mulf %26, %27 : vector<64x64xf32>
    %c0_18 = arith.constant 0 : index
    %c0_19 = arith.constant 0 : index
    %29 = vector.load %arg11[%c0_18, %c0_19] : memref<64x1xf32, #tpu.memory_space<vmem>>, vector<64x1xf32>
    %cst_20 = arith.constant dense<0xFF800000> : vector<64xf32>
    %30 = vector.multi_reduction <maximumf>, %28, %cst_20 [1] : vector<64x64xf32> to vector<64xf32>
    %31 = vector.shape_cast %30 : vector<64xf32> to vector<64x1xf32>
    %32 = arith.maximumf %29, %31 : vector<64x1xf32>
    %c0_21 = arith.constant 0 : index
    %c0_22 = arith.constant 0 : index
    %33 = vector.load %arg11[%c0_21, %c0_22] : memref<64x1xf32, #tpu.memory_space<vmem>>, vector<64x1xf32>
    %34 = arith.subf %33, %32 : vector<64x1xf32>
    %35 = math.exp %34 : vector<64x1xf32>
    %36 = vector.broadcast %32 : vector<64x1xf32> to vector<64x64xf32>
    %37 = arith.subf %28, %36 : vector<64x64xf32>
    %38 = math.exp %37 : vector<64x64xf32>
    %c0_23 = arith.constant 0 : index
    %c0_24 = arith.constant 0 : index
    %39 = vector.load %arg12[%c0_23, %c0_24] : memref<64x1xf32, #tpu.memory_space<vmem>>, vector<64x1xf32>
    %40 = arith.mulf %35, %39 : vector<64x1xf32>
    %cst_25 = arith.constant dense<0.000000e+00> : vector<64xf32>
    %41 = vector.multi_reduction <add>, %38, %cst_25 [1] : vector<64x64xf32> to vector<64xf32>
    %42 = vector.shape_cast %41 : vector<64xf32> to vector<64x1xf32>
    %43 = arith.addf %40, %42 : vector<64x1xf32>
    %c0_26 = arith.constant 0 : index
    %c0_27 = arith.constant 0 : index
    %44 = vector.load %arg12[%c0_26, %c0_27] : memref<64x1xf32, #tpu.memory_space<vmem>>, vector<64x1xf32>
    tpu.vector_store %arg12[%c0_26, %c0_27], %43 {strides = array<i32>} : memref<64x1xf32, #tpu.memory_space<vmem>>, vector<64x1xf32>,
    %c0_28 = arith.constant 0 : index
    %c0_29 = arith.constant 0 : index
    %45 = vector.load %arg13[%c0_28, %c0_29] : memref<64x16xf32, #tpu.memory_space<vmem>>, vector<64x16xf32>
    %46 = vector.broadcast %35 : vector<64x1xf32> to vector<64x16xf32>
    %47 = arith.mulf %46, %45 : vector<64x16xf32>
    %48 = arith.truncf %38 : vector<64x64xf32> to vector<64x64xbf16>
    %cst_30 = arith.constant dense<0.000000e+00> : vector<64x16xf32>
    %49 = tpu.matmul %48, %24, %cst_30 {dimension_numbers = #tpu.dot_dimension_numbers<[1], [0], [0], [1], [0, 0, 1, 1], [], []>} : vector<64x64xbf16>, vector<64x16xbf16>, vector<64x16xf32> -> vector<64x16xf32>
    %50 = arith.addf %47, %49 : vector<64x16xf32>
    %c0_31 = arith.constant 0 : index
    %c0_32 = arith.constant 0 : index
    %51 = vector.load %arg13[%c0_31, %c0_32] : memref<64x16xf32, #tpu.memory_space<vmem>>, vector<64x16xf32>
    tpu.vector_store %arg13[%c0_31, %c0_32], %50 {strides = array<i32>} : memref<64x16xf32, #tpu.memory_space<vmem>>, vector<64x16xf32>,
    %c0_33 = arith.constant 0 : index
    %c0_34 = arith.constant 0 : index
    %52 = vector.load %arg11[%c0_33, %c0_34] : memref<64x1xf32, #tpu.memory_space<vmem>>, vector<64x1xf32>
    tpu.vector_store %arg11[%c0_33, %c0_34], %32 {strides = array<i32>} : memref<64x1xf32, #tpu.memory_space<vmem>>, vector<64x1xf32>,
    %c0_i32_35 = arith.constant 0 : i32
    %53 = arith.cmpi eq, %arg2, %c0_i32_35 : i32
    %54 = arith.extui %53 : i1 to i32
    %c0_i32_36 = arith.constant 0 : i32
    %55 = arith.cmpi ne, %54, %c0_i32_36 : i32
    scf.if %55 {
      %c0_37 = arith.constant 0 : index
      %c0_38 = arith.constant 0 : index
      %56 = vector.load %arg13[%c0_37, %c0_38] : memref<64x16xf32, #tpu.memory_space<vmem>>, vector<64x16xf32>
      %c0_39 = arith.constant 0 : index
      %c0_40 = arith.constant 0 : index
      %57 = vector.load %arg12[%c0_39, %c0_40] : memref<64x1xf32, #tpu.memory_space<vmem>>, vector<64x1xf32>
      %58 = tpu.reciprocal %57 {approx = true} : vector<64x1xf32> -> vector<64x1xf32>
      %59 = vector.broadcast %58 : vector<64x1xf32> to vector<64x16xf32>
      %60 = arith.mulf %56, %59 : vector<64x16xf32>
      %61 = arith.truncf %60 : vector<64x16xf32> to vector<64x16xbf16>
      %c0_41 = arith.constant 0 : index
      %c0_42 = arith.constant 0 : index
      %c0_43 = arith.constant 0 : index
      %62 = vector.load %arg9[%c0_41, %c0_42, %c0_43] : memref<1x64x16xbf16, #tpu.memory_space<vmem>>, vector<1x64x16xbf16>
      %63 = vector.shape_cast %62 : vector<1x64x16xbf16> to vector<64x16xbf16>
      %64 = vector.shape_cast %61 : vector<64x16xbf16> to vector<1x64x16xbf16>
      tpu.vector_store %arg9[%c0_41, %c0_42, %c0_43], %64 {strides = array<i32>} : memref<1x64x16xbf16, #tpu.memory_space<vmem>>, vector<1x64x16xbf16>,
    } else {
    }
    return
  }
  func.func @transform_0(%arg0: i32, %arg1: i32, %arg2: i32) -> (i32, i32, i32) {
    %c0_i32 = arith.constant 0 : i32
    %c0_i32_0 = arith.constant 0 : i32
    return %arg0, %arg1, %c0_i32 : i32, i32, i32
  }
  func.func @transform_1(%arg0: i32, %arg1: i32, %arg2: i32) -> (i32, i32, i32) {
    %c0_i32 = arith.constant 0 : i32
    %c0_i32_0 = arith.constant 0 : i32
    return %arg0, %arg2, %c0_i32 : i32, i32, i32
  }
  func.func @transform_2(%arg0: i32, %arg1: i32, %arg2: i32) -> (i32, i32) {
    %c0_i32 = arith.constant 0 : i32
    %c0_i32_0 = arith.constant 0 : i32
    %c0_i32_1 = arith.constant 0 : i32
    return %c0_i32, %c0_i32_0 : i32, i32
  }
  func.func @transform_3(%arg0: i32, %arg1: i32, %arg2: i32) -> (i32, i32) {
    %c0_i32 = arith.constant 0 : i32
    %c0_i32_0 = arith.constant 0 : i32
    %c0_i32_1 = arith.constant 0 : i32
    return %c0_i32, %c0_i32_0 : i32, i32
  }
  func.func @transform_4(%arg0: i32, %arg1: i32, %arg2: i32) -> (i32, i32) {
    %c0_i32 = arith.constant 0 : i32
    %c0_i32_0 = arith.constant 0 : i32
    %c0_i32_1 = arith.constant 0 : i32
    return %c0_i32, %c0_i32_0 : i32, i32
  }
  func.func @transform_5(%arg0: i32, %arg1: i32, %arg2: i32) -> (i32, i32) {
    %c0_i32 = arith.constant 0 : i32
    %c0_i32_0 = arith.constant 0 : i32
    %c0_i32_1 = arith.constant 0 : i32
    return %c0_i32, %c0_i32_0 : i32, i32
  }
  func.func @transform_6(%arg0: i32, %arg1: i32, %arg2: i32) -> (i32, i32, i32) {
    %c0_i32 = arith.constant 0 : i32
    %c0_i32_0 = arith.constant 0 : i32
    return %arg0, %arg1, %c0_i32 : i32, i32, i32
  }
}

module attributes {stable_mosaic.version = 11 : i64} {
  func.func @_upsample_add_kernel(%arg0: i32, %arg1: i32, %arg2: memref<1x8x8x8xbf16, #tpu.memory_space<vmem>>, %arg3: memref<1x8x16x16xf32, #tpu.memory_space<vmem>>, %arg4: memref<16x8xbf16, #tpu.memory_space<vmem>>, %arg5: memref<8x16xbf16, #tpu.memory_space<vmem>>, %arg6: memref<1x8x16x16xf32, #tpu.memory_space<vmem>>) attributes {dimension_semantics = [#tpu.dimension_semantics<parallel>, #tpu.dimension_semantics<parallel>], iteration_bounds = array<i64: 2, 2>, scalar_prefetch = 0 : i64, scratch_operands = 0 : i64, tpu.core_type = #tpu.core_type<tc>, window_params = [{transform_indices = @transform_0, window_bounds = array<i64: 1, 8, 8, 8>}, {transform_indices = @transform_1, window_bounds = array<i64: 1, 8, 16, 16>}, {pipeline_mode = #tpu.pipeline_mode<synchronous>, transform_indices = @transform_2, window_bounds = array<i64: 16, 8>}, {pipeline_mode = #tpu.pipeline_mode<synchronous>, transform_indices = @transform_3, window_bounds = array<i64: 8, 16>}, {transform_indices = @transform_4, window_bounds = array<i64: 1, 8, 16, 16>}]} {
    %c0 = arith.constant 0 : index
    %c0_0 = arith.constant 0 : index
    %0 = vector.load %arg4[%c0, %c0_0] : memref<16x8xbf16, #tpu.memory_space<vmem>>, vector<16x8xbf16>
    %c0_1 = arith.constant 0 : index
    %c0_2 = arith.constant 0 : index
    %c0_3 = arith.constant 0 : index
    %c0_4 = arith.constant 0 : index
    %1 = vector.load %arg2[%c0_1, %c0_2, %c0_3, %c0_4] : memref<1x8x8x8xbf16, #tpu.memory_space<vmem>>, vector<1x1x8x8xbf16>
    %2 = vector.shape_cast %1 : vector<1x1x8x8xbf16> to vector<8x8xbf16>
    %cst = arith.constant dense<0.000000e+00> : vector<16x8xf32>
    %3 = tpu.matmul %0, %2, %cst {dimension_numbers = #tpu.dot_dimension_numbers<[1], [0], [0], [1], [0, 0, 1, 1], [], []>} : vector<16x8xbf16>, vector<8x8xbf16>, vector<16x8xf32> -> vector<16x8xf32>
    %4 = arith.truncf %3 : vector<16x8xf32> to vector<16x8xbf16>
    %c0_5 = arith.constant 0 : index
    %c0_6 = arith.constant 0 : index
    %5 = vector.load %arg5[%c0_5, %c0_6] : memref<8x16xbf16, #tpu.memory_space<vmem>>, vector<8x16xbf16>
    %cst_7 = arith.constant dense<0.000000e+00> : vector<16x16xf32>
    %6 = tpu.matmul %4, %5, %cst_7 {dimension_numbers = #tpu.dot_dimension_numbers<[1], [0], [0], [1], [0, 0, 1, 1], [], []>} : vector<16x8xbf16>, vector<8x16xbf16>, vector<16x16xf32> -> vector<16x16xf32>
    %c0_8 = arith.constant 0 : index
    %c0_9 = arith.constant 0 : index
    %c0_10 = arith.constant 0 : index
    %c0_11 = arith.constant 0 : index
    %7 = vector.load %arg3[%c0_8, %c0_9, %c0_10, %c0_11] : memref<1x8x16x16xf32, #tpu.memory_space<vmem>>, vector<1x1x16x16xf32>
    %8 = vector.shape_cast %7 : vector<1x1x16x16xf32> to vector<16x16xf32>
    %9 = arith.addf %6, %8 : vector<16x16xf32>
    %c0_12 = arith.constant 0 : index
    %c0_13 = arith.constant 0 : index
    %c0_14 = arith.constant 0 : index
    %c0_15 = arith.constant 0 : index
    %10 = vector.load %arg6[%c0_12, %c0_13, %c0_14, %c0_15] : memref<1x8x16x16xf32, #tpu.memory_space<vmem>>, vector<1x1x16x16xf32>
    %11 = vector.shape_cast %10 : vector<1x1x16x16xf32> to vector<16x16xf32>
    %12 = vector.shape_cast %9 : vector<16x16xf32> to vector<1x1x16x16xf32>
    tpu.vector_store %arg6[%c0_12, %c0_13, %c0_14, %c0_15], %12 {strides = array<i32>} : memref<1x8x16x16xf32, #tpu.memory_space<vmem>>, vector<1x1x16x16xf32>,
    %c0_16 = arith.constant 0 : index
    %c0_17 = arith.constant 0 : index
    %13 = vector.load %arg4[%c0_16, %c0_17] : memref<16x8xbf16, #tpu.memory_space<vmem>>, vector<16x8xbf16>
    %c0_18 = arith.constant 0 : index
    %c1 = arith.constant 1 : index
    %c0_19 = arith.constant 0 : index
    %c0_20 = arith.constant 0 : index
    %14 = vector.load %arg2[%c0_18, %c1, %c0_19, %c0_20] : memref<1x8x8x8xbf16, #tpu.memory_space<vmem>>, vector<1x1x8x8xbf16>
    %15 = vector.shape_cast %14 : vector<1x1x8x8xbf16> to vector<8x8xbf16>
    %cst_21 = arith.constant dense<0.000000e+00> : vector<16x8xf32>
    %16 = tpu.matmul %13, %15, %cst_21 {dimension_numbers = #tpu.dot_dimension_numbers<[1], [0], [0], [1], [0, 0, 1, 1], [], []>} : vector<16x8xbf16>, vector<8x8xbf16>, vector<16x8xf32> -> vector<16x8xf32>
    %17 = arith.truncf %16 : vector<16x8xf32> to vector<16x8xbf16>
    %c0_22 = arith.constant 0 : index
    %c0_23 = arith.constant 0 : index
    %18 = vector.load %arg5[%c0_22, %c0_23] : memref<8x16xbf16, #tpu.memory_space<vmem>>, vector<8x16xbf16>
    %cst_24 = arith.constant dense<0.000000e+00> : vector<16x16xf32>
    %19 = tpu.matmul %17, %18, %cst_24 {dimension_numbers = #tpu.dot_dimension_numbers<[1], [0], [0], [1], [0, 0, 1, 1], [], []>} : vector<16x8xbf16>, vector<8x16xbf16>, vector<16x16xf32> -> vector<16x16xf32>
    %c0_25 = arith.constant 0 : index
    %c1_26 = arith.constant 1 : index
    %c0_27 = arith.constant 0 : index
    %c0_28 = arith.constant 0 : index
    %20 = vector.load %arg3[%c0_25, %c1_26, %c0_27, %c0_28] : memref<1x8x16x16xf32, #tpu.memory_space<vmem>>, vector<1x1x16x16xf32>
    %21 = vector.shape_cast %20 : vector<1x1x16x16xf32> to vector<16x16xf32>
    %22 = arith.addf %19, %21 : vector<16x16xf32>
    %c0_29 = arith.constant 0 : index
    %c1_30 = arith.constant 1 : index
    %c0_31 = arith.constant 0 : index
    %c0_32 = arith.constant 0 : index
    %23 = vector.load %arg6[%c0_29, %c1_30, %c0_31, %c0_32] : memref<1x8x16x16xf32, #tpu.memory_space<vmem>>, vector<1x1x16x16xf32>
    %24 = vector.shape_cast %23 : vector<1x1x16x16xf32> to vector<16x16xf32>
    %25 = vector.shape_cast %22 : vector<16x16xf32> to vector<1x1x16x16xf32>
    tpu.vector_store %arg6[%c0_29, %c1_30, %c0_31, %c0_32], %25 {strides = array<i32>} : memref<1x8x16x16xf32, #tpu.memory_space<vmem>>, vector<1x1x16x16xf32>,
    %c0_33 = arith.constant 0 : index
    %c0_34 = arith.constant 0 : index
    %26 = vector.load %arg4[%c0_33, %c0_34] : memref<16x8xbf16, #tpu.memory_space<vmem>>, vector<16x8xbf16>
    %c0_35 = arith.constant 0 : index
    %c2 = arith.constant 2 : index
    %c0_36 = arith.constant 0 : index
    %c0_37 = arith.constant 0 : index
    %27 = vector.load %arg2[%c0_35, %c2, %c0_36, %c0_37] : memref<1x8x8x8xbf16, #tpu.memory_space<vmem>>, vector<1x1x8x8xbf16>
    %28 = vector.shape_cast %27 : vector<1x1x8x8xbf16> to vector<8x8xbf16>
    %cst_38 = arith.constant dense<0.000000e+00> : vector<16x8xf32>
    %29 = tpu.matmul %26, %28, %cst_38 {dimension_numbers = #tpu.dot_dimension_numbers<[1], [0], [0], [1], [0, 0, 1, 1], [], []>} : vector<16x8xbf16>, vector<8x8xbf16>, vector<16x8xf32> -> vector<16x8xf32>
    %30 = arith.truncf %29 : vector<16x8xf32> to vector<16x8xbf16>
    %c0_39 = arith.constant 0 : index
    %c0_40 = arith.constant 0 : index
    %31 = vector.load %arg5[%c0_39, %c0_40] : memref<8x16xbf16, #tpu.memory_space<vmem>>, vector<8x16xbf16>
    %cst_41 = arith.constant dense<0.000000e+00> : vector<16x16xf32>
    %32 = tpu.matmul %30, %31, %cst_41 {dimension_numbers = #tpu.dot_dimension_numbers<[1], [0], [0], [1], [0, 0, 1, 1], [], []>} : vector<16x8xbf16>, vector<8x16xbf16>, vector<16x16xf32> -> vector<16x16xf32>
    %c0_42 = arith.constant 0 : index
    %c2_43 = arith.constant 2 : index
    %c0_44 = arith.constant 0 : index
    %c0_45 = arith.constant 0 : index
    %33 = vector.load %arg3[%c0_42, %c2_43, %c0_44, %c0_45] : memref<1x8x16x16xf32, #tpu.memory_space<vmem>>, vector<1x1x16x16xf32>
    %34 = vector.shape_cast %33 : vector<1x1x16x16xf32> to vector<16x16xf32>
    %35 = arith.addf %32, %34 : vector<16x16xf32>
    %c0_46 = arith.constant 0 : index
    %c2_47 = arith.constant 2 : index
    %c0_48 = arith.constant 0 : index
    %c0_49 = arith.constant 0 : index
    %36 = vector.load %arg6[%c0_46, %c2_47, %c0_48, %c0_49] : memref<1x8x16x16xf32, #tpu.memory_space<vmem>>, vector<1x1x16x16xf32>
    %37 = vector.shape_cast %36 : vector<1x1x16x16xf32> to vector<16x16xf32>
    %38 = vector.shape_cast %35 : vector<16x16xf32> to vector<1x1x16x16xf32>
    tpu.vector_store %arg6[%c0_46, %c2_47, %c0_48, %c0_49], %38 {strides = array<i32>} : memref<1x8x16x16xf32, #tpu.memory_space<vmem>>, vector<1x1x16x16xf32>,
    %c0_50 = arith.constant 0 : index
    %c0_51 = arith.constant 0 : index
    %39 = vector.load %arg4[%c0_50, %c0_51] : memref<16x8xbf16, #tpu.memory_space<vmem>>, vector<16x8xbf16>
    %c0_52 = arith.constant 0 : index
    %c3 = arith.constant 3 : index
    %c0_53 = arith.constant 0 : index
    %c0_54 = arith.constant 0 : index
    %40 = vector.load %arg2[%c0_52, %c3, %c0_53, %c0_54] : memref<1x8x8x8xbf16, #tpu.memory_space<vmem>>, vector<1x1x8x8xbf16>
    %41 = vector.shape_cast %40 : vector<1x1x8x8xbf16> to vector<8x8xbf16>
    %cst_55 = arith.constant dense<0.000000e+00> : vector<16x8xf32>
    %42 = tpu.matmul %39, %41, %cst_55 {dimension_numbers = #tpu.dot_dimension_numbers<[1], [0], [0], [1], [0, 0, 1, 1], [], []>} : vector<16x8xbf16>, vector<8x8xbf16>, vector<16x8xf32> -> vector<16x8xf32>
    %43 = arith.truncf %42 : vector<16x8xf32> to vector<16x8xbf16>
    %c0_56 = arith.constant 0 : index
    %c0_57 = arith.constant 0 : index
    %44 = vector.load %arg5[%c0_56, %c0_57] : memref<8x16xbf16, #tpu.memory_space<vmem>>, vector<8x16xbf16>
    %cst_58 = arith.constant dense<0.000000e+00> : vector<16x16xf32>
    %45 = tpu.matmul %43, %44, %cst_58 {dimension_numbers = #tpu.dot_dimension_numbers<[1], [0], [0], [1], [0, 0, 1, 1], [], []>} : vector<16x8xbf16>, vector<8x16xbf16>, vector<16x16xf32> -> vector<16x16xf32>
    %c0_59 = arith.constant 0 : index
    %c3_60 = arith.constant 3 : index
    %c0_61 = arith.constant 0 : index
    %c0_62 = arith.constant 0 : index
    %46 = vector.load %arg3[%c0_59, %c3_60, %c0_61, %c0_62] : memref<1x8x16x16xf32, #tpu.memory_space<vmem>>, vector<1x1x16x16xf32>
    %47 = vector.shape_cast %46 : vector<1x1x16x16xf32> to vector<16x16xf32>
    %48 = arith.addf %45, %47 : vector<16x16xf32>
    %c0_63 = arith.constant 0 : index
    %c3_64 = arith.constant 3 : index
    %c0_65 = arith.constant 0 : index
    %c0_66 = arith.constant 0 : index
    %49 = vector.load %arg6[%c0_63, %c3_64, %c0_65, %c0_66] : memref<1x8x16x16xf32, #tpu.memory_space<vmem>>, vector<1x1x16x16xf32>
    %50 = vector.shape_cast %49 : vector<1x1x16x16xf32> to vector<16x16xf32>
    %51 = vector.shape_cast %48 : vector<16x16xf32> to vector<1x1x16x16xf32>
    tpu.vector_store %arg6[%c0_63, %c3_64, %c0_65, %c0_66], %51 {strides = array<i32>} : memref<1x8x16x16xf32, #tpu.memory_space<vmem>>, vector<1x1x16x16xf32>,
    %c0_67 = arith.constant 0 : index
    %c0_68 = arith.constant 0 : index
    %52 = vector.load %arg4[%c0_67, %c0_68] : memref<16x8xbf16, #tpu.memory_space<vmem>>, vector<16x8xbf16>
    %c0_69 = arith.constant 0 : index
    %c4 = arith.constant 4 : index
    %c0_70 = arith.constant 0 : index
    %c0_71 = arith.constant 0 : index
    %53 = vector.load %arg2[%c0_69, %c4, %c0_70, %c0_71] : memref<1x8x8x8xbf16, #tpu.memory_space<vmem>>, vector<1x1x8x8xbf16>
    %54 = vector.shape_cast %53 : vector<1x1x8x8xbf16> to vector<8x8xbf16>
    %cst_72 = arith.constant dense<0.000000e+00> : vector<16x8xf32>
    %55 = tpu.matmul %52, %54, %cst_72 {dimension_numbers = #tpu.dot_dimension_numbers<[1], [0], [0], [1], [0, 0, 1, 1], [], []>} : vector<16x8xbf16>, vector<8x8xbf16>, vector<16x8xf32> -> vector<16x8xf32>
    %56 = arith.truncf %55 : vector<16x8xf32> to vector<16x8xbf16>
    %c0_73 = arith.constant 0 : index
    %c0_74 = arith.constant 0 : index
    %57 = vector.load %arg5[%c0_73, %c0_74] : memref<8x16xbf16, #tpu.memory_space<vmem>>, vector<8x16xbf16>
    %cst_75 = arith.constant dense<0.000000e+00> : vector<16x16xf32>
    %58 = tpu.matmul %56, %57, %cst_75 {dimension_numbers = #tpu.dot_dimension_numbers<[1], [0], [0], [1], [0, 0, 1, 1], [], []>} : vector<16x8xbf16>, vector<8x16xbf16>, vector<16x16xf32> -> vector<16x16xf32>
    %c0_76 = arith.constant 0 : index
    %c4_77 = arith.constant 4 : index
    %c0_78 = arith.constant 0 : index
    %c0_79 = arith.constant 0 : index
    %59 = vector.load %arg3[%c0_76, %c4_77, %c0_78, %c0_79] : memref<1x8x16x16xf32, #tpu.memory_space<vmem>>, vector<1x1x16x16xf32>
    %60 = vector.shape_cast %59 : vector<1x1x16x16xf32> to vector<16x16xf32>
    %61 = arith.addf %58, %60 : vector<16x16xf32>
    %c0_80 = arith.constant 0 : index
    %c4_81 = arith.constant 4 : index
    %c0_82 = arith.constant 0 : index
    %c0_83 = arith.constant 0 : index
    %62 = vector.load %arg6[%c0_80, %c4_81, %c0_82, %c0_83] : memref<1x8x16x16xf32, #tpu.memory_space<vmem>>, vector<1x1x16x16xf32>
    %63 = vector.shape_cast %62 : vector<1x1x16x16xf32> to vector<16x16xf32>
    %64 = vector.shape_cast %61 : vector<16x16xf32> to vector<1x1x16x16xf32>
    tpu.vector_store %arg6[%c0_80, %c4_81, %c0_82, %c0_83], %64 {strides = array<i32>} : memref<1x8x16x16xf32, #tpu.memory_space<vmem>>, vector<1x1x16x16xf32>,
    %c0_84 = arith.constant 0 : index
    %c0_85 = arith.constant 0 : index
    %65 = vector.load %arg4[%c0_84, %c0_85] : memref<16x8xbf16, #tpu.memory_space<vmem>>, vector<16x8xbf16>
    %c0_86 = arith.constant 0 : index
    %c5 = arith.constant 5 : index
    %c0_87 = arith.constant 0 : index
    %c0_88 = arith.constant 0 : index
    %66 = vector.load %arg2[%c0_86, %c5, %c0_87, %c0_88] : memref<1x8x8x8xbf16, #tpu.memory_space<vmem>>, vector<1x1x8x8xbf16>
    %67 = vector.shape_cast %66 : vector<1x1x8x8xbf16> to vector<8x8xbf16>
    %cst_89 = arith.constant dense<0.000000e+00> : vector<16x8xf32>
    %68 = tpu.matmul %65, %67, %cst_89 {dimension_numbers = #tpu.dot_dimension_numbers<[1], [0], [0], [1], [0, 0, 1, 1], [], []>} : vector<16x8xbf16>, vector<8x8xbf16>, vector<16x8xf32> -> vector<16x8xf32>
    %69 = arith.truncf %68 : vector<16x8xf32> to vector<16x8xbf16>
    %c0_90 = arith.constant 0 : index
    %c0_91 = arith.constant 0 : index
    %70 = vector.load %arg5[%c0_90, %c0_91] : memref<8x16xbf16, #tpu.memory_space<vmem>>, vector<8x16xbf16>
    %cst_92 = arith.constant dense<0.000000e+00> : vector<16x16xf32>
    %71 = tpu.matmul %69, %70, %cst_92 {dimension_numbers = #tpu.dot_dimension_numbers<[1], [0], [0], [1], [0, 0, 1, 1], [], []>} : vector<16x8xbf16>, vector<8x16xbf16>, vector<16x16xf32> -> vector<16x16xf32>
    %c0_93 = arith.constant 0 : index
    %c5_94 = arith.constant 5 : index
    %c0_95 = arith.constant 0 : index
    %c0_96 = arith.constant 0 : index
    %72 = vector.load %arg3[%c0_93, %c5_94, %c0_95, %c0_96] : memref<1x8x16x16xf32, #tpu.memory_space<vmem>>, vector<1x1x16x16xf32>
    %73 = vector.shape_cast %72 : vector<1x1x16x16xf32> to vector<16x16xf32>
    %74 = arith.addf %71, %73 : vector<16x16xf32>
    %c0_97 = arith.constant 0 : index
    %c5_98 = arith.constant 5 : index
    %c0_99 = arith.constant 0 : index
    %c0_100 = arith.constant 0 : index
    %75 = vector.load %arg6[%c0_97, %c5_98, %c0_99, %c0_100] : memref<1x8x16x16xf32, #tpu.memory_space<vmem>>, vector<1x1x16x16xf32>
    %76 = vector.shape_cast %75 : vector<1x1x16x16xf32> to vector<16x16xf32>
    %77 = vector.shape_cast %74 : vector<16x16xf32> to vector<1x1x16x16xf32>
    tpu.vector_store %arg6[%c0_97, %c5_98, %c0_99, %c0_100], %77 {strides = array<i32>} : memref<1x8x16x16xf32, #tpu.memory_space<vmem>>, vector<1x1x16x16xf32>,
    %c0_101 = arith.constant 0 : index
    %c0_102 = arith.constant 0 : index
    %78 = vector.load %arg4[%c0_101, %c0_102] : memref<16x8xbf16, #tpu.memory_space<vmem>>, vector<16x8xbf16>
    %c0_103 = arith.constant 0 : index
    %c6 = arith.constant 6 : index
    %c0_104 = arith.constant 0 : index
    %c0_105 = arith.constant 0 : index
    %79 = vector.load %arg2[%c0_103, %c6, %c0_104, %c0_105] : memref<1x8x8x8xbf16, #tpu.memory_space<vmem>>, vector<1x1x8x8xbf16>
    %80 = vector.shape_cast %79 : vector<1x1x8x8xbf16> to vector<8x8xbf16>
    %cst_106 = arith.constant dense<0.000000e+00> : vector<16x8xf32>
    %81 = tpu.matmul %78, %80, %cst_106 {dimension_numbers = #tpu.dot_dimension_numbers<[1], [0], [0], [1], [0, 0, 1, 1], [], []>} : vector<16x8xbf16>, vector<8x8xbf16>, vector<16x8xf32> -> vector<16x8xf32>
    %82 = arith.truncf %81 : vector<16x8xf32> to vector<16x8xbf16>
    %c0_107 = arith.constant 0 : index
    %c0_108 = arith.constant 0 : index
    %83 = vector.load %arg5[%c0_107, %c0_108] : memref<8x16xbf16, #tpu.memory_space<vmem>>, vector<8x16xbf16>
    %cst_109 = arith.constant dense<0.000000e+00> : vector<16x16xf32>
    %84 = tpu.matmul %82, %83, %cst_109 {dimension_numbers = #tpu.dot_dimension_numbers<[1], [0], [0], [1], [0, 0, 1, 1], [], []>} : vector<16x8xbf16>, vector<8x16xbf16>, vector<16x16xf32> -> vector<16x16xf32>
    %c0_110 = arith.constant 0 : index
    %c6_111 = arith.constant 6 : index
    %c0_112 = arith.constant 0 : index
    %c0_113 = arith.constant 0 : index
    %85 = vector.load %arg3[%c0_110, %c6_111, %c0_112, %c0_113] : memref<1x8x16x16xf32, #tpu.memory_space<vmem>>, vector<1x1x16x16xf32>
    %86 = vector.shape_cast %85 : vector<1x1x16x16xf32> to vector<16x16xf32>
    %87 = arith.addf %84, %86 : vector<16x16xf32>
    %c0_114 = arith.constant 0 : index
    %c6_115 = arith.constant 6 : index
    %c0_116 = arith.constant 0 : index
    %c0_117 = arith.constant 0 : index
    %88 = vector.load %arg6[%c0_114, %c6_115, %c0_116, %c0_117] : memref<1x8x16x16xf32, #tpu.memory_space<vmem>>, vector<1x1x16x16xf32>
    %89 = vector.shape_cast %88 : vector<1x1x16x16xf32> to vector<16x16xf32>
    %90 = vector.shape_cast %87 : vector<16x16xf32> to vector<1x1x16x16xf32>
    tpu.vector_store %arg6[%c0_114, %c6_115, %c0_116, %c0_117], %90 {strides = array<i32>} : memref<1x8x16x16xf32, #tpu.memory_space<vmem>>, vector<1x1x16x16xf32>,
    %c0_118 = arith.constant 0 : index
    %c0_119 = arith.constant 0 : index
    %91 = vector.load %arg4[%c0_118, %c0_119] : memref<16x8xbf16, #tpu.memory_space<vmem>>, vector<16x8xbf16>
    %c0_120 = arith.constant 0 : index
    %c7 = arith.constant 7 : index
    %c0_121 = arith.constant 0 : index
    %c0_122 = arith.constant 0 : index
    %92 = vector.load %arg2[%c0_120, %c7, %c0_121, %c0_122] : memref<1x8x8x8xbf16, #tpu.memory_space<vmem>>, vector<1x1x8x8xbf16>
    %93 = vector.shape_cast %92 : vector<1x1x8x8xbf16> to vector<8x8xbf16>
    %cst_123 = arith.constant dense<0.000000e+00> : vector<16x8xf32>
    %94 = tpu.matmul %91, %93, %cst_123 {dimension_numbers = #tpu.dot_dimension_numbers<[1], [0], [0], [1], [0, 0, 1, 1], [], []>} : vector<16x8xbf16>, vector<8x8xbf16>, vector<16x8xf32> -> vector<16x8xf32>
    %95 = arith.truncf %94 : vector<16x8xf32> to vector<16x8xbf16>
    %c0_124 = arith.constant 0 : index
    %c0_125 = arith.constant 0 : index
    %96 = vector.load %arg5[%c0_124, %c0_125] : memref<8x16xbf16, #tpu.memory_space<vmem>>, vector<8x16xbf16>
    %cst_126 = arith.constant dense<0.000000e+00> : vector<16x16xf32>
    %97 = tpu.matmul %95, %96, %cst_126 {dimension_numbers = #tpu.dot_dimension_numbers<[1], [0], [0], [1], [0, 0, 1, 1], [], []>} : vector<16x8xbf16>, vector<8x16xbf16>, vector<16x16xf32> -> vector<16x16xf32>
    %c0_127 = arith.constant 0 : index
    %c7_128 = arith.constant 7 : index
    %c0_129 = arith.constant 0 : index
    %c0_130 = arith.constant 0 : index
    %98 = vector.load %arg3[%c0_127, %c7_128, %c0_129, %c0_130] : memref<1x8x16x16xf32, #tpu.memory_space<vmem>>, vector<1x1x16x16xf32>
    %99 = vector.shape_cast %98 : vector<1x1x16x16xf32> to vector<16x16xf32>
    %100 = arith.addf %97, %99 : vector<16x16xf32>
    %c0_131 = arith.constant 0 : index
    %c7_132 = arith.constant 7 : index
    %c0_133 = arith.constant 0 : index
    %c0_134 = arith.constant 0 : index
    %101 = vector.load %arg6[%c0_131, %c7_132, %c0_133, %c0_134] : memref<1x8x16x16xf32, #tpu.memory_space<vmem>>, vector<1x1x16x16xf32>
    %102 = vector.shape_cast %101 : vector<1x1x16x16xf32> to vector<16x16xf32>
    %103 = vector.shape_cast %100 : vector<16x16xf32> to vector<1x1x16x16xf32>
    tpu.vector_store %arg6[%c0_131, %c7_132, %c0_133, %c0_134], %103 {strides = array<i32>} : memref<1x8x16x16xf32, #tpu.memory_space<vmem>>, vector<1x1x16x16xf32>,
    return
  }
  func.func @transform_0(%arg0: i32, %arg1: i32) -> (i32, i32, i32, i32) {
    %c0_i32 = arith.constant 0 : i32
    %c0_i32_0 = arith.constant 0 : i32
    %c0_i32_1 = arith.constant 0 : i32
    return %arg0, %arg1, %c0_i32, %c0_i32_0 : i32, i32, i32, i32
  }
  func.func @transform_1(%arg0: i32, %arg1: i32) -> (i32, i32, i32, i32) {
    %c0_i32 = arith.constant 0 : i32
    %c0_i32_0 = arith.constant 0 : i32
    %c0_i32_1 = arith.constant 0 : i32
    return %arg0, %arg1, %c0_i32, %c0_i32_0 : i32, i32, i32, i32
  }
  func.func @transform_2(%arg0: i32, %arg1: i32) -> (i32, i32) {
    %c0_i32 = arith.constant 0 : i32
    %c0_i32_0 = arith.constant 0 : i32
    %c0_i32_1 = arith.constant 0 : i32
    return %c0_i32, %c0_i32_0 : i32, i32
  }
  func.func @transform_3(%arg0: i32, %arg1: i32) -> (i32, i32) {
    %c0_i32 = arith.constant 0 : i32
    %c0_i32_0 = arith.constant 0 : i32
    %c0_i32_1 = arith.constant 0 : i32
    return %c0_i32, %c0_i32_0 : i32, i32
  }
  func.func @transform_4(%arg0: i32, %arg1: i32) -> (i32, i32, i32, i32) {
    %c0_i32 = arith.constant 0 : i32
    %c0_i32_0 = arith.constant 0 : i32
    %c0_i32_1 = arith.constant 0 : i32
    return %arg0, %arg1, %c0_i32, %c0_i32_0 : i32, i32, i32, i32
  }
}

</mosaic_0001>

<llo_original>
// kernel: residual_block_forward.4
$region0: #{residual_block_forward.4}
  #allocation0 [shape = 'u32[]', space=smem, size = 0x4, offset = 0x4, fixed_abs, tag = 'smem constant byte address 0x4 - core index']
  #allocation1 [shape = 'u32[144,128]{1,0:T(1,128)}', space=vmem, size = 0x12000, scoped, tag = 'internal scratch']
  %s0 = inlined_call_operand.hbm [shape: bf16[2,4,256], index: 0, kind: input, shape index: {}]
  %s1 = inlined_call_operand.hbm [shape: bf16[16,4], index: 1, kind: input, shape index: {}]
  %s2 = inlined_call_operand.hbm [shape: f32[16,1], index: 2, kind: input, shape index: {}]
  %s3 = inlined_call_operand.hbm [shape: f32[2,16,256], index: 3, kind: output, shape index: {}]
  %s4 = sld [smem:[#allocation0]]
  $region57: #{residual_block_forward.4} parent=0
    _
  %s6 = ssub.s32 1, %s4
  %s7 = scalar_select 0, %s6, %s4
  $region1: #{residual_block_forward.4} parent=0
    #allocation2 [shape = 'u8[4096]{0}', space=vmem, size = 0x1000, scoped, tag = 'input window, operand 0']
    #allocation3 [shape = 's32[2]{0}', space=sflag, size = 0x8, scoped, tag = 'scoped memory for residual_block_forward.4']
    #allocation4 [shape = 's32[2]{0}', space=sflag, size = 0x8, scoped, tag = 'scoped memory for residual_block_forward.4']
    #allocation5 [shape = 'u8[4096]{0}', space=vmem, size = 0x1000, scoped, tag = 'input window, operand 1, single buffered']
    #allocation6 [shape = 's32[1]{0}', space=sflag, size = 0x4, scoped, tag = 'scoped memory for residual_block_forward.4']
    #allocation7 [shape = 'u8[8192]{0}', space=vmem, size = 0x2000, scoped, tag = 'input window, operand 2, single buffered']
    #allocation8 [shape = 'u8[32768]{0}', space=vmem, size = 0x8000, scoped, tag = 'output window, operand 0']
    %8 = vsyncpa [#allocation3], 0
    %s9 = scalar_lea.sflag [#allocation3], 1
    %10 = vsyncpa %s9, 0
    %11 = vsyncpa [#allocation6], 0
    %12 = vsyncpa [#allocation4], 0
    %s13 = scalar_lea.sflag [#allocation4], 1
    %14 = vsyncpa %s13, 0
    loop: start=0, step=1, limit=4
    $region2: #{residual_block_forward.4} parent=1 // loop_pre_header
      _
    $region3: #{residual_block_forward.4} parent=1 // loop_header
      %s16 = sphi 0, %s20
      %p17 = scmp.ge.s32.totalorder %s16, 4
      %s23 = sphi 0, %s35
      %s24 = sphi 0, %s31
      %s25 = sphi 0, %s23
      %s26 = sphi 0, %s24
      %s27 = sphi 0, %s25
      %s28 = sphi 0, %s26
      %s40 = sphi 0, %s42
      %s43 = sphi 0, %s40
      %s44 = sphi 0, %s43
      %s60 = sphi 0, %s44
      %s64 = sphi 0, %s64
      %s66 = sphi 0, %s64
      %s67 = sphi 0, %s66
      %s81 = sphi 0, %s67
      %s85 = sphi 0, %s85
      %s87 = sphi 0, %s85
      %s88 = sphi 0, %s87
      %s102 = sphi 0, %s88
      %s110 = sphi 0, %s112
      %s113 = sphi 0, %s110
      %s114 = sphi 0, %s113
      %s130 = sphi 0, %s114
    $region4: #{residual_block_forward.4} parent=1 // loop_header_branch
      %19 = sbr.rel (%p17) target = $region8
    $region5: #{residual_block_forward.4} parent=1 // loop_body
      %s21 = ssub.s32 %s16, 1
      %s22 = ssub.s32 %s16, 2
      %s29 = sadd.s32 1, %s24
      %p30 = scmp.ge.s32.totalorder %s29, 1
      %s31 = scalar_select %p30, 0, %s29
      %s32 = sadd.s32 1, %s23
      %s33 = scalar_select %p30, %s32, %s23
      %p34 = scmp.ge.s32.totalorder %s33, 2
      %s35 = scalar_select %p34, 0, %s33
      %s36 = ssub.s32 %s23, %s35
      %s37 = ssub.s32 %s24, %s31
      %s38 = sor.u32 %s36, %s37
      %p39 = scmp.eq.s32.totalorder %s38, 0
      %s41 = sadd.s32 %s40, 1
      %s42 = scalar_select %p39, %s40, %s41
      %p45 = pneg %p39
      %p46 = scmp.eq.s32.totalorder %s16, 1
      %p47 = por %p45, %p46
      %p48 = scmp.ne.s32.totalorder %s40, %s43
      %p49 = scmp.eq.s32.totalorder %s16, 0
      %p50 = por %p48, %p49
      %p51 = scmp.ne.s32.totalorder %s40, %s43
      %p52 = scmp.eq.s32.totalorder %s21, 1
      %p53 = por %p51, %p52
      %p54 = scmp.ne.s32.totalorder %s43, %s44
      %p55 = scmp.eq.s32.totalorder %s21, 0
      %p56 = por %p54, %p55
      %p57 = scmp.ne.s32.totalorder %s43, %s44
      %p58 = scmp.eq.s32.totalorder %s22, 1
      %p59 = por %p57, %p58
      %p61 = scmp.ne.s32.totalorder %s44, %s60
      %p62 = scmp.eq.s32.totalorder %s22, 0
      %p63 = por %p61, %p62
      %s65 = sadd.s32 %s64, 1
      %p68 = scmp.eq.s32.totalorder %s16, 1
      %p69 = scmp.ne.s32.totalorder %s64, %s66
      %p70 = scmp.eq.s32.totalorder %s16, 0
      %p71 = por %p69, %p70
      %p72 = scmp.ne.s32.totalorder %s64, %s66
      %p73 = scmp.eq.s32.totalorder %s21, 1
      %p74 = por %p72, %p73
      %p75 = scmp.ne.s32.totalorder %s66, %s67
      %p76 = scmp.eq.s32.totalorder %s21, 0
      %p77 = por %p75, %p76
      %p78 = scmp.ne.s32.totalorder %s66, %s67
      %p79 = scmp.eq.s32.totalorder %s22, 1
      %p80 = por %p78, %p79
      %p82 = scmp.ne.s32.totalorder %s67, %s81
      %p83 = scmp.eq.s32.totalorder %s22, 0
      %p84 = por %p82, %p83
      %s86 = sadd.s32 %s85, 1
      %p89 = scmp.eq.s32.totalorder %s16, 1
      %p90 = scmp.ne.s32.totalorder %s85, %s87
      %p91 = scmp.eq.s32.totalorder %s16, 0
      %p92 = por %p90, %p91
      %p93 = scmp.ne.s32.totalorder %s85, %s87
      %p94 = scmp.eq.s32.totalorder %s21, 1
      %p95 = por %p93, %p94
      %p96 = scmp.ne.s32.totalorder %s87, %s88
      %p97 = scmp.eq.s32.totalorder %s21, 0
      %p98 = por %p96, %p97
      %p99 = scmp.ne.s32.totalorder %s87, %s88
      %p100 = scmp.eq.s32.totalorder %s22, 1
      %p101 = por %p99, %p100
      %p103 = scmp.ne.s32.totalorder %s88, %s102
      %p104 = scmp.eq.s32.totalorder %s22, 0
      %p105 = por %p103, %p104
      %s106 = ssub.s32 %s23, %s35
      %s107 = ssub.s32 %s24, %s31
      %s108 = sor.u32 %s106, %s107
      %p109 = scmp.eq.s32.totalorder %s108, 0
      %s111 = sadd.s32 %s110, 1
      %s112 = scalar_select %p109, %s110, %s111
      %p115 = pneg %p109
      %p116 = scmp.eq.s32.totalorder %s16, 1
      %p117 = por %p115, %p116
      %p118 = scmp.ne.s32.totalorder %s110, %s113
      %p119 = scmp.eq.s32.totalorder %s16, 0
      %p120 = por %p118, %p119
      %p121 = scmp.ne.s32.totalorder %s110, %s113
      %p122 = scmp.eq.s32.totalorder %s21, 1
      %p123 = por %p121, %p122
      %p124 = scmp.ne.s32.totalorder %s113, %s114
      %p125 = scmp.eq.s32.totalorder %s21, 0
      %p126 = por %p124, %p125
      %p127 = scmp.ne.s32.totalorder %s113, %s114
      %p128 = scmp.eq.s32.totalorder %s22, 1
      %p129 = por %p127, %p128
      %p131 = scmp.ne.s32.totalorder %s114, %s130
      %p132 = scmp.eq.s32.totalorder %s22, 0
      %p133 = por %p131, %p132
      %p134 = scmp.le.s32.totalorder 1, %s16
      %p135 = scmp.lt.s32.totalorder %s16, 3
      %p136 = pnand %p134, %p135
      %p137 = pneg %p136
      // Predicated region
      $region9: #{residual_block_forward.4} parent=5 // pred_check
        _
      $region10: #{residual_block_forward.4} parent=5 // pred_check_branch
        %139 = sbr.rel (%p136) target = $region12
      $region11: #{residual_block_forward.4} parent=5 // pred_region
        %s140 = ssub.s32 %s16, 1
        // Predicated region
        $region13: #{residual_block_forward.4} parent=11 // pred_check
          %p141 = pneg %p77
        $region14: #{residual_block_forward.4} parent=11 // pred_check_branch
          %143 = sbr.rel (%p141) target = $region16
        $region15: #{residual_block_forward.4} parent=11 // pred_region
          %s145 = ssub.s32 128, 128
          %146 = vsyncadd [#allocation6], %s145
          %s147 = sshll.u32 [#allocation5], 4
          %s148 = int_to_ptr.vmem [resolvable:$true] %s147
          %153 = dma.hbm_to_vmem [thread:$0]  %s1, 128, %s148, [#allocation6], 64, 64, 4
        $region16: #{residual_block_forward.4} parent=11 // pred_fallthru
          _
        // Predicated region
        $region17: #{residual_block_forward.4} parent=11 // pred_check
          %p154 = pneg %p98
        $region18: #{residual_block_forward.4} parent=11 // pred_check_branch
          %156 = sbr.rel (%p154) target = $region20
        $region19: #{residual_block_forward.4} parent=11 // pred_region
          %s158 = ssub.s32 256, 256
          %159 = vsyncadd [#allocation6], %s158
          %s160 = sshll.u32 [#allocation7], 4
          %s161 = int_to_ptr.vmem [resolvable:$true] %s160
          %166 = dma.hbm_to_vmem [thread:$0]  %s2, 256, %s161, [#allocation6], 128, 128, 8
        $region20: #{residual_block_forward.4} parent=11 // pred_fallthru
          _
      $region12: #{residual_block_forward.4} parent=5 // pred_fallthru
        _
      %p167 = scmp.lt.s32.totalorder %s16, 2
      // Predicated region
      $region21: #{residual_block_forward.4} parent=5 // pred_check
        %p168 = pneg %p167
      $region22: #{residual_block_forward.4} parent=5 // pred_check_branch
        %170 = sbr.rel (%p168) target = $region24
      $region23: #{residual_block_forward.4} parent=5 // pred_region
        // Predicated region
        $region25: #{residual_block_forward.4} parent=23 // pred_check
          %p171 = pneg %p50
        $region26: #{residual_block_forward.4} parent=23 // pred_check_branch
          %173 = sbr.rel (%p171) target = $region28
        $region27: #{residual_block_forward.4} parent=23 // pred_region
          %s174 = sand.u32 %s40, 1
          %s175 = scalar_lea.sflag [#allocation3], %s174
          %s176 = sand.u32 %s40, 1
          %s177 = smul.addr %s176, 4
          %s178 = scalar_lea.vmem [#allocation2], %s177
          %s179 = smul.u32 2, %s24
          %s181 = ssub.s32 64, 64
          %182 = vsyncadd %s175, %s181
          %s183 = smul.addr %s23, 2
          %s184 = sadd.s32 %s179, %s183
          %s185 = smul.addr %s184, 32
          %s186 = scalar_lea.hbm %s0, %s185
          %s188 = sshll.u32 %s178, 4
          %s189 = int_to_ptr.vmem [resolvable:$true] %s188
          %191 = dma.hbm_to_vmem [thread:$0]  %s186, 64, %s189, %s175
        $region28: #{residual_block_forward.4} parent=23 // pred_fallthru
          _
      $region24: #{residual_block_forward.4} parent=5 // pred_fallthru
        _
      %p192 = scmp.le.s32.totalorder 1, %s16
      %p193 = scmp.lt.s32.totalorder %s16, 3
      %p194 = pnand %p192, %p193
      %p195 = pneg %p194
      // Predicated region
      $region29: #{residual_block_forward.4} parent=5 // pred_check
        _
      $region30: #{residual_block_forward.4} parent=5 // pred_check_branch
        %197 = sbr.rel (%p194) target = $region32
      $region31: #{residual_block_forward.4} parent=5 // pred_region
        %s198 = ssub.s32 %s16, 1
        %s199 = sand.u32 %s43, 1
        %s200 = scalar_lea.sflag [#allocation3], %s199
        %s201 = sand.u32 %s43, 1
        %s202 = smul.addr %s201, 4
        %s203 = scalar_lea.vmem [#allocation2], %s202
        // Predicated region
        $region33: #{residual_block_forward.4} parent=31 // pred_check
          %p204 = pneg %p56
        $region34: #{residual_block_forward.4} parent=31 // pred_check_branch
          %206 = sbr.rel (%p204) target = $region36
        $region35: #{residual_block_forward.4} parent=31 // pred_region
          %207 = dma.done %s200, 64
        $region36: #{residual_block_forward.4} parent=31 // pred_fallthru
          _
        // Predicated region
        $region37: #{residual_block_forward.4} parent=31 // pred_check
          %p208 = pneg %p77
        $region38: #{residual_block_forward.4} parent=31 // pred_check_branch
          %210 = sbr.rel (%p208) target = $region40
        $region39: #{residual_block_forward.4} parent=31 // pred_region
          %211 = dma.done [#allocation6], 128
        $region40: #{residual_block_forward.4} parent=31 // pred_fallthru
          _
        // Predicated region
        $region41: #{residual_block_forward.4} parent=31 // pred_check
          %p212 = pneg %p98
        $region42: #{residual_block_forward.4} parent=31 // pred_check_branch
          %214 = sbr.rel (%p212) target = $region44
        $region43: #{residual_block_forward.4} parent=31 // pred_region
          %215 = dma.done [#allocation6], 256
        $region44: #{residual_block_forward.4} parent=31 // pred_fallthru
          _
        %s216 = sand.u32 %s43, 1
        %s217 = scalar_lea.sflag [#allocation3], %s216
        %s218 = sand.u32 %s43, 1
        %s219 = smul.addr %s218, 4
        %s220 = scalar_lea.vmem [#allocation2], %s219
        %p221 = pneg %p56
        %p222 = pneg %p53
        %p223 = pneg %p77
        %p224 = pneg %p74
        %p225 = pneg %p98
        %p226 = pneg %p95
        %p227 = pneg %p126
        %p228 = pneg %p123
        %s229 = sand.u32 %s113, 1
        %s230 = scalar_lea.sflag [#allocation4], %s229
        %s231 = sand.u32 %s113, 1
        %s232 = smul.addr %s231, 32
        %s233 = scalar_lea.vmem [#allocation8], %s232
        %s234 = smul.u32 2, %s26
        %s235 = smul.u32 2, %s26
        %v237 = vld [vmem:[#allocation5] sm:$0xf]
        %v238 = vld [vmem:[#allocation5 + $0x4] sm:$0xf]
        %v239 = vld [vmem:[%s203] sm:$0xf]
        %v240 = vld [vmem:[#allocation7] sm:$0xff]
        %v241 = vld [vmem:[#allocation7 + $0x8] sm:$0xff]
        %243 = vset.pattern.permute.xlu0 0
        %244 = vperm.xlu0 %243, %v240
        %v245 = vpop.permute.xlu0 %244
        %248 = vset.pattern.permute.xlu0 0
        %249 = vperm.xlu0 %248, %v241
        %v250 = vpop.permute.xlu0 %249
        %v254 = vunpack.c.l.b16 %v237
        %v255 = vunpack.c.l.b16 %v238
        %v256 = vpack.c.b16 %v255, %v254
        %v259 = vunpack.c.l.s4 1983009808
        %v260 = vunpack.c.0.s8 %v259
        %v261 = vlaneseq
        %v262 = vshrl.u32 %v261, 7
        %v263 = vsub.s32 %v260, %v262
        %v264 = vrot.slane %v239, %v263
        %v265 = vcombine.high %v264, %v264
        %vm266 = vcmask 31744
        %v268 = vsel %vm266, %v256, 0
        %vm270 = vcmask 1041408
        %v272 = vsel %vm270, %v264, 0
        %v275 = vsel %vm270, %v265, 0
        %277 = vmatprep.subr.bf16.mxu0 %v275
        %278 = vmatpush1.bf16.msra.mxu0 %v272
        %279 = vmatprep.subr.bf16.mxu0 0
        %280 = vmatpush1.bf16.msra.mxu0 0
        %281 = vmatprep.subr.bf16.mxu0 0
        %282 = vmatpush1.bf16.msra.mxu0 0
        %283 = vmatprep.subr.bf16.mxu0 0
        %284 = vmatpush1.bf16.msra.mxu0 0
        %285 = vmatprep.subr.bf16.mxu0 0
        %286 = vmatpush1.bf16.msra.mxu0 0
        %287 = vmatprep.subr.bf16.mxu0 0
        %288 = vmatpush1.bf16.msra.mxu0 0
        %289 = vmatprep.subr.bf16.mxu0 0
        %290 = vmatpush1.bf16.msra.mxu0 0
        %291 = vmatprep.subr.bf16.mxu0 0
        %292 = vmatpush1.bf16.msra.mxu0 0
        %293 = vmatprep.subr.bf16.mxu0 0
        %294 = vmatpush1.bf16.msra.mxu0 0
        %295 = vmatprep.subr.bf16.mxu0 0
        %296 = vmatpush1.bf16.msra.mxu0 0
        %297 = vmatprep.subr.bf16.mxu0 0
        %298 = vmatpush1.bf16.msra.mxu0 0
        %299 = vmatprep.subr.bf16.mxu0 0
        %300 = vmatpush1.bf16.msra.mxu0 0
        %301 = vmatprep.subr.bf16.mxu0 0
        %302 = vmatpush1.bf16.msra.mxu0 0
        %303 = vmatprep.subr.bf16.mxu0 0
        %304 = vmatpush1.bf16.msra.mxu0 0
        %305 = vmatprep.subr.bf16.mxu0 0
        %306 = vmatpush1.bf16.msra.mxu0 0
        %307 = vmatprep.subr.bf16.mxu0 0
        %308 = vmatpush1.bf16.msra.mxu0 0
        %309 = vmatprep.mubr.bf16.mxu0 0
        %310 = vmatmul.mubr.bf16.gmra.mrb[0].mxu0 %v268
        %v311 = vpop.f32.mrb[0].mxu0
        %v312 = vadd.f32 %v245, %v311
        %v313 = vpop.f32.mrb[0].mxu0
        %v314 = vadd.f32 %v245, %v313
        %v315 = vpop.f32.mrb[0].mxu0
        %v316 = vadd.f32 %v250, %v315
        %v317 = vpop.f32.mrb[0].mxu0
        %v318 = vadd.f32 %v250, %v317
        %319 = vdwg.mxu0
        %320 = vst [vmem:[%s233] sm:$0xff] %v312
        %321 = vst [vmem:[%s233 + $0x8] sm:$0xff] %v314
        %322 = vst [vmem:[%s233 + $0x10] sm:$0xff] %v316
        %323 = vst [vmem:[%s233 + $0x18] sm:$0xff] %v318
        %s324 = sand.u32 %s113, 1
        %s325 = scalar_lea.sflag [#allocation4], %s324
        %s326 = sand.u32 %s113, 1
        %s327 = smul.addr %s326, 32
        %s328 = scalar_lea.vmem [#allocation8], %s327
        // Predicated region
        $region45: #{residual_block_forward.4} parent=31 // pred_check
          %p329 = pneg %p123
        $region46: #{residual_block_forward.4} parent=31 // pred_check_branch
          %331 = sbr.rel (%p329) target = $region48
        $region47: #{residual_block_forward.4} parent=31 // pred_region
          %s332 = smul.u32 2, %s26
          %s334 = ssub.s32 512, 512
          %335 = vsyncadd %s325, %s334
          %s336 = smul.addr %s25, 4
          %s337 = sadd.s32 %s332, %s336
          %s338 = smul.addr %s337, 128
          %s339 = scalar_lea.hbm %s3, %s338
          %s340 = sshll.u32 %s328, 4
          %s341 = int_to_ptr.vmem [resolvable:$true] %s340
          %346 = dma.vmem_to_hbm [thread:$0]  %s341, 512, %s339, %s325, 256, 256, 16
        $region48: #{residual_block_forward.4} parent=31 // pred_fallthru
          _
      $region32: #{residual_block_forward.4} parent=5 // pred_fallthru
        _
      %p347 = scmp.le.s32.totalorder 2, %s16
      // Predicated region
      $region49: #{residual_block_forward.4} parent=5 // pred_check
        %p348 = pneg %p347
      $region50: #{residual_block_forward.4} parent=5 // pred_check_branch
        %350 = sbr.rel (%p348) target = $region52
      $region51: #{residual_block_forward.4} parent=5 // pred_region
        %s351 = ssub.s32 %s16, 2
        // Predicated region
        $region53: #{residual_block_forward.4} parent=51 // pred_check
          %p352 = pneg %p129
        $region54: #{residual_block_forward.4} parent=51 // pred_check_branch
          %354 = sbr.rel (%p352) target = $region56
        $region55: #{residual_block_forward.4} parent=51 // pred_region
          %s355 = sand.u32 %s114, 1
          %s356 = scalar_lea.sflag [#allocation4], %s355
          %s357 = sand.u32 %s114, 1
          %s358 = smul.addr %s357, 32
          %s359 = scalar_lea.vmem [#allocation8], %s358
          %360 = dma.done %s356, 512
        $region56: #{residual_block_forward.4} parent=51 // pred_fallthru
          _
      $region52: #{residual_block_forward.4} parent=5 // pred_fallthru
        _
    $region6: #{residual_block_forward.4} parent=1 // loop_footer
      %s20 = sadd.s32 1, %s16
    $region7: #{residual_block_forward.4} parent=1 // loop_footer_branch
      %15 = sbr.rel target = $region3
    $region8: #{residual_block_forward.4} parent=1 // loop_exit
      _
    %361 = vsyncpa [#allocation3], 1
    %s362 = scalar_lea.sflag [#allocation3], 1
    %363 = vsyncpa %s362, 1
    %364 = vsyncpa [#allocation6], 1
    %365 = vsyncpa [#allocation4], 1
    %s366 = scalar_lea.sflag [#allocation4], 1
    %367 = vsyncpa %s366, 1

// kernel: residual_block_forward.3
$region0: #{residual_block_forward.3}
  #allocation0 [shape = 'u32[]', space=smem, size = 0x4, offset = 0x4, fixed_abs, tag = 'smem constant byte address 0x4 - core index']
  #allocation1 [shape = 'u32[144,128]{1,0:T(1,128)}', space=vmem, size = 0x12000, scoped, tag = 'internal scratch']
  #allocation2 [shape = 'bf16[64,2]{1,0:T(16,128)(2,1)}', space=vmem, size = 0x4000, scoped, tag = 'scratch operand']
  #allocation3 [shape = 'f32[64,1]{1,0:T(8,128)}', space=vmem, size = 0x8000, scoped, tag = 'scratch operand']
  #allocation4 [shape = 'f32[64,1]{1,0:T(8,128)}', space=vmem, size = 0x8000, scoped, tag = 'scratch operand']
  #allocation5 [shape = 'f32[64,16]{1,0:T(8,128)}', space=vmem, size = 0x8000, scoped, tag = 'scratch operand']
  %s0 = inlined_call_operand.hbm [shape: bf16[2,64,36], index: 0, kind: input, shape index: {}, may-alias: {0,1}]
  %s1 = inlined_call_operand.hbm [shape: bf16[2,64,36], index: 1, kind: input, shape index: {}, may-alias: {0,1}]
  %s2 = inlined_call_operand.hbm [shape: bf16[36,16], index: 2, kind: input, shape index: {}]
  %s3 = inlined_call_operand.hbm [shape: f32[1,16], index: 3, kind: input, shape index: {}]
  %s4 = inlined_call_operand.hbm [shape: bf16[16,20], index: 4, kind: input, shape index: {}]
  %s5 = inlined_call_operand.hbm [shape: f32[1,20], index: 5, kind: input, shape index: {}]
  %s6 = inlined_call_operand.hbm [shape: bf16[2,64,16], index: 6, kind: output, shape index: {}]
  %s7 = sld [smem:[#allocation0]]
  $region89: #{residual_block_forward.3} parent=0
    _
  %s9 = ssub.s32 1, %s7
  %s10 = scalar_select 0, %s9, %s7
  $region1: #{residual_block_forward.3} parent=0
    #allocation6 [shape = 'u8[32768]{0}', space=vmem, size = 0x8000, scoped, tag = 'input window, operand 0']
    #allocation7 [shape = 's32[2]{0}', space=sflag, size = 0x8, scoped, tag = 'scoped memory for residual_block_forward.3']
    #allocation8 [shape = 's32[2]{0}', space=sflag, size = 0x8, scoped, tag = 'scoped memory for residual_block_forward.3']
    #allocation9 [shape = 'u8[32768]{0}', space=vmem, size = 0x8000, scoped, tag = 'input window, operand 1']
    #allocation10 [shape = 's32[2]{0}', space=sflag, size = 0x8, scoped, tag = 'scoped memory for residual_block_forward.3']
    #allocation11 [shape = 'u8[10240]{0}', space=vmem, size = 0x2800, scoped, tag = 'input window, operand 2, single buffered']
    #allocation12 [shape = 'u8[512]{0}', space=vmem, size = 0x400, scoped, tag = 'input window, operand 3, single buffered']
    #allocation13 [shape = 's32[1]{0}', space=sflag, size = 0x4, scoped, tag = 'scoped memory for residual_block_forward.3']
    #allocation14 [shape = 'u8[4096]{0}', space=vmem, size = 0x1000, scoped, tag = 'input window, operand 4, single buffered']
    #allocation15 [shape = 'u8[512]{0}', space=vmem, size = 0x400, scoped, tag = 'input window, operand 5, single buffered']
    #allocation16 [shape = 's32[1]{0}', space=sflag, size = 0x4, scoped, tag = 'scoped memory for residual_block_forward.3']
    #allocation17 [shape = 'u8[32768]{0}', space=vmem, size = 0x8000, scoped, tag = 'output window, operand 0']
    %11 = vsyncpa [#allocation7], 0
    %s12 = scalar_lea.sflag [#allocation7], 1
    %13 = vsyncpa %s12, 0
    %14 = vsyncpa [#allocation10], 0
    %s15 = scalar_lea.sflag [#allocation10], 1
    %16 = vsyncpa %s15, 0
    %17 = vsyncpa [#allocation13], 0
    %18 = vsyncpa [#allocation16], 0
    %19 = vsyncpa [#allocation8], 0
    %s20 = scalar_lea.sflag [#allocation8], 1
    %21 = vsyncpa %s20, 0
    loop: start=0, step=1, limit=4
    $region2: #{residual_block_forward.3} parent=1 // loop_pre_header
      _
    $region3: #{residual_block_forward.3} parent=1 // loop_header
      %s23 = sphi 0, %s27
      %p24 = scmp.ge.s32.totalorder %s23, 4
      %s30 = sphi 0, %s49
      %s31 = sphi 0, %s45
      %s32 = sphi 0, %s41
      %s33 = sphi 0, %s30
      %s34 = sphi 0, %s31
      %s35 = sphi 0, %s32
      %s36 = sphi 0, %s33
      %s37 = sphi 0, %s34
      %s38 = sphi 0, %s35
      %s54 = sphi 0, %s56
      %s57 = sphi 0, %s54
      %s58 = sphi 0, %s57
      %s74 = sphi 0, %s58
      %s82 = sphi 0, %s84
      %s85 = sphi 0, %s82
      %s86 = sphi 0, %s85
      %s102 = sphi 0, %s86
      %s106 = sphi 0, %s106
      %s108 = sphi 0, %s106
      %s109 = sphi 0, %s108
      %s123 = sphi 0, %s109
      %s127 = sphi 0, %s127
      %s129 = sphi 0, %s127
      %s130 = sphi 0, %s129
      %s144 = sphi 0, %s130
      %s148 = sphi 0, %s148
      %s150 = sphi 0, %s148
      %s151 = sphi 0, %s150
      %s165 = sphi 0, %s151
      %s169 = sphi 0, %s169
      %s171 = sphi 0, %s169
      %s172 = sphi 0, %s171
      %s186 = sphi 0, %s172
      %s194 = sphi 0, %s196
      %s197 = sphi 0, %s194
      %s198 = sphi 0, %s197
      %s214 = sphi 0, %s198
    $region4: #{residual_block_forward.3} parent=1 // loop_header_branch
      %26 = sbr.rel (%p24) target = $region8
    $region5: #{residual_block_forward.3} parent=1 // loop_body
      %s28 = ssub.s32 %s23, 1
      %s29 = ssub.s32 %s23, 2
      %s39 = sadd.s32 1, %s32
      %p40 = scmp.ge.s32.totalorder %s39, 1
      %s41 = scalar_select %p40, 0, %s39
      %s42 = sadd.s32 1, %s31
      %s43 = scalar_select %p40, %s42, %s31
      %p44 = scmp.ge.s32.totalorder %s43, 1
      %s45 = scalar_select %p44, 0, %s43
      %s46 = sadd.s32 1, %s30
      %s47 = scalar_select %p44, %s46, %s30
      %p48 = scmp.ge.s32.totalorder %s47, 2
      %s49 = scalar_select %p48, 0, %s47
      %s50 = ssub.s32 %s30, %s49
      %s51 = ssub.s32 %s31, %s45
      %s52 = sor.u32 %s50, %s51
      %p53 = scmp.eq.s32.totalorder %s52, 0
      %s55 = sadd.s32 %s54, 1
      %s56 = scalar_select %p53, %s54, %s55
      %p59 = pneg %p53
      %p60 = scmp.eq.s32.totalorder %s23, 1
      %p61 = por %p59, %p60
      %p62 = scmp.ne.s32.totalorder %s54, %s57
      %p63 = scmp.eq.s32.totalorder %s23, 0
      %p64 = por %p62, %p63
      %p65 = scmp.ne.s32.totalorder %s54, %s57
      %p66 = scmp.eq.s32.totalorder %s28, 1
      %p67 = por %p65, %p66
      %p68 = scmp.ne.s32.totalorder %s57, %s58
      %p69 = scmp.eq.s32.totalorder %s28, 0
      %p70 = por %p68, %p69
      %p71 = scmp.ne.s32.totalorder %s57, %s58
      %p72 = scmp.eq.s32.totalorder %s29, 1
      %p73 = por %p71, %p72
      %p75 = scmp.ne.s32.totalorder %s58, %s74
      %p76 = scmp.eq.s32.totalorder %s29, 0
      %p77 = por %p75, %p76
      %s78 = ssub.s32 %s30, %s49
      %s79 = ssub.s32 %s32, %s41
      %s80 = sor.u32 %s78, %s79
      %p81 = scmp.eq.s32.totalorder %s80, 0
      %s83 = sadd.s32 %s82, 1
      %s84 = scalar_select %p81, %s82, %s83
      %p87 = pneg %p81
      %p88 = scmp.eq.s32.totalorder %s23, 1
      %p89 = por %p87, %p88
      %p90 = scmp.ne.s32.totalorder %s82, %s85
      %p91 = scmp.eq.s32.totalorder %s23, 0
      %p92 = por %p90, %p91
      %p93 = scmp.ne.s32.totalorder %s82, %s85
      %p94 = scmp.eq.s32.totalorder %s28, 1
      %p95 = por %p93, %p94
      %p96 = scmp.ne.s32.totalorder %s85, %s86
      %p97 = scmp.eq.s32.totalorder %s28, 0
      %p98 = por %p96, %p97
      %p99 = scmp.ne.s32.totalorder %s85, %s86
      %p100 = scmp.eq.s32.totalorder %s29, 1
      %p101 = por %p99, %p100
      %p103 = scmp.ne.s32.totalorder %s86, %s102
      %p104 = scmp.eq.s32.totalorder %s29, 0
      %p105 = por %p103, %p104
      %s107 = sadd.s32 %s106, 1
      %p110 = scmp.eq.s32.totalorder %s23, 1
      %p111 = scmp.ne.s32.totalorder %s106, %s108
      %p112 = scmp.eq.s32.totalorder %s23, 0
      %p113 = por %p111, %p112
      %p114 = scmp.ne.s32.totalorder %s106, %s108
      %p115 = scmp.eq.s32.totalorder %s28, 1
      %p116 = por %p114, %p115
      %p117 = scmp.ne.s32.totalorder %s108, %s109
      %p118 = scmp.eq.s32.totalorder %s28, 0
      %p119 = por %p117, %p118
      %p120 = scmp.ne.s32.totalorder %s108, %s109
      %p121 = scmp.eq.s32.totalorder %s29, 1
      %p122 = por %p120, %p121
      %p124 = scmp.ne.s32.totalorder %s109, %s123
      %p125 = scmp.eq.s32.totalorder %s29, 0
      %p126 = por %p124, %p125
      %s128 = sadd.s32 %s127, 1
      %p131 = scmp.eq.s32.totalorder %s23, 1
      %p132 = scmp.ne.s32.totalorder %s127, %s129
      %p133 = scmp.eq.s32.totalorder %s23, 0
      %p134 = por %p132, %p133
      %p135 = scmp.ne.s32.totalorder %s127, %s129
      %p136 = scmp.eq.s32.totalorder %s28, 1
      %p137 = por %p135, %p136
      %p138 = scmp.ne.s32.totalorder %s129, %s130
      %p139 = scmp.eq.s32.totalorder %s28, 0
      %p140 = por %p138, %p139
      %p141 = scmp.ne.s32.totalorder %s129, %s130
      %p142 = scmp.eq.s32.totalorder %s29, 1
      %p143 = por %p141, %p142
      %p145 = scmp.ne.s32.totalorder %s130, %s144
      %p146 = scmp.eq.s32.totalorder %s29, 0
      %p147 = por %p145, %p146
      %s149 = sadd.s32 %s148, 1
      %p152 = scmp.eq.s32.totalorder %s23, 1
      %p153 = scmp.ne.s32.totalorder %s148, %s150
      %p154 = scmp.eq.s32.totalorder %s23, 0
      %p155 = por %p153, %p154
      %p156 = scmp.ne.s32.totalorder %s148, %s150
      %p157 = scmp.eq.s32.totalorder %s28, 1
      %p158 = por %p156, %p157
      %p159 = scmp.ne.s32.totalorder %s150, %s151
      %p160 = scmp.eq.s32.totalorder %s28, 0
      %p161 = por %p159, %p160
      %p162 = scmp.ne.s32.totalorder %s150, %s151
      %p163 = scmp.eq.s32.totalorder %s29, 1
      %p164 = por %p162, %p163
      %p166 = scmp.ne.s32.totalorder %s151, %s165
      %p167 = scmp.eq.s32.totalorder %s29, 0
      %p168 = por %p166, %p167
      %s170 = sadd.s32 %s169, 1
      %p173 = scmp.eq.s32.totalorder %s23, 1
      %p174 = scmp.ne.s32.totalorder %s169, %s171
      %p175 = scmp.eq.s32.totalorder %s23, 0
      %p176 = por %p174, %p175
      %p177 = scmp.ne.s32.totalorder %s169, %s171
      %p178 = scmp.eq.s32.totalorder %s28, 1
      %p179 = por %p177, %p178
      %p180 = scmp.ne.s32.totalorder %s171, %s172
      %p181 = scmp.eq.s32.totalorder %s28, 0
      %p182 = por %p180, %p181
      %p183 = scmp.ne.s32.totalorder %s171, %s172
      %p184 = scmp.eq.s32.totalorder %s29, 1
      %p185 = por %p183, %p184
      %p187 = scmp.ne.s32.totalorder %s172, %s186
      %p188 = scmp.eq.s32.totalorder %s29, 0
      %p189 = por %p187, %p188
      %s190 = ssub.s32 %s30, %s49
      %s191 = ssub.s32 %s31, %s45
      %s192 = sor.u32 %s190, %s191
      %p193 = scmp.eq.s32.totalorder %s192, 0
      %s195 = sadd.s32 %s194, 1
      %s196 = scalar_select %p193, %s194, %s195
      %p199 = pneg %p193
      %p200 = scmp.eq.s32.totalorder %s23, 1
      %p201 = por %p199, %p200
      %p202 = scmp.ne.s32.totalorder %s194, %s197
      %p203 = scmp.eq.s32.totalorder %s23, 0
      %p204 = por %p202, %p203
      %p205 = scmp.ne.s32.totalorder %s194, %s197
      %p206 = scmp.eq.s32.totalorder %s28, 1
      %p207 = por %p205, %p206
      %p208 = scmp.ne.s32.totalorder %s197, %s198
      %p209 = scmp.eq.s32.totalorder %s28, 0
      %p210 = por %p208, %p209
      %p211 = scmp.ne.s32.totalorder %s197, %s198
      %p212 = scmp.eq.s32.totalorder %s29, 1
      %p213 = por %p211, %p212
      %p215 = scmp.ne.s32.totalorder %s198, %s214
      %p216 = scmp.eq.s32.totalorder %s29, 0
      %p217 = por %p215, %p216
      %p218 = scmp.le.s32.totalorder 1, %s23
      %p219 = scmp.lt.s32.totalorder %s23, 3
      %p220 = pnand %p218, %p219
      %p221 = pneg %p220
      // Predicated region
      $region9: #{residual_block_forward.3} parent=5 // pred_check
        _
      $region10: #{residual_block_forward.3} parent=5 // pred_check_branch
        %223 = sbr.rel (%p220) target = $region12
      $region11: #{residual_block_forward.3} parent=5 // pred_region
        %s224 = ssub.s32 %s23, 1
        // Predicated region
        $region13: #{residual_block_forward.3} parent=11 // pred_check
          %p225 = pneg %p119
        $region14: #{residual_block_forward.3} parent=11 // pred_check_branch
          %227 = sbr.rel (%p225) target = $region16
        $region15: #{residual_block_forward.3} parent=11 // pred_region
          %s229 = ssub.s32 320, 320
          %230 = vsyncadd [#allocation10], %s229
          %s231 = sshll.u32 [#allocation11], 4
          %s232 = int_to_ptr.vmem [resolvable:$true] %s231
          %237 = dma.hbm_to_vmem [thread:$0]  %s2, 320, %s232, [#allocation10], 64, 64, 4
        $region16: #{residual_block_forward.3} parent=11 // pred_fallthru
          _
        // Predicated region
        $region17: #{residual_block_forward.3} parent=11 // pred_check
          %p238 = pneg %p140
        $region18: #{residual_block_forward.3} parent=11 // pred_check_branch
          %240 = sbr.rel (%p238) target = $region20
        $region19: #{residual_block_forward.3} parent=11 // pred_region
          %s242 = ssub.s32 16, 16
          %243 = vsyncadd [#allocation13], %s242
          %s245 = sshll.u32 [#allocation12], 4
          %s246 = int_to_ptr.vmem [resolvable:$true] %s245
          %248 = dma.hbm_to_vmem [thread:$0]  %s3, 16, %s246, [#allocation13]
        $region20: #{residual_block_forward.3} parent=11 // pred_fallthru
          _
        // Predicated region
        $region21: #{residual_block_forward.3} parent=11 // pred_check
          %p249 = pneg %p161
        $region22: #{residual_block_forward.3} parent=11 // pred_check_branch
          %251 = sbr.rel (%p249) target = $region24
        $region23: #{residual_block_forward.3} parent=11 // pred_region
          %s253 = ssub.s32 128, 128
          %254 = vsyncadd [#allocation13], %s253
          %s255 = sshll.u32 [#allocation14], 4
          %s256 = int_to_ptr.vmem [resolvable:$true] %s255
          %261 = dma.hbm_to_vmem [thread:$0]  %s4, 128, %s256, [#allocation13], 64, 64, 4
        $region24: #{residual_block_forward.3} parent=11 // pred_fallthru
          _
        // Predicated region
        $region25: #{residual_block_forward.3} parent=11 // pred_check
          %p262 = pneg %p182
        $region26: #{residual_block_forward.3} parent=11 // pred_check_branch
          %264 = sbr.rel (%p262) target = $region28
        $region27: #{residual_block_forward.3} parent=11 // pred_region
          %s266 = ssub.s32 16, 16
          %267 = vsyncadd [#allocation16], %s266
          %s269 = sshll.u32 [#allocation15], 4
          %s270 = int_to_ptr.vmem [resolvable:$true] %s269
          %272 = dma.hbm_to_vmem [thread:$0]  %s5, 16, %s270, [#allocation16]
        $region28: #{residual_block_forward.3} parent=11 // pred_fallthru
          _
      $region12: #{residual_block_forward.3} parent=5 // pred_fallthru
        _
      %p273 = scmp.lt.s32.totalorder %s23, 2
      // Predicated region
      $region29: #{residual_block_forward.3} parent=5 // pred_check
        %p274 = pneg %p273
      $region30: #{residual_block_forward.3} parent=5 // pred_check_branch
        %276 = sbr.rel (%p274) target = $region32
      $region31: #{residual_block_forward.3} parent=5 // pred_region
        // Predicated region
        $region33: #{residual_block_forward.3} parent=31 // pred_check
          %p277 = pneg %p64
        $region34: #{residual_block_forward.3} parent=31 // pred_check_branch
          %279 = sbr.rel (%p277) target = $region36
        $region35: #{residual_block_forward.3} parent=31 // pred_region
          %s280 = sand.u32 %s54, 1
          %s281 = scalar_lea.sflag [#allocation7], %s280
          %s282 = sand.u32 %s54, 1
          %s283 = smul.addr %s282, 32
          %s284 = scalar_lea.vmem [#allocation6], %s283
          %s285 = smul.u32 8, %s31
          %s287 = ssub.s32 512, 512
          %288 = vsyncadd %s281, %s287
          %s289 = smul.addr %s30, 8
          %s290 = sadd.s32 %s285, %s289
          %s291 = smul.addr %s290, 64
          %s292 = scalar_lea.hbm %s0, %s291
          %s293 = sshll.u32 %s284, 4
          %s294 = int_to_ptr.vmem [resolvable:$true] %s293
          %299 = dma.hbm_to_vmem [thread:$0]  %s292, 512, %s294, %s281, 64, 64, 4
        $region36: #{residual_block_forward.3} parent=31 // pred_fallthru
          _
        // Predicated region
        $region37: #{residual_block_forward.3} parent=31 // pred_check
          %p300 = pneg %p92
        $region38: #{residual_block_forward.3} parent=31 // pred_check_branch
          %302 = sbr.rel (%p300) target = $region40
        $region39: #{residual_block_forward.3} parent=31 // pred_region
          %s303 = sand.u32 %s23, 1
          %s304 = scalar_lea.sflag [#allocation10], %s303
          %s305 = sand.u32 %s82, 1
          %s306 = smul.addr %s305, 32
          %s307 = scalar_lea.vmem [#allocation9], %s306
          %s308 = smul.u32 8, %s32
          %s310 = ssub.s32 512, 512
          %311 = vsyncadd %s304, %s310
          %s312 = smul.addr %s30, 8
          %s313 = sadd.s32 %s308, %s312
          %s314 = smul.addr %s313, 64
          %s315 = scalar_lea.hbm %s1, %s314
          %s316 = sshll.u32 %s307, 4
          %s317 = int_to_ptr.vmem [resolvable:$true] %s316
          %322 = dma.hbm_to_vmem [thread:$0]  %s315, 512, %s317, %s304, 64, 64, 4
        $region40: #{residual_block_forward.3} parent=31 // pred_fallthru
          _
      $region32: #{residual_block_forward.3} parent=5 // pred_fallthru
        _
      %p323 = scmp.le.s32.totalorder 1, %s23
      %p324 = scmp.lt.s32.totalorder %s23, 3
      %p325 = pnand %p323, %p324
      %p326 = pneg %p325
      // Predicated region
      $region41: #{residual_block_forward.3} parent=5 // pred_check
        _
      $region42: #{residual_block_forward.3} parent=5 // pred_check_branch
        %328 = sbr.rel (%p325) target = $region44
      $region43: #{residual_block_forward.3} parent=5 // pred_region
        %s329 = ssub.s32 %s23, 1
        %s330 = sand.u32 %s57, 1
        %s331 = scalar_lea.sflag [#allocation7], %s330
        %s332 = sand.u32 %s57, 1
        %s333 = smul.addr %s332, 32
        %s334 = scalar_lea.vmem [#allocation6], %s333
        // Predicated region
        $region45: #{residual_block_forward.3} parent=43 // pred_check
          %p335 = pneg %p70
        $region46: #{residual_block_forward.3} parent=43 // pred_check_branch
          %337 = sbr.rel (%p335) target = $region48
        $region47: #{residual_block_forward.3} parent=43 // pred_region
          %338 = dma.done %s331, 512
        $region48: #{residual_block_forward.3} parent=43 // pred_fallthru
          _
        %s339 = sand.u32 %s28, 1
        %s340 = scalar_lea.sflag [#allocation10], %s339
        %s341 = sand.u32 %s85, 1
        %s342 = smul.addr %s341, 32
        %s343 = scalar_lea.vmem [#allocation9], %s342
        // Predicated region
        $region49: #{residual_block_forward.3} parent=43 // pred_check
          %p344 = pneg %p98
        $region50: #{residual_block_forward.3} parent=43 // pred_check_branch
          %346 = sbr.rel (%p344) target = $region52
        $region51: #{residual_block_forward.3} parent=43 // pred_region
          %347 = dma.done %s340, 512
        $region52: #{residual_block_forward.3} parent=43 // pred_fallthru
          _
        // Predicated region
        $region53: #{residual_block_forward.3} parent=43 // pred_check
          %p348 = pneg %p119
        $region54: #{residual_block_forward.3} parent=43 // pred_check_branch
          %350 = sbr.rel (%p348) target = $region56
        $region55: #{residual_block_forward.3} parent=43 // pred_region
          %351 = dma.done [#allocation10], 320
        $region56: #{residual_block_forward.3} parent=43 // pred_fallthru
          _
        // Predicated region
        $region57: #{residual_block_forward.3} parent=43 // pred_check
          %p352 = pneg %p140
        $region58: #{residual_block_forward.3} parent=43 // pred_check_branch
          %354 = sbr.rel (%p352) target = $region60
        $region59: #{residual_block_forward.3} parent=43 // pred_region
          %355 = dma.done [#allocation13], 16
        $region60: #{residual_block_forward.3} parent=43 // pred_fallthru
          _
        // Predicated region
        $region61: #{residual_block_forward.3} parent=43 // pred_check
          %p356 = pneg %p161
        $region62: #{residual_block_forward.3} parent=43 // pred_check_branch
          %358 = sbr.rel (%p356) target = $region64
        $region63: #{residual_block_forward.3} parent=43 // pred_region
          %359 = dma.done [#allocation13], 128
        $region64: #{residual_block_forward.3} parent=43 // pred_fallthru
          _
        // Predicated region
        $region65: #{residual_block_forward.3} parent=43 // pred_check
          %p360 = pneg %p182
        $region66: #{residual_block_forward.3} parent=43 // pred_check_branch
          %362 = sbr.rel (%p360) target = $region68
        $region67: #{residual_block_forward.3} parent=43 // pred_region
          %363 = dma.done [#allocation16], 16
        $region68: #{residual_block_forward.3} parent=43 // pred_fallthru
          _
        %s364 = sand.u32 %s57, 1
        %s365 = scalar_lea.sflag [#allocation7], %s364
        %s366 = sand.u32 %s57, 1
        %s367 = smul.addr %s366, 32
        %s368 = scalar_lea.vmem [#allocation6], %s367
        %p369 = pneg %p70
        %p370 = pneg %p67
        %s371 = sand.u32 %s28, 1
        %s372 = scalar_lea.sflag [#allocation10], %s371
        %s373 = sand.u32 %s85, 1
        %s374 = smul.addr %s373, 32
        %s375 = scalar_lea.vmem [#allocation9], %s374
        %p376 = pneg %p98
        %p377 = pneg %p95
        %p378 = pneg %p119
        %p379 = pneg %p116
        %p380 = pneg %p140
        %p381 = pneg %p137
        %p382 = pneg %p161
        %p383 = pneg %p158
        %p384 = pneg %p182
        %p385 = pneg %p179
        %p386 = pneg %p210
        %p387 = pneg %p207
        %s388 = sand.u32 %s197, 1
        %s389 = scalar_lea.sflag [#allocation8], %s388
        %s390 = sand.u32 %s197, 1
        %s391 = smul.addr %s390, 32
        %s392 = scalar_lea.vmem [#allocation17], %s391
        %s393 = smul.u32 8, %s34
        %s394 = smul.u32 8, %s35
        %s395 = smul.u32 8, %s34
        %p397 = scmp.eq.s32.totalorder %s35, 0
        // Predicated region
        $region69: #{residual_block_forward.3} parent=43 // pred_check
          %p398 = pneg %p397
        $region70: #{residual_block_forward.3} parent=43 // pred_check_branch
          %400 = sbr.rel (%p398) target = $region72
        $region71: #{residual_block_forward.3} parent=43 // pred_region
          %v401 = vld [vmem:[%s334] sm:$0xf]
          %v402 = vld [vmem:[%s334 + $0x4] sm:$0xf]
          %v403 = vld [vmem:[%s334 + $0x8] sm:$0xf]
          %v404 = vld [vmem:[%s334 + $0xc] sm:$0xf]
          %v405 = vld [vmem:[%s334 + $0x10] sm:$0xf]
          %v406 = vld [vmem:[%s334 + $0x14] sm:$0xf]
          %v407 = vld [vmem:[%s334 + $0x18] sm:$0xf]
          %v408 = vld [vmem:[%s334 + $0x1c] sm:$0xf]
          %v409 = vld [vmem:[#allocation11] sm:$0xf]
          %v410 = vld [vmem:[#allocation11 + $0x4] sm:$0xf]
          %v411 = vld [vmem:[#allocation11 + $0x8] sm:$0xf]
          %v412 = vld [vmem:[#allocation11 + $0xc] sm:$0xf]
          %v413 = vld [vmem:[#allocation11 + $0x10] sm:$0x3]
          %v414 = vld [vmem:[#allocation12] sm:$0x1]
          %v416 = vlaneseq
          %v417 = vshrl.u32 %v416, 7
          %v418 = vsub.s32 0, %v417
          %v419 = vrot.slane %v414, %v418
          %v429 = vunpack.c.l.b16 %v401
          %v430 = vunpack.c.l.b16 %v402
          %v431 = vunpack.c.l.b16 %v403
          %v432 = vunpack.c.l.b16 %v404
          %v433 = vunpack.c.l.b16 %v405
          %v434 = vunpack.c.l.b16 %v406
          %v435 = vunpack.c.l.b16 %v407
          %v436 = vunpack.c.l.b16 %v408
          %v437 = vpack.c.b16 %v430, %v429
          %v438 = vpack.c.b16 %v432, %v431
          %v439 = vpack.c.b16 %v434, %v433
          %v440 = vpack.c.b16 %v436, %v435
          %v446 = vunpack.c.l.b16 %v409
          %v447 = vunpack.c.l.b16 %v410
          %v448 = vunpack.c.l.b16 %v411
          %v449 = vunpack.c.l.b16 %v412
          %v450 = vunpack.c.l.b16 %v413
          %v451 = vpack.c.b16 %v447, %v446
          %v452 = vpack.c.b16 %v449, %v448
          %v453 = vpack.c.b16 %v450, %v450
          %vm456 = vcmask 293888
          %v458 = vsel %vm456, %v437, 0
          %v461 = vsel %vm456, %v438, 0
          %v464 = vsel %vm456, %v439, 0
          %v467 = vsel %vm456, %v440, 0
          %vm469 = vcmask 1041408
          %v471 = vsel %vm469, %v453, 0
          %473 = vmatprep.subr.bf16.mxu0 0
          %474 = vmatpush1.bf16.msra.mxu0 %v451
          %475 = vmatprep.subr.bf16.mxu0 0
          %476 = vmatpush1.bf16.msra.mxu0 %v452
          %477 = vmatprep.subr.bf16.mxu0 0
          %478 = vmatpush1.bf16.msra.mxu0 %v471
          %479 = vmatprep.subr.bf16.mxu0 0
          %480 = vmatpush1.bf16.msra.mxu0 0
          %481 = vmatprep.subr.bf16.mxu0 0
          %482 = vmatpush1.bf16.msra.mxu0 0
          %483 = vmatprep.subr.bf16.mxu0 0
          %484 = vmatpush1.bf16.msra.mxu0 0
          %485 = vmatprep.subr.bf16.mxu0 0
          %486 = vmatpush1.bf16.msra.mxu0 0
          %487 = vmatprep.subr.bf16.mxu0 0
          %488 = vmatpush1.bf16.msra.mxu0 0
          %489 = vmatprep.subr.bf16.mxu0 0
          %490 = vmatpush1.bf16.msra.mxu0 0
          %491 = vmatprep.subr.bf16.mxu0 0
          %492 = vmatpush1.bf16.msra.mxu0 0
          %493 = vmatprep.subr.bf16.mxu0 0
          %494 = vmatpush1.bf16.msra.mxu0 0
          %495 = vmatprep.subr.bf16.mxu0 0
          %496 = vmatpush1.bf16.msra.mxu0 0
          %497 = vmatprep.subr.bf16.mxu0 0
          %498 = vmatpush1.bf16.msra.mxu0 0
          %499 = vmatprep.subr.bf16.mxu0 0
          %500 = vmatpush1.bf16.msra.mxu0 0
          %501 = vmatprep.subr.bf16.mxu0 0
          %502 = vmatpush1.bf16.msra.mxu0 0
          %503 = vmatprep.subr.bf16.mxu0 0
          %504 = vmatpush1.bf16.msra.mxu0 0
          %505 = vmatprep.mubr.bf16.mxu0 0
          %506 = vmatmul.mubr.bf16.gmra.mrb[0].mxu0 %v458
          %v507 = vpop.f32.mrb[0].mxu0
          %v508 = vadd.f32 %v419, %v507
          %v509 = vpop.f32.mrb[0].mxu0
          %v510 = vpop.f32.mrb[0].mxu0
          %v511 = vadd.f32 %v419, %v510
          %v512 = vpop.f32.mrb[0].mxu0
          %513 = vmatprep.mubr.bf16.mxu0 0
          %514 = vmatmul.mubr.bf16.gmra.mrb[0].mxu0 %v461
          %v515 = vpop.f32.mrb[0].mxu0
          %v516 = vadd.f32 %v419, %v515
          %v517 = vpop.f32.mrb[0].mxu0
          %v518 = vpop.f32.mrb[0].mxu0
          %v519 = vadd.f32 %v419, %v518
          %v520 = vpop.f32.mrb[0].mxu0
          %521 = vmatprep.mubr.bf16.mxu0 0
          %522 = vmatmul.mubr.bf16.gmra.mrb[0].mxu0 %v464
          %v523 = vpop.f32.mrb[0].mxu0
          %v524 = vadd.f32 %v419, %v523
          %v525 = vpop.f32.mrb[0].mxu0
          %v526 = vpop.f32.mrb[0].mxu0
          %v527 = vadd.f32 %v419, %v526
          %v528 = vpop.f32.mrb[0].mxu0
          %529 = vmatprep.mubr.bf16.mxu0 0
          %530 = vmatmul.mubr.bf16.gmra.mrb[0].mxu0 %v467
          %v531 = vpop.f32.mrb[0].mxu0
          %v532 = vadd.f32 %v419, %v531
          %v533 = vpop.f32.mrb[0].mxu0
          %v534 = vpop.f32.mrb[0].mxu0
          %v535 = vadd.f32 %v419, %v534
          %v536 = vpop.f32.mrb[0].mxu0
          %537 = vdwg.mxu0
          %vm538 = vcmp.ge.f32.partialorder %v508, 0.0
          %vm539 = vcmp.ge.f32.partialorder %v511, 0.0
          %vm540 = vcmp.ge.f32.partialorder %v516, 0.0
          %vm541 = vcmp.ge.f32.partialorder %v519, 0.0
          %vm542 = vcmp.ge.f32.partialorder %v524, 0.0
          %vm543 = vcmp.ge.f32.partialorder %v527, 0.0
          %vm544 = vcmp.ge.f32.partialorder %v532, 0.0
          %vm545 = vcmp.ge.f32.partialorder %v535, 0.0
          %v546 = vmul.f32 %v508, 0.01
          %v547 = vmul.f32 %v511, 0.01
          %v548 = vmul.f32 %v516, 0.01
          %v549 = vmul.f32 %v519, 0.01
          %v550 = vmul.f32 %v524, 0.01
          %v551 = vmul.f32 %v527, 0.01
          %v552 = vmul.f32 %v532, 0.01
          %v553 = vmul.f32 %v535, 0.01
          %v554 = vsel %vm538, %v508, %v546
          %v555 = vsel %vm539, %v511, %v547
          %v556 = vsel %vm540, %v516, %v548
          %v557 = vsel %vm541, %v519, %v549
          %v558 = vsel %vm542, %v524, %v550
          %v559 = vsel %vm543, %v527, %v551
          %v560 = vsel %vm544, %v532, %v552
          %v561 = vsel %vm545, %v535, %v553
          %v562 = vpack.c.bf16 %v555, %v554
          %v563 = vpack.c.bf16 %v557, %v556
          %v564 = vpack.c.bf16 %v559, %v558
          %v565 = vpack.c.bf16 %v561, %v560
          %v566 = vld [vmem:[#allocation14] sm:$0xf]
          %v567 = vld [vmem:[#allocation14 + $0x4] sm:$0xf]
          %v568 = vld [vmem:[#allocation15] sm:$0x1]
          %v570 = vlaneseq
          %v571 = vshrl.u32 %v570, 7
          %v572 = vsub.s32 0, %v571
          %v573 = vrot.slane %v568, %v572
          %v577 = vunpack.c.l.b16 %v566
          %v578 = vunpack.c.l.b16 %v567
          %v579 = vpack.c.b16 %v578, %v577
          %vm581 = vcmask 130048
          %v583 = vsel %vm581, %v562, 0
          %v586 = vsel %vm581, %v563, 0
          %v589 = vsel %vm581, %v564, 0
          %v592 = vsel %vm581, %v565, 0
          %594 = vmatprep.subr.bf16.mxu0 0
          %595 = vmatpush1.bf16.msra.mxu0 %v579
          %596 = vmatprep.subr.bf16.mxu0 0
          %597 = vmatpush1.bf16.msra.mxu0 0
          %598 = vmatprep.subr.bf16.mxu0 0
          %599 = vmatpush1.bf16.msra.mxu0 0
          %600 = vmatprep.subr.bf16.mxu0 0
          %601 = vmatpush1.bf16.msra.mxu0 0
          %602 = vmatprep.subr.bf16.mxu0 0
          %603 = vmatpush1.bf16.msra.mxu0 0
          %604 = vmatprep.subr.bf16.mxu0 0
          %605 = vmatpush1.bf16.msra.mxu0 0
          %606 = vmatprep.subr.bf16.mxu0 0
          %607 = vmatpush1.bf16.msra.mxu0 0
          %608 = vmatprep.subr.bf16.mxu0 0
          %609 = vmatpush1.bf16.msra.mxu0 0
          %610 = vmatprep.subr.bf16.mxu0 0
          %611 = vmatpush1.bf16.msra.mxu0 0
          %612 = vmatprep.subr.bf16.mxu0 0
          %613 = vmatpush1.bf16.msra.mxu0 0
          %614 = vmatprep.subr.bf16.mxu0 0
          %615 = vmatpush1.bf16.msra.mxu0 0
          %616 = vmatprep.subr.bf16.mxu0 0
          %617 = vmatpush1.bf16.msra.mxu0 0
          %618 = vmatprep.subr.bf16.mxu0 0
          %619 = vmatpush1.bf16.msra.mxu0 0
          %620 = vmatprep.subr.bf16.mxu0 0
          %621 = vmatpush1.bf16.msra.mxu0 0
          %622 = vmatprep.subr.bf16.mxu0 0
          %623 = vmatpush1.bf16.msra.mxu0 0
          %624 = vmatprep.subr.bf16.mxu0 0
          %625 = vmatpush1.bf16.msra.mxu0 0
          %626 = vmatprep.mubr.bf16.mxu0 0
          %627 = vmatmul.mubr.bf16.gmra.mrb[0].mxu0 %v583
          %v628 = vpop.f32.mrb[0].mxu0
          %v629 = vadd.f32 %v573, %v628
          %v630 = vpop.f32.mrb[0].mxu0
          %v631 = vpop.f32.mrb[0].mxu0
          %v632 = vadd.f32 %v573, %v631
          %v633 = vpop.f32.mrb[0].mxu0
          %634 = vmatprep.mubr.bf16.mxu0 0
          %635 = vmatmul.mubr.bf16.gmra.mrb[0].mxu0 %v586
          %v636 = vpop.f32.mrb[0].mxu0
          %v637 = vadd.f32 %v573, %v636
          %v638 = vpop.f32.mrb[0].mxu0
          %v639 = vpop.f32.mrb[0].mxu0
          %v640 = vadd.f32 %v573, %v639
          %v641 = vpop.f32.mrb[0].mxu0
          %642 = vmatprep.mubr.bf16.mxu0 0
          %643 = vmatmul.mubr.bf16.gmra.mrb[0].mxu0 %v589
          %v644 = vpop.f32.mrb[0].mxu0
          %v645 = vadd.f32 %v573, %v644
          %v646 = vpop.f32.mrb[0].mxu0
          %v647 = vpop.f32.mrb[0].mxu0
          %v648 = vadd.f32 %v573, %v647
          %v649 = vpop.f32.mrb[0].mxu0
          %650 = vmatprep.mubr.bf16.mxu0 0
          %651 = vmatmul.mubr.bf16.gmra.mrb[0].mxu0 %v592
          %v652 = vpop.f32.mrb[0].mxu0
          %v653 = vadd.f32 %v573, %v652
          %v654 = vpop.f32.mrb[0].mxu0
          %v655 = vpop.f32.mrb[0].mxu0
          %v656 = vadd.f32 %v573, %v655
          %v657 = vpop.f32.mrb[0].mxu0
          %658 = vdwg.mxu0
          %v659 = vpack.c.bf16 %v632, %v629
          %v660 = vpack.c.bf16 %v640, %v637
          %v661 = vpack.c.bf16 %v648, %v645
          %v662 = vpack.c.bf16 %v656, %v653
          %vm663 = vcmask 15360
          %664 = vst.msk [vmem:[#allocation2] sm:$0xff] %vm663, %v659
          %665 = vst.msk [vmem:[#allocation2 + $0x8] sm:$0xff] %vm663, %v660
          %666 = vst.msk [vmem:[#allocation2 + $0x10] sm:$0xff] %vm663, %v661
          %667 = vst.msk [vmem:[#allocation2 + $0x18] sm:$0xff] %vm663, %v662
          %vm668 = vcmask 7168
          %669 = vst.msk [vmem:[#allocation3] sm:$0xff] %vm668, -inf
          %670 = vst.msk [vmem:[#allocation3 + $0x8] sm:$0xff] %vm668, -inf
          %671 = vst.msk [vmem:[#allocation3 + $0x10] sm:$0xff] %vm668, -inf
          %672 = vst.msk [vmem:[#allocation3 + $0x18] sm:$0xff] %vm668, -inf
          %673 = vst.msk [vmem:[#allocation3 + $0x20] sm:$0xff] %vm668, -inf
          %674 = vst.msk [vmem:[#allocation3 + $0x28] sm:$0xff] %vm668, -inf
          %675 = vst.msk [vmem:[#allocation3 + $0x30] sm:$0xff] %vm668, -inf
          %676 = vst.msk [vmem:[#allocation3 + $0x38] sm:$0xff] %vm668, -inf
          %677 = vst.msk [vmem:[#allocation4] sm:$0xff] %vm668, 0.0
          %678 = vst.msk [vmem:[#allocation4 + $0x8] sm:$0xff] %vm668, 0.0
          %679 = vst.msk [vmem:[#allocation4 + $0x10] sm:$0xff] %vm668, 0.0
          %680 = vst.msk [vmem:[#allocation4 + $0x18] sm:$0xff] %vm668, 0.0
          %681 = vst.msk [vmem:[#allocation4 + $0x20] sm:$0xff] %vm668, 0.0
          %682 = vst.msk [vmem:[#allocation4 + $0x28] sm:$0xff] %vm668, 0.0
          %683 = vst.msk [vmem:[#allocation4 + $0x30] sm:$0xff] %vm668, 0.0
          %684 = vst.msk [vmem:[#allocation4 + $0x38] sm:$0xff] %vm668, 0.0
          %685 = vst.msk [vmem:[#allocation5] sm:$0xff] %vm581, 0.0
          %686 = vst.msk [vmem:[#allocation5 + $0x8] sm:$0xff] %vm581, 0.0
          %687 = vst.msk [vmem:[#allocation5 + $0x10] sm:$0xff] %vm581, 0.0
          %688 = vst.msk [vmem:[#allocation5 + $0x18] sm:$0xff] %vm581, 0.0
          %689 = vst.msk [vmem:[#allocation5 + $0x20] sm:$0xff] %vm581, 0.0
          %690 = vst.msk [vmem:[#allocation5 + $0x28] sm:$0xff] %vm581, 0.0
          %691 = vst.msk [vmem:[#allocation5 + $0x30] sm:$0xff] %vm581, 0.0
          %692 = vst.msk [vmem:[#allocation5 + $0x38] sm:$0xff] %vm581, 0.0
        $region72: #{residual_block_forward.3} parent=43 // pred_fallthru
          _
        %v693 = vld [vmem:[%s343] sm:$0xf]
        %v694 = vld [vmem:[%s343 + $0x4] sm:$0xf]
        %v695 = vld [vmem:[%s343 + $0x8] sm:$0xf]
        %v696 = vld [vmem:[%s343 + $0xc] sm:$0xf]
        %v697 = vld [vmem:[%s343 + $0x10] sm:$0xf]
        %v698 = vld [vmem:[%s343 + $0x14] sm:$0xf]
        %v699 = vld [vmem:[%s343 + $0x18] sm:$0xf]
        %v700 = vld [vmem:[%s343 + $0x1c] sm:$0xf]
        %v701 = vld [vmem:[#allocation11] sm:$0xf]
        %v702 = vld [vmem:[#allocation11 + $0x4] sm:$0xf]
        %v703 = vld [vmem:[#allocation11 + $0x8] sm:$0xf]
        %v704 = vld [vmem:[#allocation11 + $0xc] sm:$0xf]
        %v705 = vld [vmem:[#allocation11 + $0x10] sm:$0x3]
        %v706 = vld [vmem:[#allocation12] sm:$0x1]
        %v708 = vlaneseq
        %v709 = vshrl.u32 %v708, 7
        %v710 = vsub.s32 0, %v709
        %v711 = vrot.slane %v706, %v710
        %v721 = vunpack.c.l.b16 %v693
        %v722 = vunpack.c.l.b16 %v694
        %v723 = vunpack.c.l.b16 %v695
        %v724 = vunpack.c.l.b16 %v696
        %v725 = vunpack.c.l.b16 %v697
        %v726 = vunpack.c.l.b16 %v698
        %v727 = vunpack.c.l.b16 %v699
        %v728 = vunpack.c.l.b16 %v700
        %v729 = vpack.c.b16 %v722, %v721
        %v730 = vpack.c.b16 %v724, %v723
        %v731 = vpack.c.b16 %v726, %v725
        %v732 = vpack.c.b16 %v728, %v727
        %v738 = vunpack.c.l.b16 %v701
        %v739 = vunpack.c.l.b16 %v702
        %v740 = vunpack.c.l.b16 %v703
        %v741 = vunpack.c.l.b16 %v704
        %v742 = vunpack.c.l.b16 %v705
        %v743 = vpack.c.b16 %v739, %v738
        %v744 = vpack.c.b16 %v741, %v740
        %v745 = vpack.c.b16 %v742, %v742
        %vm748 = vcmask 293888
        %v750 = vsel %vm748, %v729, 0
        %v753 = vsel %vm748, %v730, 0
        %v756 = vsel %vm748, %v731, 0
        %v759 = vsel %vm748, %v732, 0
        %vm761 = vcmask 1041408
        %v763 = vsel %vm761, %v745, 0
        %765 = vmatprep.subr.bf16.mxu0 0
        %766 = vmatpush1.bf16.msra.mxu0 %v743
        %767 = vmatprep.subr.bf16.mxu0 0
        %768 = vmatpush1.bf16.msra.mxu0 %v744
        %769 = vmatprep.subr.bf16.mxu0 0
        %770 = vmatpush1.bf16.msra.mxu0 %v763
        %771 = vmatprep.subr.bf16.mxu0 0
        %772 = vmatpush1.bf16.msra.mxu0 0
        %773 = vmatprep.subr.bf16.mxu0 0
        %774 = vmatpush1.bf16.msra.mxu0 0
        %775 = vmatprep.subr.bf16.mxu0 0
        %776 = vmatpush1.bf16.msra.mxu0 0
        %777 = vmatprep.subr.bf16.mxu0 0
        %778 = vmatpush1.bf16.msra.mxu0 0
        %779 = vmatprep.subr.bf16.mxu0 0
        %780 = vmatpush1.bf16.msra.mxu0 0
        %781 = vmatprep.subr.bf16.mxu0 0
        %782 = vmatpush1.bf16.msra.mxu0 0
        %783 = vmatprep.subr.bf16.mxu0 0
        %784 = vmatpush1.bf16.msra.mxu0 0
        %785 = vmatprep.subr.bf16.mxu0 0
        %786 = vmatpush1.bf16.msra.mxu0 0
        %787 = vmatprep.subr.bf16.mxu0 0
        %788 = vmatpush1.bf16.msra.mxu0 0
        %789 = vmatprep.subr.bf16.mxu0 0
        %790 = vmatpush1.bf16.msra.mxu0 0
        %791 = vmatprep.subr.bf16.mxu0 0
        %792 = vmatpush1.bf16.msra.mxu0 0
        %793 = vmatprep.subr.bf16.mxu0 0
        %794 = vmatpush1.bf16.msra.mxu0 0
        %795 = vmatprep.subr.bf16.mxu0 0
        %796 = vmatpush1.bf16.msra.mxu0 0
        %797 = vmatprep.mubr.bf16.mxu0 0
        %798 = vmatmul.mubr.bf16.gmra.mrb[0].mxu0 %v750
        %v799 = vpop.f32.mrb[0].mxu0
        %v800 = vadd.f32 %v711, %v799
        %v801 = vpop.f32.mrb[0].mxu0
        %v802 = vpop.f32.mrb[0].mxu0
        %v803 = vadd.f32 %v711, %v802
        %v804 = vpop.f32.mrb[0].mxu0
        %805 = vmatprep.mubr.bf16.mxu0 0
        %806 = vmatmul.mubr.bf16.gmra.mrb[0].mxu0 %v753
        %v807 = vpop.f32.mrb[0].mxu0
        %v808 = vadd.f32 %v711, %v807
        %v809 = vpop.f32.mrb[0].mxu0
        %v810 = vpop.f32.mrb[0].mxu0
        %v811 = vadd.f32 %v711, %v810
        %v812 = vpop.f32.mrb[0].mxu0
        %813 = vmatprep.mubr.bf16.mxu0 0
        %814 = vmatmul.mubr.bf16.gmra.mrb[0].mxu0 %v756
        %v815 = vpop.f32.mrb[0].mxu0
        %v816 = vadd.f32 %v711, %v815
        %v817 = vpop.f32.mrb[0].mxu0
        %v818 = vpop.f32.mrb[0].mxu0
        %v819 = vadd.f32 %v711, %v818
        %v820 = vpop.f32.mrb[0].mxu0
        %821 = vmatprep.mubr.bf16.mxu0 0
        %822 = vmatmul.mubr.bf16.gmra.mrb[0].mxu0 %v759
        %v823 = vpop.f32.mrb[0].mxu0
        %v824 = vadd.f32 %v711, %v823
        %v825 = vpop.f32.mrb[0].mxu0
        %v826 = vpop.f32.mrb[0].mxu0
        %v827 = vadd.f32 %v711, %v826
        %v828 = vpop.f32.mrb[0].mxu0
        %829 = vdwg.mxu0
        %vm830 = vcmp.ge.f32.partialorder %v800, 0.0
        %vm831 = vcmp.ge.f32.partialorder %v803, 0.0
        %vm832 = vcmp.ge.f32.partialorder %v808, 0.0
        %vm833 = vcmp.ge.f32.partialorder %v811, 0.0
        %vm834 = vcmp.ge.f32.partialorder %v816, 0.0
        %vm835 = vcmp.ge.f32.partialorder %v819, 0.0
        %vm836 = vcmp.ge.f32.partialorder %v824, 0.0
        %vm837 = vcmp.ge.f32.partialorder %v827, 0.0
        %v838 = vmul.f32 %v800, 0.01
        %v839 = vmul.f32 %v803, 0.01
        %v840 = vmul.f32 %v808, 0.01
        %v841 = vmul.f32 %v811, 0.01
        %v842 = vmul.f32 %v816, 0.01
        %v843 = vmul.f32 %v819, 0.01
        %v844 = vmul.f32 %v824, 0.01
        %v845 = vmul.f32 %v827, 0.01
        %v846 = vsel %vm830, %v800, %v838
        %v847 = vsel %vm831, %v803, %v839
        %v848 = vsel %vm832, %v808, %v840
        %v849 = vsel %vm833, %v811, %v841
        %v850 = vsel %vm834, %v816, %v842
        %v851 = vsel %vm835, %v819, %v843
        %v852 = vsel %vm836, %v824, %v844
        %v853 = vsel %vm837, %v827, %v845
        %v854 = vpack.c.bf16 %v847, %v846
        %v855 = vpack.c.bf16 %v849, %v848
        %v856 = vpack.c.bf16 %v851, %v850
        %v857 = vpack.c.bf16 %v853, %v852
        %v858 = vld [vmem:[#allocation14] sm:$0xf]
        %v859 = vld [vmem:[#allocation14 + $0x4] sm:$0xf]
        %v860 = vld [vmem:[#allocation15] sm:$0x1]
        %v862 = vlaneseq
        %v863 = vshrl.u32 %v862, 7
        %v864 = vsub.s32 0, %v863
        %v865 = vrot.slane %v860, %v864
        %v869 = vunpack.c.l.b16 %v858
        %v870 = vunpack.c.l.b16 %v859
        %v871 = vpack.c.b16 %v870, %v869
        %vm873 = vcmask 130048
        %v875 = vsel %vm873, %v854, 0
        %v878 = vsel %vm873, %v855, 0
        %v881 = vsel %vm873, %v856, 0
        %v884 = vsel %vm873, %v857, 0
        %886 = vmatprep.subr.bf16.mxu0 0
        %887 = vmatpush1.bf16.msra.mxu0 %v871
        %888 = vmatprep.subr.bf16.mxu0 0
        %889 = vmatpush1.bf16.msra.mxu0 0
        %890 = vmatprep.subr.bf16.mxu0 0
        %891 = vmatpush1.bf16.msra.mxu0 0
        %892 = vmatprep.subr.bf16.mxu0 0
        %893 = vmatpush1.bf16.msra.mxu0 0
        %894 = vmatprep.subr.bf16.mxu0 0
        %895 = vmatpush1.bf16.msra.mxu0 0
        %896 = vmatprep.subr.bf16.mxu0 0
        %897 = vmatpush1.bf16.msra.mxu0 0
        %898 = vmatprep.subr.bf16.mxu0 0
        %899 = vmatpush1.bf16.msra.mxu0 0
        %900 = vmatprep.subr.bf16.mxu0 0
        %901 = vmatpush1.bf16.msra.mxu0 0
        %902 = vmatprep.subr.bf16.mxu0 0
        %903 = vmatpush1.bf16.msra.mxu0 0
        %904 = vmatprep.subr.bf16.mxu0 0
        %905 = vmatpush1.bf16.msra.mxu0 0
        %906 = vmatprep.subr.bf16.mxu0 0
        %907 = vmatpush1.bf16.msra.mxu0 0
        %908 = vmatprep.subr.bf16.mxu0 0
        %909 = vmatpush1.bf16.msra.mxu0 0
        %910 = vmatprep.subr.bf16.mxu0 0
        %911 = vmatpush1.bf16.msra.mxu0 0
        %912 = vmatprep.subr.bf16.mxu0 0
        %913 = vmatpush1.bf16.msra.mxu0 0
        %914 = vmatprep.subr.bf16.mxu0 0
        %915 = vmatpush1.bf16.msra.mxu0 0
        %916 = vmatprep.subr.bf16.mxu0 0
        %917 = vmatpush1.bf16.msra.mxu0 0
        %918 = vmatprep.mubr.bf16.mxu0 0
        %919 = vmatmul.mubr.bf16.gmra.mrb[0].mxu0 %v875
        %v920 = vpop.f32.mrb[0].mxu0
        %v921 = vadd.f32 %v865, %v920
        %v922 = vpop.f32.mrb[0].mxu0
        %v923 = vpop.f32.mrb[0].mxu0
        %v924 = vadd.f32 %v865, %v923
        %v925 = vpop.f32.mrb[0].mxu0
        %926 = vmatprep.mubr.bf16.mxu0 0
        %927 = vmatmul.mubr.bf16.gmra.mrb[0].mxu0 %v878
        %v928 = vpop.f32.mrb[0].mxu0
        %v929 = vadd.f32 %v865, %v928
        %v930 = vpop.f32.mrb[0].mxu0
        %v931 = vpop.f32.mrb[0].mxu0
        %v932 = vadd.f32 %v865, %v931
        %v933 = vpop.f32.mrb[0].mxu0
        %934 = vmatprep.mubr.bf16.mxu0 0
        %935 = vmatmul.mubr.bf16.gmra.mrb[0].mxu0 %v881
        %v936 = vpop.f32.mrb[0].mxu0
        %v937 = vadd.f32 %v865, %v936
        %v938 = vpop.f32.mrb[0].mxu0
        %v939 = vpop.f32.mrb[0].mxu0
        %v940 = vadd.f32 %v865, %v939
        %v941 = vpop.f32.mrb[0].mxu0
        %942 = vmatprep.mubr.bf16.mxu0 0
        %943 = vmatmul.mubr.bf16.gmra.mrb[0].mxu0 %v884
        %v944 = vpop.f32.mrb[0].mxu0
        %v945 = vadd.f32 %v865, %v944
        %v946 = vpop.f32.mrb[0].mxu0
        %v947 = vpop.f32.mrb[0].mxu0
        %v948 = vadd.f32 %v865, %v947
        %v949 = vpop.f32.mrb[0].mxu0
        %950 = vdwg.mxu0
        %v951 = vpack.c.bf16 %v924, %v921
        %v952 = vpack.c.bf16 %v932, %v929
        %v953 = vpack.c.bf16 %v940, %v937
        %v954 = vpack.c.bf16 %v948, %v945
        %v955 = vld [vmem:[#allocation2] sm:$0xff]
        %v956 = vld [vmem:[#allocation2 + $0x8] sm:$0xff]
        %v957 = vld [vmem:[#allocation2 + $0x10] sm:$0xff]
        %v958 = vld [vmem:[#allocation2 + $0x18] sm:$0xff]
        %963 = vrot.lane.b32.xlu0 %v951, 126
        %v964 = vpop.permute.xlu0 %963
        %965 = vrot.lane.b32.xlu0 %v952, 126
        %v966 = vpop.permute.xlu0 %965
        %967 = vrot.lane.b32.xlu0 %v953, 126
        %v968 = vpop.permute.xlu0 %967
        %969 = vrot.lane.b32.xlu0 %v954, 126
        %v970 = vpop.permute.xlu0 %969
        %vm971 = vcmask 15360
        %v973 = vsel %vm971, %v955, 0
        %v976 = vsel %vm971, %v956, 0
        %v979 = vsel %vm971, %v957, 0
        %v982 = vsel %vm971, %v958, 0
        %v985 = vsel %vm971, %v964, 0
        %v988 = vsel %vm971, %v966, 0
        %v991 = vsel %vm971, %v968, 0
        %v994 = vsel %vm971, %v970, 0
        %996 = vmatprep.subr.bf16.mxu0 0
        %997 = vmatpush1.bf16.xpose.msra.mxu0 %v985
        %998 = vmatprep.subr.bf16.mxu0 0
        %999 = vmatpush1.bf16.xpose.msra.mxu0 %v988
        %1000 = vmatprep.subr.bf16.mxu0 0
        %1001 = vmatpush1.bf16.xpose.msra.mxu0 %v991
        %1002 = vmatprep.subr.bf16.mxu0 0
        %1003 = vmatpush1.bf16.xpose.msra.mxu0 %v994
        %1004 = vmatprep.subr.bf16.mxu0 0
        %1005 = vmatpush1.bf16.xpose.msra.mxu0 0
        %1006 = vmatprep.subr.bf16.mxu0 0
        %1007 = vmatpush1.bf16.xpose.msra.mxu0 0
        %1008 = vmatprep.subr.bf16.mxu0 0
        %1009 = vmatpush1.bf16.xpose.msra.mxu0 0
        %1010 = vmatprep.subr.bf16.mxu0 0
        %1011 = vmatpush1.bf16.xpose.msra.mxu0 0
        %1012 = vmatprep.subr.bf16.mxu0 0
        %1013 = vmatpush1.bf16.xpose.msra.mxu0 0
        %1014 = vmatprep.subr.bf16.mxu0 0
        %1015 = vmatpush1.bf16.xpose.msra.mxu0 0
        %1016 = vmatprep.subr.bf16.mxu0 0
        %1017 = vmatpush1.bf16.xpose.msra.mxu0 0
        %1018 = vmatprep.subr.bf16.mxu0 0
        %1019 = vmatpush1.bf16.xpose.msra.mxu0 0
        %1020 = vmatprep.subr.bf16.mxu0 0
        %1021 = vmatpush1.bf16.xpose.msra.mxu0 0
        %1022 = vmatprep.subr.bf16.mxu0 0
        %1023 = vmatpush1.bf16.xpose.msra.mxu0 0
        %1024 = vmatprep.subr.bf16.mxu0 0
        %1025 = vmatpush1.bf16.xpose.msra.mxu0 0
        %1026 = vmatprep.subr.bf16.mxu0 0
        %1027 = vmatpush1.bf16.xpose.msra.mxu0 0
        %1028 = vmatprep.mubr.bf16.mxu0 0
        %1029 = vmatmul.mubr.bf16.gmra.mrb[0].mxu0 %v973
        %v1030 = vpop.f32.mrb[0].mxu0
        %v1031 = vadd.f32 0.0, %v1030
        %v1032 = vpop.f32.mrb[0].mxu0
        %v1033 = vpop.f32.mrb[0].mxu0
        %v1034 = vadd.f32 0.0, %v1033
        %v1035 = vpop.f32.mrb[0].mxu0
        %1036 = vmatprep.mubr.bf16.mxu0 0
        %1037 = vmatmul.mubr.bf16.gmra.mrb[0].mxu0 %v976
        %v1038 = vpop.f32.mrb[0].mxu0
        %v1039 = vadd.f32 0.0, %v1038
        %v1040 = vpop.f32.mrb[0].mxu0
        %v1041 = vpop.f32.mrb[0].mxu0
        %v1042 = vadd.f32 0.0, %v1041
        %v1043 = vpop.f32.mrb[0].mxu0
        %1044 = vmatprep.mubr.bf16.mxu0 0
        %1045 = vmatmul.mubr.bf16.gmra.mrb[0].mxu0 %v979
        %v1046 = vpop.f32.mrb[0].mxu0
        %v1047 = vadd.f32 0.0, %v1046
        %v1048 = vpop.f32.mrb[0].mxu0
        %v1049 = vpop.f32.mrb[0].mxu0
        %v1050 = vadd.f32 0.0, %v1049
        %v1051 = vpop.f32.mrb[0].mxu0
        %1052 = vmatprep.mubr.bf16.mxu0 0
        %1053 = vmatmul.mubr.bf16.gmra.mrb[0].mxu0 %v982
        %v1054 = vpop.f32.mrb[0].mxu0
        %v1055 = vadd.f32 0.0, %v1054
        %v1056 = vpop.f32.mrb[0].mxu0
        %v1057 = vpop.f32.mrb[0].mxu0
        %v1058 = vadd.f32 0.0, %v1057
        %v1059 = vpop.f32.mrb[0].mxu0
        %1060 = vdwg.mxu0
        %v1061 = vmul.f32 %v1031, 0.125
        %v1062 = vmul.f32 %v1034, 0.125
        %v1063 = vmul.f32 %v1039, 0.125
        %v1064 = vmul.f32 %v1042, 0.125
        %v1065 = vmul.f32 %v1047, 0.125
        %v1066 = vmul.f32 %v1050, 0.125
        %v1067 = vmul.f32 %v1055, 0.125
        %v1068 = vmul.f32 %v1058, 0.125
        %v1069 = vld [vmem:[#allocation3] sm:$0xff]
        %v1070 = vld [vmem:[#allocation3 + $0x8] sm:$0xff]
        %v1071 = vld [vmem:[#allocation3 + $0x10] sm:$0xff]
        %v1072 = vld [vmem:[#allocation3 + $0x18] sm:$0xff]
        %v1073 = vld [vmem:[#allocation3 + $0x20] sm:$0xff]
        %v1074 = vld [vmem:[#allocation3 + $0x28] sm:$0xff]
        %v1075 = vld [vmem:[#allocation3 + $0x30] sm:$0xff]
        %v1076 = vld [vmem:[#allocation3 + $0x38] sm:$0xff]
        %vm1077 = vcmask 523264
        %v1078 = vsel %vm1077, %v1061, -inf
        %1079 = vmax.xlane.f32.xlu0 %v1078
        %v1080 = vpop.xlane.xlu0 %1079
        %v1081 = vsel %vm1077, %v1062, -inf
        %1082 = vmax.xlane.f32.xlu0 %v1081
        %v1083 = vpop.xlane.xlu0 %1082
        %v1084 = vsel %vm1077, %v1063, -inf
        %1085 = vmax.xlane.f32.xlu0 %v1084
        %v1086 = vpop.xlane.xlu0 %1085
        %v1087 = vsel %vm1077, %v1064, -inf
        %1088 = vmax.xlane.f32.xlu0 %v1087
        %v1089 = vpop.xlane.xlu0 %1088
        %v1090 = vsel %vm1077, %v1065, -inf
        %1091 = vmax.xlane.f32.xlu0 %v1090
        %v1092 = vpop.xlane.xlu0 %1091
        %v1093 = vsel %vm1077, %v1066, -inf
        %1094 = vmax.xlane.f32.xlu0 %v1093
        %v1095 = vpop.xlane.xlu0 %1094
        %v1096 = vsel %vm1077, %v1067, -inf
        %1097 = vmax.xlane.f32.xlu0 %v1096
        %v1098 = vpop.xlane.xlu0 %1097
        %v1099 = vsel %vm1077, %v1068, -inf
        %1100 = vmax.xlane.f32.xlu0 %v1099
        %v1101 = vpop.xlane.xlu0 %1100
        %v1102 = vmax.f32 %v1069, %v1080
        %v1103 = vmax.f32 %v1070, %v1083
        %v1104 = vmax.f32 %v1071, %v1086
        %v1105 = vmax.f32 %v1072, %v1089
        %v1106 = vmax.f32 %v1073, %v1092
        %v1107 = vmax.f32 %v1074, %v1095
        %v1108 = vmax.f32 %v1075, %v1098
        %v1109 = vmax.f32 %v1076, %v1101
        %v1110 = vsub.f32 %v1069, %v1102
        %v1111 = vsub.f32 %v1070, %v1103
        %v1112 = vsub.f32 %v1071, %v1104
        %v1113 = vsub.f32 %v1072, %v1105
        %v1114 = vsub.f32 %v1073, %v1106
        %v1115 = vsub.f32 %v1074, %v1107
        %v1116 = vsub.f32 %v1075, %v1108
        %v1117 = vsub.f32 %v1076, %v1109
        %v1118 = vmul.f32 %v1110, 1.442695
        %v1119 = vpow.pop %v1118
        %v1120 = vmul.f32 %v1111, 1.442695
        %v1121 = vpow.pop %v1120
        %v1122 = vmul.f32 %v1112, 1.442695
        %v1123 = vpow.pop %v1122
        %v1124 = vmul.f32 %v1113, 1.442695
        %v1125 = vpow.pop %v1124
        %v1126 = vmul.f32 %v1114, 1.442695
        %v1127 = vpow.pop %v1126
        %v1128 = vmul.f32 %v1115, 1.442695
        %v1129 = vpow.pop %v1128
        %v1130 = vmul.f32 %v1116, 1.442695
        %v1131 = vpow.pop %v1130
        %v1132 = vmul.f32 %v1117, 1.442695
        %v1133 = vpow.pop %v1132
        %1135 = vset.pattern.permute.xlu0 0
        %1136 = vperm.xlu0 %1135, %v1102
        %v1137 = vpop.permute.xlu0 %1136
        %1140 = vset.pattern.permute.xlu0 0
        %1141 = vperm.xlu0 %1140, %v1103
        %v1142 = vpop.permute.xlu0 %1141
        %1145 = vset.pattern.permute.xlu0 0
        %1146 = vperm.xlu0 %1145, %v1104
        %v1147 = vpop.permute.xlu0 %1146
        %1150 = vset.pattern.permute.xlu0 0
        %1151 = vperm.xlu0 %1150, %v1105
        %v1152 = vpop.permute.xlu0 %1151
        %1155 = vset.pattern.permute.xlu0 0
        %1156 = vperm.xlu0 %1155, %v1106
        %v1157 = vpop.permute.xlu0 %1156
        %1160 = vset.pattern.permute.xlu0 0
        %1161 = vperm.xlu0 %1160, %v1107
        %v1162 = vpop.permute.xlu0 %1161
        %1165 = vset.pattern.permute.xlu0 0
        %1166 = vperm.xlu0 %1165, %v1108
        %v1167 = vpop.permute.xlu0 %1166
        %1170 = vset.pattern.permute.xlu0 0
        %1171 = vperm.xlu0 %1170, %v1109
        %v1172 = vpop.permute.xlu0 %1171
        %v1174 = vsub.f32 %v1061, %v1137
        %v1175 = vsub.f32 %v1062, %v1142
        %v1176 = vsub.f32 %v1063, %v1147
        %v1177 = vsub.f32 %v1064, %v1152
        %v1178 = vsub.f32 %v1065, %v1157
        %v1179 = vsub.f32 %v1066, %v1162
        %v1180 = vsub.f32 %v1067, %v1167
        %v1181 = vsub.f32 %v1068, %v1172
        %v1182 = vmul.f32 %v1174, 1.442695
        %v1183 = vpow.pop %v1182
        %v1184 = vmul.f32 %v1175, 1.442695
        %v1185 = vpow.pop %v1184
        %v1186 = vmul.f32 %v1176, 1.442695
        %v1187 = vpow.pop %v1186
        %v1188 = vmul.f32 %v1177, 1.442695
        %v1189 = vpow.pop %v1188
        %v1190 = vmul.f32 %v1178, 1.442695
        %v1191 = vpow.pop %v1190
        %v1192 = vmul.f32 %v1179, 1.442695
        %v1193 = vpow.pop %v1192
        %v1194 = vmul.f32 %v1180, 1.442695
        %v1195 = vpow.pop %v1194
        %v1196 = vmul.f32 %v1181, 1.442695
        %v1197 = vpow.pop %v1196
        %v1198 = vld [vmem:[#allocation4] sm:$0xff]
        %v1199 = vld [vmem:[#allocation4 + $0x8] sm:$0xff]
        %v1200 = vld [vmem:[#allocation4 + $0x10] sm:$0xff]
        %v1201 = vld [vmem:[#allocation4 + $0x18] sm:$0xff]
        %v1202 = vld [vmem:[#allocation4 + $0x20] sm:$0xff]
        %v1203 = vld [vmem:[#allocation4 + $0x28] sm:$0xff]
        %v1204 = vld [vmem:[#allocation4 + $0x30] sm:$0xff]
        %v1205 = vld [vmem:[#allocation4 + $0x38] sm:$0xff]
        %v1206 = vmul.f32 %v1119, %v1198
        %v1207 = vmul.f32 %v1121, %v1199
        %v1208 = vmul.f32 %v1123, %v1200
        %v1209 = vmul.f32 %v1125, %v1201
        %v1210 = vmul.f32 %v1127, %v1202
        %v1211 = vmul.f32 %v1129, %v1203
        %v1212 = vmul.f32 %v1131, %v1204
        %v1213 = vmul.f32 %v1133, %v1205
        %v1214 = vsel %vm1077, %v1183, 0.0
        %1215 = vadd.xlane.f32.xlu0 %v1214
        %v1216 = vpop.xlane.xlu0 %1215
        %v1217 = vsel %vm1077, %v1185, 0.0
        %1218 = vadd.xlane.f32.xlu0 %v1217
        %v1219 = vpop.xlane.xlu0 %1218
        %v1220 = vsel %vm1077, %v1187, 0.0
        %1221 = vadd.xlane.f32.xlu0 %v1220
        %v1222 = vpop.xlane.xlu0 %1221
        %v1223 = vsel %vm1077, %v1189, 0.0
        %1224 = vadd.xlane.f32.xlu0 %v1223
        %v1225 = vpop.xlane.xlu0 %1224
        %v1226 = vsel %vm1077, %v1191, 0.0
        %1227 = vadd.xlane.f32.xlu0 %v1226
        %v1228 = vpop.xlane.xlu0 %1227
        %v1229 = vsel %vm1077, %v1193, 0.0
        %1230 = vadd.xlane.f32.xlu0 %v1229
        %v1231 = vpop.xlane.xlu0 %1230
        %v1232 = vsel %vm1077, %v1195, 0.0
        %1233 = vadd.xlane.f32.xlu0 %v1232
        %v1234 = vpop.xlane.xlu0 %1233
        %v1235 = vsel %vm1077, %v1197, 0.0
        %1236 = vadd.xlane.f32.xlu0 %v1235
        %v1237 = vpop.xlane.xlu0 %1236
        %v1238 = vadd.f32 %v1206, %v1216
        %v1239 = vadd.f32 %v1207, %v1219
        %v1240 = vadd.f32 %v1208, %v1222
        %v1241 = vadd.f32 %v1209, %v1225
        %v1242 = vadd.f32 %v1210, %v1228
        %v1243 = vadd.f32 %v1211, %v1231
        %v1244 = vadd.f32 %v1212, %v1234
        %v1245 = vadd.f32 %v1213, %v1237
        %vm1246 = vcmask 7168
        %1247 = vst.msk [vmem:[#allocation4] sm:$0xff] %vm1246, %v1238
        %1248 = vst.msk [vmem:[#allocation4 + $0x8] sm:$0xff] %vm1246, %v1239
        %1249 = vst.msk [vmem:[#allocation4 + $0x10] sm:$0xff] %vm1246, %v1240
        %1250 = vst.msk [vmem:[#allocation4 + $0x18] sm:$0xff] %vm1246, %v1241
        %1251 = vst.msk [vmem:[#allocation4 + $0x20] sm:$0xff] %vm1246, %v1242
        %1252 = vst.msk [vmem:[#allocation4 + $0x28] sm:$0xff] %vm1246, %v1243
        %1253 = vst.msk [vmem:[#allocation4 + $0x30] sm:$0xff] %vm1246, %v1244
        %1254 = vst.msk [vmem:[#allocation4 + $0x38] sm:$0xff] %vm1246, %v1245
        %v1255 = vld [vmem:[#allocation5] sm:$0xff]
        %v1256 = vld [vmem:[#allocation5 + $0x8] sm:$0xff]
        %v1257 = vld [vmem:[#allocation5 + $0x10] sm:$0xff]
        %v1258 = vld [vmem:[#allocation5 + $0x18] sm:$0xff]
        %v1259 = vld [vmem:[#allocation5 + $0x20] sm:$0xff]
        %v1260 = vld [vmem:[#allocation5 + $0x28] sm:$0xff]
        %v1261 = vld [vmem:[#allocation5 + $0x30] sm:$0xff]
        %v1262 = vld [vmem:[#allocation5 + $0x38] sm:$0xff]
        %1264 = vset.pattern.permute.xlu0 0
        %1265 = vperm.xlu0 %1264, %v1119
        %v1266 = vpop.permute.xlu0 %1265
        %1269 = vset.pattern.permute.xlu0 0
        %1270 = vperm.xlu0 %1269, %v1121
        %v1271 = vpop.permute.xlu0 %1270
        %1274 = vset.pattern.permute.xlu0 0
        %1275 = vperm.xlu0 %1274, %v1123
        %v1276 = vpop.permute.xlu0 %1275
        %1279 = vset.pattern.permute.xlu0 0
        %1280 = vperm.xlu0 %1279, %v1125
        %v1281 = vpop.permute.xlu0 %1280
        %1284 = vset.pattern.permute.xlu0 0
        %1285 = vperm.xlu0 %1284, %v1127
        %v1286 = vpop.permute.xlu0 %1285
        %1289 = vset.pattern.permute.xlu0 0
        %1290 = vperm.xlu0 %1289, %v1129
        %v1291 = vpop.permute.xlu0 %1290
        %1294 = vset.pattern.permute.xlu0 0
        %1295 = vperm.xlu0 %1294, %v1131
        %v1296 = vpop.permute.xlu0 %1295
        %1299 = vset.pattern.permute.xlu0 0
        %1300 = vperm.xlu0 %1299, %v1133
        %v1301 = vpop.permute.xlu0 %1300
        %v1303 = vmul.f32 %v1266, %v1255
        %v1304 = vmul.f32 %v1271, %v1256
        %v1305 = vmul.f32 %v1276, %v1257
        %v1306 = vmul.f32 %v1281, %v1258
        %v1307 = vmul.f32 %v1286, %v1259
        %v1308 = vmul.f32 %v1291, %v1260
        %v1309 = vmul.f32 %v1296, %v1261
        %v1310 = vmul.f32 %v1301, %v1262
        %v1311 = vpack.c.bf16 %v1185, %v1183
        %v1312 = vpack.c.bf16 %v1189, %v1187
        %v1313 = vpack.c.bf16 %v1193, %v1191
        %v1314 = vpack.c.bf16 %v1197, %v1195
        %1315 = vrot.lane.b32.xlu0 %v951, 124
        %v1316 = vpop.permute.xlu0 %1315
        %1317 = vrot.lane.b32.xlu0 %v952, 124
        %v1318 = vpop.permute.xlu0 %1317
        %1319 = vrot.lane.b32.xlu0 %v953, 124
        %v1320 = vpop.permute.xlu0 %1319
        %1321 = vrot.lane.b32.xlu0 %v954, 124
        %v1322 = vpop.permute.xlu0 %1321
        %v1328 = vsel %vm1077, %v1311, 0
        %v1331 = vsel %vm1077, %v1312, 0
        %v1334 = vsel %vm1077, %v1313, 0
        %v1337 = vsel %vm1077, %v1314, 0
        %1339 = vmatprep.subr.bf16.mxu0 0
        %1340 = vmatpush1.bf16.msra.mxu0 %v1316
        %1341 = vmatprep.subr.bf16.mxu0 0
        %1342 = vmatpush1.bf16.msra.mxu0 %v1318
        %1343 = vmatprep.subr.bf16.mxu0 0
        %1344 = vmatpush1.bf16.msra.mxu0 %v1320
        %1345 = vmatprep.subr.bf16.mxu0 0
        %1346 = vmatpush1.bf16.msra.mxu0 %v1322
        %1347 = vmatprep.subr.bf16.mxu0 0
        %1348 = vmatpush1.bf16.msra.mxu0 0
        %1349 = vmatprep.subr.bf16.mxu0 0
        %1350 = vmatpush1.bf16.msra.mxu0 0
        %1351 = vmatprep.subr.bf16.mxu0 0
        %1352 = vmatpush1.bf16.msra.mxu0 0
        %1353 = vmatprep.subr.bf16.mxu0 0
        %1354 = vmatpush1.bf16.msra.mxu0 0
        %1355 = vmatprep.subr.bf16.mxu0 0
        %1356 = vmatpush1.bf16.msra.mxu0 0
        %1357 = vmatprep.subr.bf16.mxu0 0
        %1358 = vmatpush1.bf16.msra.mxu0 0
        %1359 = vmatprep.subr.bf16.mxu0 0
        %1360 = vmatpush1.bf16.msra.mxu0 0
        %1361 = vmatprep.subr.bf16.mxu0 0
        %1362 = vmatpush1.bf16.msra.mxu0 0
        %1363 = vmatprep.subr.bf16.mxu0 0
        %1364 = vmatpush1.bf16.msra.mxu0 0
        %1365 = vmatprep.subr.bf16.mxu0 0
        %1366 = vmatpush1.bf16.msra.mxu0 0
        %1367 = vmatprep.subr.bf16.mxu0 0
        %1368 = vmatpush1.bf16.msra.mxu0 0
        %1369 = vmatprep.subr.bf16.mxu0 0
        %1370 = vmatpush1.bf16.msra.mxu0 0
        %1371 = vmatprep.mubr.bf16.mxu0 0
        %1372 = vmatmul.mubr.bf16.gmra.mrb[0].mxu0 %v1328
        %v1373 = vpop.f32.mrb[0].mxu0
        %v1374 = vadd.f32 0.0, %v1373
        %v1375 = vpop.f32.mrb[0].mxu0
        %v1376 = vpop.f32.mrb[0].mxu0
        %v1377 = vadd.f32 0.0, %v1376
        %v1378 = vpop.f32.mrb[0].mxu0
        %1379 = vmatprep.mubr.bf16.mxu0 0
        %1380 = vmatmul.mubr.bf16.gmra.mrb[0].mxu0 %v1331
        %v1381 = vpop.f32.mrb[0].mxu0
        %v1382 = vadd.f32 0.0, %v1381
        %v1383 = vpop.f32.mrb[0].mxu0
        %v1384 = vpop.f32.mrb[0].mxu0
        %v1385 = vadd.f32 0.0, %v1384
        %v1386 = vpop.f32.mrb[0].mxu0
        %1387 = vmatprep.mubr.bf16.mxu0 0
        %1388 = vmatmul.mubr.bf16.gmra.mrb[0].mxu0 %v1334
        %v1389 = vpop.f32.mrb[0].mxu0
        %v1390 = vadd.f32 0.0, %v1389
        %v1391 = vpop.f32.mrb[0].mxu0
        %v1392 = vpop.f32.mrb[0].mxu0
        %v1393 = vadd.f32 0.0, %v1392
        %v1394 = vpop.f32.mrb[0].mxu0
        %1395 = vmatprep.mubr.bf16.mxu0 0
        %1396 = vmatmul.mubr.bf16.gmra.mrb[0].mxu0 %v1337
        %v1397 = vpop.f32.mrb[0].mxu0
        %v1398 = vadd.f32 0.0, %v1397
        %v1399 = vpop.f32.mrb[0].mxu0
        %v1400 = vpop.f32.mrb[0].mxu0
        %v1401 = vadd.f32 0.0, %v1400
        %v1402 = vpop.f32.mrb[0].mxu0
        %1403 = vdwg.mxu0
        %v1404 = vadd.f32 %v1303, %v1374
        %v1405 = vadd.f32 %v1304, %v1377
        %v1406 = vadd.f32 %v1305, %v1382
        %v1407 = vadd.f32 %v1306, %v1385
        %v1408 = vadd.f32 %v1307, %v1390
        %v1409 = vadd.f32 %v1308, %v1393
        %v1410 = vadd.f32 %v1309, %v1398
        %v1411 = vadd.f32 %v1310, %v1401
        %1412 = vst.msk [vmem:[#allocation5] sm:$0xff] %vm873, %v1404
        %1413 = vst.msk [vmem:[#allocation5 + $0x8] sm:$0xff] %vm873, %v1405
        %1414 = vst.msk [vmem:[#allocation5 + $0x10] sm:$0xff] %vm873, %v1406
        %1415 = vst.msk [vmem:[#allocation5 + $0x18] sm:$0xff] %vm873, %v1407
        %1416 = vst.msk [vmem:[#allocation5 + $0x20] sm:$0xff] %vm873, %v1408
        %1417 = vst.msk [vmem:[#allocation5 + $0x28] sm:$0xff] %vm873, %v1409
        %1418 = vst.msk [vmem:[#allocation5 + $0x30] sm:$0xff] %vm873, %v1410
        %1419 = vst.msk [vmem:[#allocation5 + $0x38] sm:$0xff] %vm873, %v1411
        %1420 = vst.msk [vmem:[#allocation3] sm:$0xff] %vm1246, %v1102
        %1421 = vst.msk [vmem:[#allocation3 + $0x8] sm:$0xff] %vm1246, %v1103
        %1422 = vst.msk [vmem:[#allocation3 + $0x10] sm:$0xff] %vm1246, %v1104
        %1423 = vst.msk [vmem:[#allocation3 + $0x18] sm:$0xff] %vm1246, %v1105
        %1424 = vst.msk [vmem:[#allocation3 + $0x20] sm:$0xff] %vm1246, %v1106
        %1425 = vst.msk [vmem:[#allocation3 + $0x28] sm:$0xff] %vm1246, %v1107
        %1426 = vst.msk [vmem:[#allocation3 + $0x30] sm:$0xff] %vm1246, %v1108
        %1427 = vst.msk [vmem:[#allocation3 + $0x38] sm:$0xff] %vm1246, %v1109
        // Predicated region
        $region73: #{residual_block_forward.3} parent=43 // pred_check
          %p1428 = pneg %p397
        $region74: #{residual_block_forward.3} parent=43 // pred_check_branch
          %1430 = sbr.rel (%p1428) target = $region76
        $region75: #{residual_block_forward.3} parent=43 // pred_region
          %v1431 = vld [vmem:[#allocation5] sm:$0xff]
          %v1432 = vld [vmem:[#allocation5 + $0x8] sm:$0xff]
          %v1433 = vld [vmem:[#allocation5 + $0x10] sm:$0xff]
          %v1434 = vld [vmem:[#allocation5 + $0x18] sm:$0xff]
          %v1435 = vld [vmem:[#allocation5 + $0x20] sm:$0xff]
          %v1436 = vld [vmem:[#allocation5 + $0x28] sm:$0xff]
          %v1437 = vld [vmem:[#allocation5 + $0x30] sm:$0xff]
          %v1438 = vld [vmem:[#allocation5 + $0x38] sm:$0xff]
          %v1439 = vld [vmem:[#allocation4] sm:$0xff]
          %v1440 = vld [vmem:[#allocation4 + $0x8] sm:$0xff]
          %v1441 = vld [vmem:[#allocation4 + $0x10] sm:$0xff]
          %v1442 = vld [vmem:[#allocation4 + $0x18] sm:$0xff]
          %v1443 = vld [vmem:[#allocation4 + $0x20] sm:$0xff]
          %v1444 = vld [vmem:[#allocation4 + $0x28] sm:$0xff]
          %v1445 = vld [vmem:[#allocation4 + $0x30] sm:$0xff]
          %v1446 = vld [vmem:[#allocation4 + $0x38] sm:$0xff]
          %v1447 = vrcp.pop %v1439
          %v1448 = vrcp.pop %v1440
          %v1449 = vrcp.pop %v1441
          %v1450 = vrcp.pop %v1442
          %v1451 = vrcp.pop %v1443
          %v1452 = vrcp.pop %v1444
          %v1453 = vrcp.pop %v1445
          %v1454 = vrcp.pop %v1446
          %1456 = vset.pattern.permute.xlu0 0
          %1457 = vperm.xlu0 %1456, %v1447
          %v1458 = vpop.permute.xlu0 %1457
          %1461 = vset.pattern.permute.xlu0 0
          %1462 = vperm.xlu0 %1461, %v1448
          %v1463 = vpop.permute.xlu0 %1462
          %1466 = vset.pattern.permute.xlu0 0
          %1467 = vperm.xlu0 %1466, %v1449
          %v1468 = vpop.permute.xlu0 %1467
          %1471 = vset.pattern.permute.xlu0 0
          %1472 = vperm.xlu0 %1471, %v1450
          %v1473 = vpop.permute.xlu0 %1472
          %1476 = vset.pattern.permute.xlu0 0
          %1477 = vperm.xlu0 %1476, %v1451
          %v1478 = vpop.permute.xlu0 %1477
          %1481 = vset.pattern.permute.xlu0 0
          %1482 = vperm.xlu0 %1481, %v1452
          %v1483 = vpop.permute.xlu0 %1482
          %1486 = vset.pattern.permute.xlu0 0
          %1487 = vperm.xlu0 %1486, %v1453
          %v1488 = vpop.permute.xlu0 %1487
          %1491 = vset.pattern.permute.xlu0 0
          %1492 = vperm.xlu0 %1491, %v1454
          %v1493 = vpop.permute.xlu0 %1492
          %v1495 = vmul.f32 %v1431, %v1458
          %v1496 = vmul.f32 %v1432, %v1463
          %v1497 = vmul.f32 %v1433, %v1468
          %v1498 = vmul.f32 %v1434, %v1473
          %v1499 = vmul.f32 %v1435, %v1478
          %v1500 = vmul.f32 %v1436, %v1483
          %v1501 = vmul.f32 %v1437, %v1488
          %v1502 = vmul.f32 %v1438, %v1493
          %v1503 = vpack.c.bf16 %v1496, %v1495
          %v1504 = vpack.c.bf16 %v1498, %v1497
          %v1505 = vpack.c.bf16 %v1500, %v1499
          %v1506 = vpack.c.bf16 %v1502, %v1501
          %v1511 = vunpack.c.l.b16 %v1503
          %v1512 = vunpack.c.h.b16 %v1503
          %v1513 = vunpack.c.l.b16 %v1504
          %v1514 = vunpack.c.h.b16 %v1504
          %v1515 = vunpack.c.l.b16 %v1505
          %v1516 = vunpack.c.h.b16 %v1505
          %v1517 = vunpack.c.l.b16 %v1506
          %v1518 = vunpack.c.h.b16 %v1506
          %v1519 = vpack.c.b16 %v1511, %v1511
          %v1520 = vpack.c.b16 %v1512, %v1512
          %v1521 = vpack.c.b16 %v1513, %v1513
          %v1522 = vpack.c.b16 %v1514, %v1514
          %v1523 = vpack.c.b16 %v1515, %v1515
          %v1524 = vpack.c.b16 %v1516, %v1516
          %v1525 = vpack.c.b16 %v1517, %v1517
          %v1526 = vpack.c.b16 %v1518, %v1518
          %vm1535 = vcmask 125952
          %1536 = vst.msk [vmem:[%s392] sm:$0xf] %vm1535, %v1519
          %1537 = vst.msk [vmem:[%s392 + $0x4] sm:$0xf] %vm1535, %v1520
          %1538 = vst.msk [vmem:[%s392 + $0x8] sm:$0xf] %vm1535, %v1521
          %1539 = vst.msk [vmem:[%s392 + $0xc] sm:$0xf] %vm1535, %v1522
          %1540 = vst.msk [vmem:[%s392 + $0x10] sm:$0xf] %vm1535, %v1523
          %1541 = vst.msk [vmem:[%s392 + $0x14] sm:$0xf] %vm1535, %v1524
          %1542 = vst.msk [vmem:[%s392 + $0x18] sm:$0xf] %vm1535, %v1525
          %1543 = vst.msk [vmem:[%s392 + $0x1c] sm:$0xf] %vm1535, %v1526
        $region76: #{residual_block_forward.3} parent=43 // pred_fallthru
          _
        %s1544 = sand.u32 %s197, 1
        %s1545 = scalar_lea.sflag [#allocation8], %s1544
        %s1546 = sand.u32 %s197, 1
        %s1547 = smul.addr %s1546, 32
        %s1548 = scalar_lea.vmem [#allocation17], %s1547
        // Predicated region
        $region77: #{residual_block_forward.3} parent=43 // pred_check
          %p1549 = pneg %p207
        $region78: #{residual_block_forward.3} parent=43 // pred_check_branch
          %1551 = sbr.rel (%p1549) target = $region80
        $region79: #{residual_block_forward.3} parent=43 // pred_region
          %s1552 = smul.u32 8, %s34
          %s1554 = ssub.s32 512, 512
          %1555 = vsyncadd %s1545, %s1554
          %s1556 = smul.addr %s33, 8
          %s1557 = sadd.s32 %s1552, %s1556
          %s1558 = smul.addr %s1557, 64
          %s1559 = scalar_lea.hbm %s6, %s1558
          %s1560 = sshll.u32 %s1548, 4
          %s1561 = int_to_ptr.vmem [resolvable:$true] %s1560
          %1566 = dma.vmem_to_hbm [thread:$0]  %s1561, 512, %s1559, %s1545, 64, 64, 4
        $region80: #{residual_block_forward.3} parent=43 // pred_fallthru
          _
      $region44: #{residual_block_forward.3} parent=5 // pred_fallthru
        _
      %p1567 = scmp.le.s32.totalorder 2, %s23
      // Predicated region
      $region81: #{residual_block_forward.3} parent=5 // pred_check
        %p1568 = pneg %p1567
      $region82: #{residual_block_forward.3} parent=5 // pred_check_branch
        %1570 = sbr.rel (%p1568) target = $region84
      $region83: #{residual_block_forward.3} parent=5 // pred_region
        %s1571 = ssub.s32 %s23, 2
        // Predicated region
        $region85: #{residual_block_forward.3} parent=83 // pred_check
          %p1572 = pneg %p213
        $region86: #{residual_block_forward.3} parent=83 // pred_check_branch
          %1574 = sbr.rel (%p1572) target = $region88
        $region87: #{residual_block_forward.3} parent=83 // pred_region
          %s1575 = sand.u32 %s198, 1
          %s1576 = scalar_lea.sflag [#allocation8], %s1575
          %s1577 = sand.u32 %s198, 1
          %s1578 = smul.addr %s1577, 32
          %s1579 = scalar_lea.vmem [#allocation17], %s1578
          %1580 = dma.done %s1576, 512
        $region88: #{residual_block_forward.3} parent=83 // pred_fallthru
          _
      $region84: #{residual_block_forward.3} parent=5 // pred_fallthru
        _
    $region6: #{residual_block_forward.3} parent=1 // loop_footer
      %s27 = sadd.s32 1, %s23
    $region7: #{residual_block_forward.3} parent=1 // loop_footer_branch
      %22 = sbr.rel target = $region3
    $region8: #{residual_block_forward.3} parent=1 // loop_exit
      _
    %1581 = vsyncpa [#allocation7], 1
    %s1582 = scalar_lea.sflag [#allocation7], 1
    %1583 = vsyncpa %s1582, 1
    %1584 = vsyncpa [#allocation10], 1
    %s1585 = scalar_lea.sflag [#allocation10], 1
    %1586 = vsyncpa %s1585, 1
    %1587 = vsyncpa [#allocation13], 1
    %1588 = vsyncpa [#allocation16], 1
    %1589 = vsyncpa [#allocation8], 1
    %s1590 = scalar_lea.sflag [#allocation8], 1
    %1591 = vsyncpa %s1590, 1

// kernel: residual_block_forward.5
$region0: #{residual_block_forward.5}
  #allocation0 [shape = 'u32[]', space=smem, size = 0x4, offset = 0x4, fixed_abs, tag = 'smem constant byte address 0x4 - core index']
  #allocation1 [shape = 'u32[144,128]{1,0:T(1,128)}', space=vmem, size = 0x12000, scoped, tag = 'internal scratch']
  %s0 = inlined_call_operand.hbm [shape: bf16[2,16,8,8], index: 0, kind: input, shape index: {}]
  %s1 = inlined_call_operand.hbm [shape: f32[2,16,16,16], index: 1, kind: input, shape index: {}]
  %s2 = inlined_call_operand.hbm [shape: bf16[16,8], index: 2, kind: input, shape index: {}]
  %s3 = inlined_call_operand.hbm [shape: bf16[8,16], index: 3, kind: input, shape index: {}]
  %s4 = inlined_call_operand.hbm [shape: f32[2,16,16,16], index: 4, kind: output, shape index: {}]
  %s5 = sld [smem:[#allocation0]]
  $region65: #{residual_block_forward.5} parent=0
    _
  %s7 = ssub.s32 1, %s5
  %s8 = scalar_select 0, %s7, %s5
  $region1: #{residual_block_forward.5} parent=0
    #allocation2 [shape = 'u8[32768]{0}', space=vmem, size = 0x8000, scoped, tag = 'input window, operand 0']
    #allocation3 [shape = 's32[2]{0}', space=sflag, size = 0x8, scoped, tag = 'scoped memory for residual_block_forward.5']
    #allocation4 [shape = 's32[2]{0}', space=sflag, size = 0x8, scoped, tag = 'scoped memory for residual_block_forward.5']
    #allocation5 [shape = 'u8[131072]{0}', space=vmem, size = 0x20000, scoped, tag = 'input window, operand 1']
    #allocation6 [shape = 's32[2]{0}', space=sflag, size = 0x8, scoped, tag = 'scoped memory for residual_block_forward.5']
    #allocation7 [shape = 'u8[4096]{0}', space=vmem, size = 0x1000, scoped, tag = 'input window, operand 2, single buffered']
    #allocation8 [shape = 'u8[2048]{0}', space=vmem, size = 0x800, scoped, tag = 'input window, operand 3, single buffered']
    #allocation9 [shape = 's32[1]{0}', space=sflag, size = 0x4, scoped, tag = 'scoped memory for residual_block_forward.5']
    #allocation10 [shape = 'u8[131072]{0}', space=vmem, size = 0x20000, scoped, tag = 'output window, operand 0']
    %9 = vsyncpa [#allocation3], 0
    %s10 = scalar_lea.sflag [#allocation3], 1
    %11 = vsyncpa %s10, 0
    %12 = vsyncpa [#allocation6], 0
    %s13 = scalar_lea.sflag [#allocation6], 1
    %14 = vsyncpa %s13, 0
    %15 = vsyncpa [#allocation9], 0
    %16 = vsyncpa [#allocation4], 0
    %s17 = scalar_lea.sflag [#allocation4], 1
    %18 = vsyncpa %s17, 0
    loop: start=0, step=1, limit=6
    $region2: #{residual_block_forward.5} parent=1 // loop_pre_header
      _
    $region3: #{residual_block_forward.5} parent=1 // loop_header
      %s20 = sphi 0, %s24
      %p21 = scmp.ge.s32.totalorder %s20, 6
      %s27 = sphi 0, %s39
      %s28 = sphi 0, %s35
      %s29 = sphi 0, %s27
      %s30 = sphi 0, %s28
      %s31 = sphi 0, %s29
      %s32 = sphi 0, %s30
      %s44 = sphi 0, %s46
      %s47 = sphi 0, %s44
      %s48 = sphi 0, %s47
      %s64 = sphi 0, %s48
      %s72 = sphi 0, %s74
      %s75 = sphi 0, %s72
      %s76 = sphi 0, %s75
      %s92 = sphi 0, %s76
      %s96 = sphi 0, %s96
      %s98 = sphi 0, %s96
      %s99 = sphi 0, %s98
      %s113 = sphi 0, %s99
      %s117 = sphi 0, %s117
      %s119 = sphi 0, %s117
      %s120 = sphi 0, %s119
      %s134 = sphi 0, %s120
      %s142 = sphi 0, %s144
      %s145 = sphi 0, %s142
      %s146 = sphi 0, %s145
      %s162 = sphi 0, %s146
    $region4: #{residual_block_forward.5} parent=1 // loop_header_branch
      %23 = sbr.rel (%p21) target = $region8
    $region5: #{residual_block_forward.5} parent=1 // loop_body
      %s25 = ssub.s32 %s20, 1
      %s26 = ssub.s32 %s20, 2
      %s33 = sadd.s32 1, %s28
      %p34 = scmp.ge.s32.totalorder %s33, 2
      %s35 = scalar_select %p34, 0, %s33
      %s36 = sadd.s32 1, %s27
      %s37 = scalar_select %p34, %s36, %s27
      %p38 = scmp.ge.s32.totalorder %s37, 2
      %s39 = scalar_select %p38, 0, %s37
      %s40 = ssub.s32 %s27, %s39
      %s41 = ssub.s32 %s28, %s35
      %s42 = sor.u32 %s40, %s41
      %p43 = scmp.eq.s32.totalorder %s42, 0
      %s45 = sadd.s32 %s44, 1
      %s46 = scalar_select %p43, %s44, %s45
      %p49 = pneg %p43
      %p50 = scmp.eq.s32.totalorder %s20, 3
      %p51 = por %p49, %p50
      %p52 = scmp.ne.s32.totalorder %s44, %s47
      %p53 = scmp.eq.s32.totalorder %s20, 0
      %p54 = por %p52, %p53
      %p55 = scmp.ne.s32.totalorder %s44, %s47
      %p56 = scmp.eq.s32.totalorder %s25, 3
      %p57 = por %p55, %p56
      %p58 = scmp.ne.s32.totalorder %s47, %s48
      %p59 = scmp.eq.s32.totalorder %s25, 0
      %p60 = por %p58, %p59
      %p61 = scmp.ne.s32.totalorder %s47, %s48
      %p62 = scmp.eq.s32.totalorder %s26, 3
      %p63 = por %p61, %p62
      %p65 = scmp.ne.s32.totalorder %s48, %s64
      %p66 = scmp.eq.s32.totalorder %s26, 0
      %p67 = por %p65, %p66
      %s68 = ssub.s32 %s27, %s39
      %s69 = ssub.s32 %s28, %s35
      %s70 = sor.u32 %s68, %s69
      %p71 = scmp.eq.s32.totalorder %s70, 0
      %s73 = sadd.s32 %s72, 1
      %s74 = scalar_select %p71, %s72, %s73
      %p77 = pneg %p71
      %p78 = scmp.eq.s32.totalorder %s20, 3
      %p79 = por %p77, %p78
      %p80 = scmp.ne.s32.totalorder %s72, %s75
      %p81 = scmp.eq.s32.totalorder %s20, 0
      %p82 = por %p80, %p81
      %p83 = scmp.ne.s32.totalorder %s72, %s75
      %p84 = scmp.eq.s32.totalorder %s25, 3
      %p85 = por %p83, %p84
      %p86 = scmp.ne.s32.totalorder %s75, %s76
      %p87 = scmp.eq.s32.totalorder %s25, 0
      %p88 = por %p86, %p87
      %p89 = scmp.ne.s32.totalorder %s75, %s76
      %p90 = scmp.eq.s32.totalorder %s26, 3
      %p91 = por %p89, %p90
      %p93 = scmp.ne.s32.totalorder %s76, %s92
      %p94 = scmp.eq.s32.totalorder %s26, 0
      %p95 = por %p93, %p94
      %s97 = sadd.s32 %s96, 1
      %p100 = scmp.eq.s32.totalorder %s20, 3
      %p101 = scmp.ne.s32.totalorder %s96, %s98
      %p102 = scmp.eq.s32.totalorder %s20, 0
      %p103 = por %p101, %p102
      %p104 = scmp.ne.s32.totalorder %s96, %s98
      %p105 = scmp.eq.s32.totalorder %s25, 3
      %p106 = por %p104, %p105
      %p107 = scmp.ne.s32.totalorder %s98, %s99
      %p108 = scmp.eq.s32.totalorder %s25, 0
      %p109 = por %p107, %p108
      %p110 = scmp.ne.s32.totalorder %s98, %s99
      %p111 = scmp.eq.s32.totalorder %s26, 3
      %p112 = por %p110, %p111
      %p114 = scmp.ne.s32.totalorder %s99, %s113
      %p115 = scmp.eq.s32.totalorder %s26, 0
      %p116 = por %p114, %p115
      %s118 = sadd.s32 %s117, 1
      %p121 = scmp.eq.s32.totalorder %s20, 3
      %p122 = scmp.ne.s32.totalorder %s117, %s119
      %p123 = scmp.eq.s32.totalorder %s20, 0
      %p124 = por %p122, %p123
      %p125 = scmp.ne.s32.totalorder %s117, %s119
      %p126 = scmp.eq.s32.totalorder %s25, 3
      %p127 = por %p125, %p126
      %p128 = scmp.ne.s32.totalorder %s119, %s120
      %p129 = scmp.eq.s32.totalorder %s25, 0
      %p130 = por %p128, %p129
      %p131 = scmp.ne.s32.totalorder %s119, %s120
      %p132 = scmp.eq.s32.totalorder %s26, 3
      %p133 = por %p131, %p132
      %p135 = scmp.ne.s32.totalorder %s120, %s134
      %p136 = scmp.eq.s32.totalorder %s26, 0
      %p137 = por %p135, %p136
      %s138 = ssub.s32 %s27, %s39
      %s139 = ssub.s32 %s28, %s35
      %s140 = sor.u32 %s138, %s139
      %p141 = scmp.eq.s32.totalorder %s140, 0
      %s143 = sadd.s32 %s142, 1
      %s144 = scalar_select %p141, %s142, %s143
      %p147 = pneg %p141
      %p148 = scmp.eq.s32.totalorder %s20, 3
      %p149 = por %p147, %p148
      %p150 = scmp.ne.s32.totalorder %s142, %s145
      %p151 = scmp.eq.s32.totalorder %s20, 0
      %p152 = por %p150, %p151
      %p153 = scmp.ne.s32.totalorder %s142, %s145
      %p154 = scmp.eq.s32.totalorder %s25, 3
      %p155 = por %p153, %p154
      %p156 = scmp.ne.s32.totalorder %s145, %s146
      %p157 = scmp.eq.s32.totalorder %s25, 0
      %p158 = por %p156, %p157
      %p159 = scmp.ne.s32.totalorder %s145, %s146
      %p160 = scmp.eq.s32.totalorder %s26, 3
      %p161 = por %p159, %p160
      %p163 = scmp.ne.s32.totalorder %s146, %s162
      %p164 = scmp.eq.s32.totalorder %s26, 0
      %p165 = por %p163, %p164
      %p166 = scmp.le.s32.totalorder 1, %s20
      %p167 = scmp.lt.s32.totalorder %s20, 5
      %p168 = pnand %p166, %p167
      %p169 = pneg %p168
      // Predicated region
      $region9: #{residual_block_forward.5} parent=5 // pred_check
        _
      $region10: #{residual_block_forward.5} parent=5 // pred_check_branch
        %171 = sbr.rel (%p168) target = $region12
      $region11: #{residual_block_forward.5} parent=5 // pred_region
        %s172 = ssub.s32 %s20, 1
        // Predicated region
        $region13: #{residual_block_forward.5} parent=11 // pred_check
          %p173 = pneg %p109
        $region14: #{residual_block_forward.5} parent=11 // pred_check_branch
          %175 = sbr.rel (%p173) target = $region16
        $region15: #{residual_block_forward.5} parent=11 // pred_region
          %s177 = ssub.s32 128, 128
          %178 = vsyncadd [#allocation6], %s177
          %s179 = sshll.u32 [#allocation7], 4
          %s180 = int_to_ptr.vmem [resolvable:$true] %s179
          %185 = dma.hbm_to_vmem [thread:$0]  %s2, 128, %s180, [#allocation6], 64, 64, 4
        $region16: #{residual_block_forward.5} parent=11 // pred_fallthru
          _
        // Predicated region
        $region17: #{residual_block_forward.5} parent=11 // pred_check
          %p186 = pneg %p130
        $region18: #{residual_block_forward.5} parent=11 // pred_check_branch
          %188 = sbr.rel (%p186) target = $region20
        $region19: #{residual_block_forward.5} parent=11 // pred_region
          %s190 = ssub.s32 64, 64
          %191 = vsyncadd [#allocation9], %s190
          %s193 = sshll.u32 [#allocation8], 4
          %s194 = int_to_ptr.vmem [resolvable:$true] %s193
          %196 = dma.hbm_to_vmem [thread:$0]  %s3, 64, %s194, [#allocation9]
        $region20: #{residual_block_forward.5} parent=11 // pred_fallthru
          _
      $region12: #{residual_block_forward.5} parent=5 // pred_fallthru
        _
      %p197 = scmp.lt.s32.totalorder %s20, 4
      // Predicated region
      $region21: #{residual_block_forward.5} parent=5 // pred_check
        %p198 = pneg %p197
      $region22: #{residual_block_forward.5} parent=5 // pred_check_branch
        %200 = sbr.rel (%p198) target = $region24
      $region23: #{residual_block_forward.5} parent=5 // pred_region
        // Predicated region
        $region25: #{residual_block_forward.5} parent=23 // pred_check
          %p201 = pneg %p54
        $region26: #{residual_block_forward.5} parent=23 // pred_check_branch
          %203 = sbr.rel (%p201) target = $region28
        $region27: #{residual_block_forward.5} parent=23 // pred_region
          %s204 = sand.u32 %s44, 1
          %s205 = scalar_lea.sflag [#allocation3], %s204
          %s206 = sand.u32 %s44, 1
          %s207 = smul.addr %s206, 32
          %s208 = scalar_lea.vmem [#allocation2], %s207
          %s209 = smul.u32 8, %s28
          %s211 = ssub.s32 512, 512
          %212 = vsyncadd %s205, %s211
          %s213 = smul.addr %s27, 16
          %s214 = sadd.s32 %s209, %s213
          %s215 = smul.addr %s214, 64
          %s216 = scalar_lea.hbm %s0, %s215
          %s217 = sshll.u32 %s208, 4
          %s218 = int_to_ptr.vmem [resolvable:$true] %s217
          %223 = dma.hbm_to_vmem [thread:$0]  %s216, 512, %s218, %s205, 64, 64, 4
        $region28: #{residual_block_forward.5} parent=23 // pred_fallthru
          _
        // Predicated region
        $region29: #{residual_block_forward.5} parent=23 // pred_check
          %p224 = pneg %p82
        $region30: #{residual_block_forward.5} parent=23 // pred_check_branch
          %226 = sbr.rel (%p224) target = $region32
        $region31: #{residual_block_forward.5} parent=23 // pred_region
          %s227 = sand.u32 %s20, 1
          %s228 = scalar_lea.sflag [#allocation6], %s227
          %s229 = sand.u32 %s72, 1
          %s230 = smul.addr %s229, 128
          %s231 = scalar_lea.vmem [#allocation5], %s230
          %s232 = smul.u32 8, %s28
          %s234 = ssub.s32 2048, 2048
          %235 = vsyncadd %s228, %s234
          %s236 = smul.addr %s232, 2
          %s237 = smul.addr %s27, 32
          %s238 = sadd.s32 %s236, %s237
          %s239 = smul.addr %s238, 128
          %s240 = scalar_lea.hbm %s1, %s239
          %s241 = sshll.u32 %s231, 4
          %s242 = int_to_ptr.vmem [resolvable:$true] %s241
          %247 = dma.hbm_to_vmem [thread:$0]  %s240, 2048, %s242, %s228, 128, 128, 8
        $region32: #{residual_block_forward.5} parent=23 // pred_fallthru
          _
      $region24: #{residual_block_forward.5} parent=5 // pred_fallthru
        _
      %p248 = scmp.le.s32.totalorder 1, %s20
      %p249 = scmp.lt.s32.totalorder %s20, 5
      %p250 = pnand %p248, %p249
      %p251 = pneg %p250
      // Predicated region
      $region33: #{residual_block_forward.5} parent=5 // pred_check
        _
      $region34: #{residual_block_forward.5} parent=5 // pred_check_branch
        %253 = sbr.rel (%p250) target = $region36
      $region35: #{residual_block_forward.5} parent=5 // pred_region
        %s254 = ssub.s32 %s20, 1
        %s255 = sand.u32 %s47, 1
        %s256 = scalar_lea.sflag [#allocation3], %s255
        %s257 = sand.u32 %s47, 1
        %s258 = smul.addr %s257, 32
        %s259 = scalar_lea.vmem [#allocation2], %s258
        // Predicated region
        $region37: #{residual_block_forward.5} parent=35 // pred_check
          %p260 = pneg %p60
        $region38: #{residual_block_forward.5} parent=35 // pred_check_branch
          %262 = sbr.rel (%p260) target = $region40
        $region39: #{residual_block_forward.5} parent=35 // pred_region
          %263 = dma.done %s256, 512
        $region40: #{residual_block_forward.5} parent=35 // pred_fallthru
          _
        %s264 = sand.u32 %s25, 1
        %s265 = scalar_lea.sflag [#allocation6], %s264
        %s266 = sand.u32 %s75, 1
        %s267 = smul.addr %s266, 128
        %s268 = scalar_lea.vmem [#allocation5], %s267
        // Predicated region
        $region41: #{residual_block_forward.5} parent=35 // pred_check
          %p269 = pneg %p88
        $region42: #{residual_block_forward.5} parent=35 // pred_check_branch
          %271 = sbr.rel (%p269) target = $region44
        $region43: #{residual_block_forward.5} parent=35 // pred_region
          %272 = dma.done %s265, 2048
        $region44: #{residual_block_forward.5} parent=35 // pred_fallthru
          _
        // Predicated region
        $region45: #{residual_block_forward.5} parent=35 // pred_check
          %p273 = pneg %p109
        $region46: #{residual_block_forward.5} parent=35 // pred_check_branch
          %275 = sbr.rel (%p273) target = $region48
        $region47: #{residual_block_forward.5} parent=35 // pred_region
          %276 = dma.done [#allocation6], 128
        $region48: #{residual_block_forward.5} parent=35 // pred_fallthru
          _
        // Predicated region
        $region49: #{residual_block_forward.5} parent=35 // pred_check
          %p277 = pneg %p130
        $region50: #{residual_block_forward.5} parent=35 // pred_check_branch
          %279 = sbr.rel (%p277) target = $region52
        $region51: #{residual_block_forward.5} parent=35 // pred_region
          %280 = dma.done [#allocation9], 64
        $region52: #{residual_block_forward.5} parent=35 // pred_fallthru
          _
        %s281 = sand.u32 %s47, 1
        %s282 = scalar_lea.sflag [#allocation3], %s281
        %s283 = sand.u32 %s47, 1
        %s284 = smul.addr %s283, 32
        %s285 = scalar_lea.vmem [#allocation2], %s284
        %p286 = pneg %p60
        %p287 = pneg %p57
        %s288 = sand.u32 %s25, 1
        %s289 = scalar_lea.sflag [#allocation6], %s288
        %s290 = sand.u32 %s75, 1
        %s291 = smul.addr %s290, 128
        %s292 = scalar_lea.vmem [#allocation5], %s291
        %p293 = pneg %p88
        %p294 = pneg %p85
        %p295 = pneg %p109
        %p296 = pneg %p106
        %p297 = pneg %p130
        %p298 = pneg %p127
        %p299 = pneg %p158
        %p300 = pneg %p155
        %s301 = sand.u32 %s145, 1
        %s302 = scalar_lea.sflag [#allocation4], %s301
        %s303 = sand.u32 %s145, 1
        %s304 = smul.addr %s303, 128
        %s305 = scalar_lea.vmem [#allocation10], %s304
        %s306 = smul.u32 8, %s30
        %s307 = smul.u32 8, %s30
        %s308 = smul.u32 8, %s30
        %v310 = vld [vmem:[#allocation7] sm:$0xf]
        %v311 = vld [vmem:[#allocation7 + $0x4] sm:$0xf]
        %v312 = vld [vmem:[%s259] sm:$0xf]
        %v315 = vunpack.c.l.b16 %v310
        %v316 = vunpack.c.l.b16 %v311
        %v317 = vpack.c.b16 %v316, %v315
        %vm318 = vcmask 64512
        %v320 = vsel %vm318, %v317, 0
        %vm322 = vcmask 1043456
        %v324 = vsel %vm322, %v312, 0
        %326 = vmatprep.subr.bf16.mxu0 0
        %327 = vmatpush1.bf16.msra.mxu0 %v324
        %328 = vmatprep.subr.bf16.mxu0 0
        %329 = vmatpush1.bf16.msra.mxu0 0
        %330 = vmatprep.subr.bf16.mxu0 0
        %331 = vmatpush1.bf16.msra.mxu0 0
        %332 = vmatprep.subr.bf16.mxu0 0
        %333 = vmatpush1.bf16.msra.mxu0 0
        %334 = vmatprep.subr.bf16.mxu0 0
        %335 = vmatpush1.bf16.msra.mxu0 0
        %336 = vmatprep.subr.bf16.mxu0 0
        %337 = vmatpush1.bf16.msra.mxu0 0
        %338 = vmatprep.subr.bf16.mxu0 0
        %339 = vmatpush1.bf16.msra.mxu0 0
        %340 = vmatprep.subr.bf16.mxu0 0
        %341 = vmatpush1.bf16.msra.mxu0 0
        %342 = vmatprep.subr.bf16.mxu0 0
        %343 = vmatpush1.bf16.msra.mxu0 0
        %344 = vmatprep.subr.bf16.mxu0 0
        %345 = vmatpush1.bf16.msra.mxu0 0
        %346 = vmatprep.subr.bf16.mxu0 0
        %347 = vmatpush1.bf16.msra.mxu0 0
        %348 = vmatprep.subr.bf16.mxu0 0
        %349 = vmatpush1.bf16.msra.mxu0 0
        %350 = vmatprep.subr.bf16.mxu0 0
        %351 = vmatpush1.bf16.msra.mxu0 0
        %352 = vmatprep.subr.bf16.mxu0 0
        %353 = vmatpush1.bf16.msra.mxu0 0
        %354 = vmatprep.subr.bf16.mxu0 0
        %355 = vmatpush1.bf16.msra.mxu0 0
        %356 = vmatprep.subr.bf16.mxu0 0
        %357 = vmatpush1.bf16.msra.mxu0 0
        %358 = vmatprep.mubr.bf16.mxu0 0
        %359 = vmatmul.mubr.bf16.gmra.mrb[0].mxu0 %v320
        %v360 = vpop.f32.mrb[0].mxu0
        %v361 = vadd.f32 0.0, %v360
        %v362 = vpop.f32.mrb[0].mxu0
        %v363 = vpop.f32.mrb[0].mxu0
        %v364 = vadd.f32 0.0, %v363
        %v365 = vpop.f32.mrb[0].mxu0
        %366 = vdwg.mxu0
        %v367 = vpack.c.bf16 %v364, %v361
        %v368 = vld [vmem:[#allocation8] sm:$0xf]
        %v369 = vld [vmem:[%s268] sm:$0xff]
        %v370 = vld [vmem:[%s268 + $0x8] sm:$0xff]
        %v372 = vsel %vm318, %v367, 0
        %v375 = vsel %vm322, %v368, 0
        %377 = vmatprep.subr.bf16.mxu0 0
        %378 = vmatpush1.bf16.msra.mxu0 %v375
        %379 = vmatprep.subr.bf16.mxu0 0
        %380 = vmatpush1.bf16.msra.mxu0 0
        %381 = vmatprep.subr.bf16.mxu0 0
        %382 = vmatpush1.bf16.msra.mxu0 0
        %383 = vmatprep.subr.bf16.mxu0 0
        %384 = vmatpush1.bf16.msra.mxu0 0
        %385 = vmatprep.subr.bf16.mxu0 0
        %386 = vmatpush1.bf16.msra.mxu0 0
        %387 = vmatprep.subr.bf16.mxu0 0
        %388 = vmatpush1.bf16.msra.mxu0 0
        %389 = vmatprep.subr.bf16.mxu0 0
        %390 = vmatpush1.bf16.msra.mxu0 0
        %391 = vmatprep.subr.bf16.mxu0 0
        %392 = vmatpush1.bf16.msra.mxu0 0
        %393 = vmatprep.subr.bf16.mxu0 0
        %394 = vmatpush1.bf16.msra.mxu0 0
        %395 = vmatprep.subr.bf16.mxu0 0
        %396 = vmatpush1.bf16.msra.mxu0 0
        %397 = vmatprep.subr.bf16.mxu0 0
        %398 = vmatpush1.bf16.msra.mxu0 0
        %399 = vmatprep.subr.bf16.mxu0 0
        %400 = vmatpush1.bf16.msra.mxu0 0
        %401 = vmatprep.subr.bf16.mxu0 0
        %402 = vmatpush1.bf16.msra.mxu0 0
        %403 = vmatprep.subr.bf16.mxu0 0
        %404 = vmatpush1.bf16.msra.mxu0 0
        %405 = vmatprep.subr.bf16.mxu0 0
        %406 = vmatpush1.bf16.msra.mxu0 0
        %407 = vmatprep.subr.bf16.mxu0 0
        %408 = vmatpush1.bf16.msra.mxu0 0
        %409 = vmatprep.mubr.bf16.mxu0 0
        %410 = vmatmul.mubr.bf16.gmra.mrb[0].mxu0 %v372
        %v411 = vpop.f32.mrb[0].mxu0
        %v412 = vadd.f32 %v369, %v411
        %v413 = vpop.f32.mrb[0].mxu0
        %v414 = vpop.f32.mrb[0].mxu0
        %v415 = vadd.f32 %v370, %v414
        %v416 = vpop.f32.mrb[0].mxu0
        %417 = vdwg.mxu0
        %vm418 = vcmask 130048
        %419 = vst.msk [vmem:[%s305] sm:$0xff] %vm418, %v412
        %420 = vst.msk [vmem:[%s305 + $0x8] sm:$0xff] %vm418, %v415
        %v421 = vld [vmem:[#allocation7] sm:$0xf]
        %v422 = vld [vmem:[#allocation7 + $0x4] sm:$0xf]
        %s423 = scalar_lea.vmem %s259, 4 [#allocation2]
        %v424 = vld [vmem:[%s423] sm:$0xf]
        %v427 = vunpack.c.l.b16 %v421
        %v428 = vunpack.c.l.b16 %v422
        %v429 = vpack.c.b16 %v428, %v427
        %v431 = vsel %vm318, %v429, 0
        %v434 = vsel %vm322, %v424, 0
        %436 = vmatprep.subr.bf16.mxu0 0
        %437 = vmatpush1.bf16.msra.mxu0 %v434
        %438 = vmatprep.subr.bf16.mxu0 0
        %439 = vmatpush1.bf16.msra.mxu0 0
        %440 = vmatprep.subr.bf16.mxu0 0
        %441 = vmatpush1.bf16.msra.mxu0 0
        %442 = vmatprep.subr.bf16.mxu0 0
        %443 = vmatpush1.bf16.msra.mxu0 0
        %444 = vmatprep.subr.bf16.mxu0 0
        %445 = vmatpush1.bf16.msra.mxu0 0
        %446 = vmatprep.subr.bf16.mxu0 0
        %447 = vmatpush1.bf16.msra.mxu0 0
        %448 = vmatprep.subr.bf16.mxu0 0
        %449 = vmatpush1.bf16.msra.mxu0 0
        %450 = vmatprep.subr.bf16.mxu0 0
        %451 = vmatpush1.bf16.msra.mxu0 0
        %452 = vmatprep.subr.bf16.mxu0 0
        %453 = vmatpush1.bf16.msra.mxu0 0
        %454 = vmatprep.subr.bf16.mxu0 0
        %455 = vmatpush1.bf16.msra.mxu0 0
        %456 = vmatprep.subr.bf16.mxu0 0
        %457 = vmatpush1.bf16.msra.mxu0 0
        %458 = vmatprep.subr.bf16.mxu0 0
        %459 = vmatpush1.bf16.msra.mxu0 0
        %460 = vmatprep.subr.bf16.mxu0 0
        %461 = vmatpush1.bf16.msra.mxu0 0
        %462 = vmatprep.subr.bf16.mxu0 0
        %463 = vmatpush1.bf16.msra.mxu0 0
        %464 = vmatprep.subr.bf16.mxu0 0
        %465 = vmatpush1.bf16.msra.mxu0 0
        %466 = vmatprep.subr.bf16.mxu0 0
        %467 = vmatpush1.bf16.msra.mxu0 0
        %468 = vmatprep.mubr.bf16.mxu0 0
        %469 = vmatmul.mubr.bf16.gmra.mrb[0].mxu0 %v431
        %v470 = vpop.f32.mrb[0].mxu0
        %v471 = vadd.f32 0.0, %v470
        %v472 = vpop.f32.mrb[0].mxu0
        %v473 = vpop.f32.mrb[0].mxu0
        %v474 = vadd.f32 0.0, %v473
        %v475 = vpop.f32.mrb[0].mxu0
        %476 = vdwg.mxu0
        %v477 = vpack.c.bf16 %v474, %v471
        %v478 = vld [vmem:[#allocation8] sm:$0xf]
        %s479 = scalar_lea.vmem %s268, 16 [#allocation5]
        %v480 = vld [vmem:[%s479] sm:$0xff]
        %v481 = vld [vmem:[%s479 + $0x8] sm:$0xff]
        %v483 = vsel %vm318, %v477, 0
        %v486 = vsel %vm322, %v478, 0
        %488 = vmatprep.subr.bf16.mxu0 0
        %489 = vmatpush1.bf16.msra.mxu0 %v486
        %490 = vmatprep.subr.bf16.mxu0 0
        %491 = vmatpush1.bf16.msra.mxu0 0
        %492 = vmatprep.subr.bf16.mxu0 0
        %493 = vmatpush1.bf16.msra.mxu0 0
        %494 = vmatprep.subr.bf16.mxu0 0
        %495 = vmatpush1.bf16.msra.mxu0 0
        %496 = vmatprep.subr.bf16.mxu0 0
        %497 = vmatpush1.bf16.msra.mxu0 0
        %498 = vmatprep.subr.bf16.mxu0 0
        %499 = vmatpush1.bf16.msra.mxu0 0
        %500 = vmatprep.subr.bf16.mxu0 0
        %501 = vmatpush1.bf16.msra.mxu0 0
        %502 = vmatprep.subr.bf16.mxu0 0
        %503 = vmatpush1.bf16.msra.mxu0 0
        %504 = vmatprep.subr.bf16.mxu0 0
        %505 = vmatpush1.bf16.msra.mxu0 0
        %506 = vmatprep.subr.bf16.mxu0 0
        %507 = vmatpush1.bf16.msra.mxu0 0
        %508 = vmatprep.subr.bf16.mxu0 0
        %509 = vmatpush1.bf16.msra.mxu0 0
        %510 = vmatprep.subr.bf16.mxu0 0
        %511 = vmatpush1.bf16.msra.mxu0 0
        %512 = vmatprep.subr.bf16.mxu0 0
        %513 = vmatpush1.bf16.msra.mxu0 0
        %514 = vmatprep.subr.bf16.mxu0 0
        %515 = vmatpush1.bf16.msra.mxu0 0
        %516 = vmatprep.subr.bf16.mxu0 0
        %517 = vmatpush1.bf16.msra.mxu0 0
        %518 = vmatprep.subr.bf16.mxu0 0
        %519 = vmatpush1.bf16.msra.mxu0 0
        %520 = vmatprep.mubr.bf16.mxu0 0
        %521 = vmatmul.mubr.bf16.gmra.mrb[0].mxu0 %v483
        %v522 = vpop.f32.mrb[0].mxu0
        %v523 = vadd.f32 %v480, %v522
        %v524 = vpop.f32.mrb[0].mxu0
        %v525 = vpop.f32.mrb[0].mxu0
        %v526 = vadd.f32 %v481, %v525
        %v527 = vpop.f32.mrb[0].mxu0
        %528 = vdwg.mxu0
        %s529 = scalar_lea.vmem %s305, 16 [#allocation10]
        %530 = vst.msk [vmem:[%s529] sm:$0xff] %vm418, %v523
        %531 = vst.msk [vmem:[%s529 + $0x8] sm:$0xff] %vm418, %v526
        %v532 = vld [vmem:[#allocation7] sm:$0xf]
        %v533 = vld [vmem:[#allocation7 + $0x4] sm:$0xf]
        %s534 = scalar_lea.vmem %s259, 8 [#allocation2]
        %v535 = vld [vmem:[%s534] sm:$0xf]
        %v538 = vunpack.c.l.b16 %v532
        %v539 = vunpack.c.l.b16 %v533
        %v540 = vpack.c.b16 %v539, %v538
        %v542 = vsel %vm318, %v540, 0
        %v545 = vsel %vm322, %v535, 0
        %547 = vmatprep.subr.bf16.mxu0 0
        %548 = vmatpush1.bf16.msra.mxu0 %v545
        %549 = vmatprep.subr.bf16.mxu0 0
        %550 = vmatpush1.bf16.msra.mxu0 0
        %551 = vmatprep.subr.bf16.mxu0 0
        %552 = vmatpush1.bf16.msra.mxu0 0
        %553 = vmatprep.subr.bf16.mxu0 0
        %554 = vmatpush1.bf16.msra.mxu0 0
        %555 = vmatprep.subr.bf16.mxu0 0
        %556 = vmatpush1.bf16.msra.mxu0 0
        %557 = vmatprep.subr.bf16.mxu0 0
        %558 = vmatpush1.bf16.msra.mxu0 0
        %559 = vmatprep.subr.bf16.mxu0 0
        %560 = vmatpush1.bf16.msra.mxu0 0
        %561 = vmatprep.subr.bf16.mxu0 0
        %562 = vmatpush1.bf16.msra.mxu0 0
        %563 = vmatprep.subr.bf16.mxu0 0
        %564 = vmatpush1.bf16.msra.mxu0 0
        %565 = vmatprep.subr.bf16.mxu0 0
        %566 = vmatpush1.bf16.msra.mxu0 0
        %567 = vmatprep.subr.bf16.mxu0 0
        %568 = vmatpush1.bf16.msra.mxu0 0
        %569 = vmatprep.subr.bf16.mxu0 0
        %570 = vmatpush1.bf16.msra.mxu0 0
        %571 = vmatprep.subr.bf16.mxu0 0
        %572 = vmatpush1.bf16.msra.mxu0 0
        %573 = vmatprep.subr.bf16.mxu0 0
        %574 = vmatpush1.bf16.msra.mxu0 0
        %575 = vmatprep.subr.bf16.mxu0 0
        %576 = vmatpush1.bf16.msra.mxu0 0
        %577 = vmatprep.subr.bf16.mxu0 0
        %578 = vmatpush1.bf16.msra.mxu0 0
        %579 = vmatprep.mubr.bf16.mxu0 0
        %580 = vmatmul.mubr.bf16.gmra.mrb[0].mxu0 %v542
        %v581 = vpop.f32.mrb[0].mxu0
        %v582 = vadd.f32 0.0, %v581
        %v583 = vpop.f32.mrb[0].mxu0
        %v584 = vpop.f32.mrb[0].mxu0
        %v585 = vadd.f32 0.0, %v584
        %v586 = vpop.f32.mrb[0].mxu0
        %587 = vdwg.mxu0
        %v588 = vpack.c.bf16 %v585, %v582
        %v589 = vld [vmem:[#allocation8] sm:$0xf]
        %s590 = scalar_lea.vmem %s268, 32 [#allocation5]
        %v591 = vld [vmem:[%s590] sm:$0xff]
        %v592 = vld [vmem:[%s590 + $0x8] sm:$0xff]
        %v594 = vsel %vm318, %v588, 0
        %v597 = vsel %vm322, %v589, 0
        %599 = vmatprep.subr.bf16.mxu0 0
        %600 = vmatpush1.bf16.msra.mxu0 %v597
        %601 = vmatprep.subr.bf16.mxu0 0
        %602 = vmatpush1.bf16.msra.mxu0 0
        %603 = vmatprep.subr.bf16.mxu0 0
        %604 = vmatpush1.bf16.msra.mxu0 0
        %605 = vmatprep.subr.bf16.mxu0 0
        %606 = vmatpush1.bf16.msra.mxu0 0
        %607 = vmatprep.subr.bf16.mxu0 0
        %608 = vmatpush1.bf16.msra.mxu0 0
        %609 = vmatprep.subr.bf16.mxu0 0
        %610 = vmatpush1.bf16.msra.mxu0 0
        %611 = vmatprep.subr.bf16.mxu0 0
        %612 = vmatpush1.bf16.msra.mxu0 0
        %613 = vmatprep.subr.bf16.mxu0 0
        %614 = vmatpush1.bf16.msra.mxu0 0
        %615 = vmatprep.subr.bf16.mxu0 0
        %616 = vmatpush1.bf16.msra.mxu0 0
        %617 = vmatprep.subr.bf16.mxu0 0
        %618 = vmatpush1.bf16.msra.mxu0 0
        %619 = vmatprep.subr.bf16.mxu0 0
        %620 = vmatpush1.bf16.msra.mxu0 0
        %621 = vmatprep.subr.bf16.mxu0 0
        %622 = vmatpush1.bf16.msra.mxu0 0
        %623 = vmatprep.subr.bf16.mxu0 0
        %624 = vmatpush1.bf16.msra.mxu0 0
        %625 = vmatprep.subr.bf16.mxu0 0
        %626 = vmatpush1.bf16.msra.mxu0 0
        %627 = vmatprep.subr.bf16.mxu0 0
        %628 = vmatpush1.bf16.msra.mxu0 0
        %629 = vmatprep.subr.bf16.mxu0 0
        %630 = vmatpush1.bf16.msra.mxu0 0
        %631 = vmatprep.mubr.bf16.mxu0 0
        %632 = vmatmul.mubr.bf16.gmra.mrb[0].mxu0 %v594
        %v633 = vpop.f32.mrb[0].mxu0
        %v634 = vadd.f32 %v591, %v633
        %v635 = vpop.f32.mrb[0].mxu0
        %v636 = vpop.f32.mrb[0].mxu0
        %v637 = vadd.f32 %v592, %v636
        %v638 = vpop.f32.mrb[0].mxu0
        %639 = vdwg.mxu0
        %s640 = scalar_lea.vmem %s305, 32 [#allocation10]
        %641 = vst.msk [vmem:[%s640] sm:$0xff] %vm418, %v634
        %642 = vst.msk [vmem:[%s640 + $0x8] sm:$0xff] %vm418, %v637
        %v643 = vld [vmem:[#allocation7] sm:$0xf]
        %v644 = vld [vmem:[#allocation7 + $0x4] sm:$0xf]
        %s645 = scalar_lea.vmem %s259, 12 [#allocation2]
        %v646 = vld [vmem:[%s645] sm:$0xf]
        %v649 = vunpack.c.l.b16 %v643
        %v650 = vunpack.c.l.b16 %v644
        %v651 = vpack.c.b16 %v650, %v649
        %v653 = vsel %vm318, %v651, 0
        %v656 = vsel %vm322, %v646, 0
        %658 = vmatprep.subr.bf16.mxu0 0
        %659 = vmatpush1.bf16.msra.mxu0 %v656
        %660 = vmatprep.subr.bf16.mxu0 0
        %661 = vmatpush1.bf16.msra.mxu0 0
        %662 = vmatprep.subr.bf16.mxu0 0
        %663 = vmatpush1.bf16.msra.mxu0 0
        %664 = vmatprep.subr.bf16.mxu0 0
        %665 = vmatpush1.bf16.msra.mxu0 0
        %666 = vmatprep.subr.bf16.mxu0 0
        %667 = vmatpush1.bf16.msra.mxu0 0
        %668 = vmatprep.subr.bf16.mxu0 0
        %669 = vmatpush1.bf16.msra.mxu0 0
        %670 = vmatprep.subr.bf16.mxu0 0
        %671 = vmatpush1.bf16.msra.mxu0 0
        %672 = vmatprep.subr.bf16.mxu0 0
        %673 = vmatpush1.bf16.msra.mxu0 0
        %674 = vmatprep.subr.bf16.mxu0 0
        %675 = vmatpush1.bf16.msra.mxu0 0
        %676 = vmatprep.subr.bf16.mxu0 0
        %677 = vmatpush1.bf16.msra.mxu0 0
        %678 = vmatprep.subr.bf16.mxu0 0
        %679 = vmatpush1.bf16.msra.mxu0 0
        %680 = vmatprep.subr.bf16.mxu0 0
        %681 = vmatpush1.bf16.msra.mxu0 0
        %682 = vmatprep.subr.bf16.mxu0 0
        %683 = vmatpush1.bf16.msra.mxu0 0
        %684 = vmatprep.subr.bf16.mxu0 0
        %685 = vmatpush1.bf16.msra.mxu0 0
        %686 = vmatprep.subr.bf16.mxu0 0
        %687 = vmatpush1.bf16.msra.mxu0 0
        %688 = vmatprep.subr.bf16.mxu0 0
        %689 = vmatpush1.bf16.msra.mxu0 0
        %690 = vmatprep.mubr.bf16.mxu0 0
        %691 = vmatmul.mubr.bf16.gmra.mrb[0].mxu0 %v653
        %v692 = vpop.f32.mrb[0].mxu0
        %v693 = vadd.f32 0.0, %v692
        %v694 = vpop.f32.mrb[0].mxu0
        %v695 = vpop.f32.mrb[0].mxu0
        %v696 = vadd.f32 0.0, %v695
        %v697 = vpop.f32.mrb[0].mxu0
        %698 = vdwg.mxu0
        %v699 = vpack.c.bf16 %v696, %v693
        %v700 = vld [vmem:[#allocation8] sm:$0xf]
        %s701 = scalar_lea.vmem %s268, 48 [#allocation5]
        %v702 = vld [vmem:[%s701] sm:$0xff]
        %v703 = vld [vmem:[%s701 + $0x8] sm:$0xff]
        %v705 = vsel %vm318, %v699, 0
        %v708 = vsel %vm322, %v700, 0
        %710 = vmatprep.subr.bf16.mxu0 0
        %711 = vmatpush1.bf16.msra.mxu0 %v708
        %712 = vmatprep.subr.bf16.mxu0 0
        %713 = vmatpush1.bf16.msra.mxu0 0
        %714 = vmatprep.subr.bf16.mxu0 0
        %715 = vmatpush1.bf16.msra.mxu0 0
        %716 = vmatprep.subr.bf16.mxu0 0
        %717 = vmatpush1.bf16.msra.mxu0 0
        %718 = vmatprep.subr.bf16.mxu0 0
        %719 = vmatpush1.bf16.msra.mxu0 0
        %720 = vmatprep.subr.bf16.mxu0 0
        %721 = vmatpush1.bf16.msra.mxu0 0
        %722 = vmatprep.subr.bf16.mxu0 0
        %723 = vmatpush1.bf16.msra.mxu0 0
        %724 = vmatprep.subr.bf16.mxu0 0
        %725 = vmatpush1.bf16.msra.mxu0 0
        %726 = vmatprep.subr.bf16.mxu0 0
        %727 = vmatpush1.bf16.msra.mxu0 0
        %728 = vmatprep.subr.bf16.mxu0 0
        %729 = vmatpush1.bf16.msra.mxu0 0
        %730 = vmatprep.subr.bf16.mxu0 0
        %731 = vmatpush1.bf16.msra.mxu0 0
        %732 = vmatprep.subr.bf16.mxu0 0
        %733 = vmatpush1.bf16.msra.mxu0 0
        %734 = vmatprep.subr.bf16.mxu0 0
        %735 = vmatpush1.bf16.msra.mxu0 0
        %736 = vmatprep.subr.bf16.mxu0 0
        %737 = vmatpush1.bf16.msra.mxu0 0
        %738 = vmatprep.subr.bf16.mxu0 0
        %739 = vmatpush1.bf16.msra.mxu0 0
        %740 = vmatprep.subr.bf16.mxu0 0
        %741 = vmatpush1.bf16.msra.mxu0 0
        %742 = vmatprep.mubr.bf16.mxu0 0
        %743 = vmatmul.mubr.bf16.gmra.mrb[0].mxu0 %v705
        %v744 = vpop.f32.mrb[0].mxu0
        %v745 = vadd.f32 %v702, %v744
        %v746 = vpop.f32.mrb[0].mxu0
        %v747 = vpop.f32.mrb[0].mxu0
        %v748 = vadd.f32 %v703, %v747
        %v749 = vpop.f32.mrb[0].mxu0
        %750 = vdwg.mxu0
        %s751 = scalar_lea.vmem %s305, 48 [#allocation10]
        %752 = vst.msk [vmem:[%s751] sm:$0xff] %vm418, %v745
        %753 = vst.msk [vmem:[%s751 + $0x8] sm:$0xff] %vm418, %v748
        %v754 = vld [vmem:[#allocation7] sm:$0xf]
        %v755 = vld [vmem:[#allocation7 + $0x4] sm:$0xf]
        %s756 = scalar_lea.vmem %s259, 16 [#allocation2]
        %v757 = vld [vmem:[%s756] sm:$0xf]
        %v760 = vunpack.c.l.b16 %v754
        %v761 = vunpack.c.l.b16 %v755
        %v762 = vpack.c.b16 %v761, %v760
        %v764 = vsel %vm318, %v762, 0
        %v767 = vsel %vm322, %v757, 0
        %769 = vmatprep.subr.bf16.mxu0 0
        %770 = vmatpush1.bf16.msra.mxu0 %v767
        %771 = vmatprep.subr.bf16.mxu0 0
        %772 = vmatpush1.bf16.msra.mxu0 0
        %773 = vmatprep.subr.bf16.mxu0 0
        %774 = vmatpush1.bf16.msra.mxu0 0
        %775 = vmatprep.subr.bf16.mxu0 0
        %776 = vmatpush1.bf16.msra.mxu0 0
        %777 = vmatprep.subr.bf16.mxu0 0
        %778 = vmatpush1.bf16.msra.mxu0 0
        %779 = vmatprep.subr.bf16.mxu0 0
        %780 = vmatpush1.bf16.msra.mxu0 0
        %781 = vmatprep.subr.bf16.mxu0 0
        %782 = vmatpush1.bf16.msra.mxu0 0
        %783 = vmatprep.subr.bf16.mxu0 0
        %784 = vmatpush1.bf16.msra.mxu0 0
        %785 = vmatprep.subr.bf16.mxu0 0
        %786 = vmatpush1.bf16.msra.mxu0 0
        %787 = vmatprep.subr.bf16.mxu0 0
        %788 = vmatpush1.bf16.msra.mxu0 0
        %789 = vmatprep.subr.bf16.mxu0 0
        %790 = vmatpush1.bf16.msra.mxu0 0
        %791 = vmatprep.subr.bf16.mxu0 0
        %792 = vmatpush1.bf16.msra.mxu0 0
        %793 = vmatprep.subr.bf16.mxu0 0
        %794 = vmatpush1.bf16.msra.mxu0 0
        %795 = vmatprep.subr.bf16.mxu0 0
        %796 = vmatpush1.bf16.msra.mxu0 0
        %797 = vmatprep.subr.bf16.mxu0 0
        %798 = vmatpush1.bf16.msra.mxu0 0
        %799 = vmatprep.subr.bf16.mxu0 0
        %800 = vmatpush1.bf16.msra.mxu0 0
        %801 = vmatprep.mubr.bf16.mxu0 0
        %802 = vmatmul.mubr.bf16.gmra.mrb[0].mxu0 %v764
        %v803 = vpop.f32.mrb[0].mxu0
        %v804 = vadd.f32 0.0, %v803
        %v805 = vpop.f32.mrb[0].mxu0
        %v806 = vpop.f32.mrb[0].mxu0
        %v807 = vadd.f32 0.0, %v806
        %v808 = vpop.f32.mrb[0].mxu0
        %809 = vdwg.mxu0
        %v810 = vpack.c.bf16 %v807, %v804
        %v811 = vld [vmem:[#allocation8] sm:$0xf]
        %s812 = scalar_lea.vmem %s268, 64 [#allocation5]
        %v813 = vld [vmem:[%s812] sm:$0xff]
        %v814 = vld [vmem:[%s812 + $0x8] sm:$0xff]
        %v816 = vsel %vm318, %v810, 0
        %v819 = vsel %vm322, %v811, 0
        %821 = vmatprep.subr.bf16.mxu0 0
        %822 = vmatpush1.bf16.msra.mxu0 %v819
        %823 = vmatprep.subr.bf16.mxu0 0
        %824 = vmatpush1.bf16.msra.mxu0 0
        %825 = vmatprep.subr.bf16.mxu0 0
        %826 = vmatpush1.bf16.msra.mxu0 0
        %827 = vmatprep.subr.bf16.mxu0 0
        %828 = vmatpush1.bf16.msra.mxu0 0
        %829 = vmatprep.subr.bf16.mxu0 0
        %830 = vmatpush1.bf16.msra.mxu0 0
        %831 = vmatprep.subr.bf16.mxu0 0
        %832 = vmatpush1.bf16.msra.mxu0 0
        %833 = vmatprep.subr.bf16.mxu0 0
        %834 = vmatpush1.bf16.msra.mxu0 0
        %835 = vmatprep.subr.bf16.mxu0 0
        %836 = vmatpush1.bf16.msra.mxu0 0
        %837 = vmatprep.subr.bf16.mxu0 0
        %838 = vmatpush1.bf16.msra.mxu0 0
        %839 = vmatprep.subr.bf16.mxu0 0
        %840 = vmatpush1.bf16.msra.mxu0 0
        %841 = vmatprep.subr.bf16.mxu0 0
        %842 = vmatpush1.bf16.msra.mxu0 0
        %843 = vmatprep.subr.bf16.mxu0 0
        %844 = vmatpush1.bf16.msra.mxu0 0
        %845 = vmatprep.subr.bf16.mxu0 0
        %846 = vmatpush1.bf16.msra.mxu0 0
        %847 = vmatprep.subr.bf16.mxu0 0
        %848 = vmatpush1.bf16.msra.mxu0 0
        %849 = vmatprep.subr.bf16.mxu0 0
        %850 = vmatpush1.bf16.msra.mxu0 0
        %851 = vmatprep.subr.bf16.mxu0 0
        %852 = vmatpush1.bf16.msra.mxu0 0
        %853 = vmatprep.mubr.bf16.mxu0 0
        %854 = vmatmul.mubr.bf16.gmra.mrb[0].mxu0 %v816
        %v855 = vpop.f32.mrb[0].mxu0
        %v856 = vadd.f32 %v813, %v855
        %v857 = vpop.f32.mrb[0].mxu0
        %v858 = vpop.f32.mrb[0].mxu0
        %v859 = vadd.f32 %v814, %v858
        %v860 = vpop.f32.mrb[0].mxu0
        %861 = vdwg.mxu0
        %s862 = scalar_lea.vmem %s305, 64 [#allocation10]
        %863 = vst.msk [vmem:[%s862] sm:$0xff] %vm418, %v856
        %864 = vst.msk [vmem:[%s862 + $0x8] sm:$0xff] %vm418, %v859
        %v865 = vld [vmem:[#allocation7] sm:$0xf]
        %v866 = vld [vmem:[#allocation7 + $0x4] sm:$0xf]
        %s867 = scalar_lea.vmem %s259, 20 [#allocation2]
        %v868 = vld [vmem:[%s867] sm:$0xf]
        %v871 = vunpack.c.l.b16 %v865
        %v872 = vunpack.c.l.b16 %v866
        %v873 = vpack.c.b16 %v872, %v871
        %v875 = vsel %vm318, %v873, 0
        %v878 = vsel %vm322, %v868, 0
        %880 = vmatprep.subr.bf16.mxu0 0
        %881 = vmatpush1.bf16.msra.mxu0 %v878
        %882 = vmatprep.subr.bf16.mxu0 0
        %883 = vmatpush1.bf16.msra.mxu0 0
        %884 = vmatprep.subr.bf16.mxu0 0
        %885 = vmatpush1.bf16.msra.mxu0 0
        %886 = vmatprep.subr.bf16.mxu0 0
        %887 = vmatpush1.bf16.msra.mxu0 0
        %888 = vmatprep.subr.bf16.mxu0 0
        %889 = vmatpush1.bf16.msra.mxu0 0
        %890 = vmatprep.subr.bf16.mxu0 0
        %891 = vmatpush1.bf16.msra.mxu0 0
        %892 = vmatprep.subr.bf16.mxu0 0
        %893 = vmatpush1.bf16.msra.mxu0 0
        %894 = vmatprep.subr.bf16.mxu0 0
        %895 = vmatpush1.bf16.msra.mxu0 0
        %896 = vmatprep.subr.bf16.mxu0 0
        %897 = vmatpush1.bf16.msra.mxu0 0
        %898 = vmatprep.subr.bf16.mxu0 0
        %899 = vmatpush1.bf16.msra.mxu0 0
        %900 = vmatprep.subr.bf16.mxu0 0
        %901 = vmatpush1.bf16.msra.mxu0 0
        %902 = vmatprep.subr.bf16.mxu0 0
        %903 = vmatpush1.bf16.msra.mxu0 0
        %904 = vmatprep.subr.bf16.mxu0 0
        %905 = vmatpush1.bf16.msra.mxu0 0
        %906 = vmatprep.subr.bf16.mxu0 0
        %907 = vmatpush1.bf16.msra.mxu0 0
        %908 = vmatprep.subr.bf16.mxu0 0
        %909 = vmatpush1.bf16.msra.mxu0 0
        %910 = vmatprep.subr.bf16.mxu0 0
        %911 = vmatpush1.bf16.msra.mxu0 0
        %912 = vmatprep.mubr.bf16.mxu0 0
        %913 = vmatmul.mubr.bf16.gmra.mrb[0].mxu0 %v875
        %v914 = vpop.f32.mrb[0].mxu0
        %v915 = vadd.f32 0.0, %v914
        %v916 = vpop.f32.mrb[0].mxu0
        %v917 = vpop.f32.mrb[0].mxu0
        %v918 = vadd.f32 0.0, %v917
        %v919 = vpop.f32.mrb[0].mxu0
        %920 = vdwg.mxu0
        %v921 = vpack.c.bf16 %v918, %v915
        %v922 = vld [vmem:[#allocation8] sm:$0xf]
        %s923 = scalar_lea.vmem %s268, 80 [#allocation5]
        %v924 = vld [vmem:[%s923] sm:$0xff]
        %v925 = vld [vmem:[%s923 + $0x8] sm:$0xff]
        %v927 = vsel %vm318, %v921, 0
        %v930 = vsel %vm322, %v922, 0
        %932 = vmatprep.subr.bf16.mxu0 0
        %933 = vmatpush1.bf16.msra.mxu0 %v930
        %934 = vmatprep.subr.bf16.mxu0 0
        %935 = vmatpush1.bf16.msra.mxu0 0
        %936 = vmatprep.subr.bf16.mxu0 0
        %937 = vmatpush1.bf16.msra.mxu0 0
        %938 = vmatprep.subr.bf16.mxu0 0
        %939 = vmatpush1.bf16.msra.mxu0 0
        %940 = vmatprep.subr.bf16.mxu0 0
        %941 = vmatpush1.bf16.msra.mxu0 0
        %942 = vmatprep.subr.bf16.mxu0 0
        %943 = vmatpush1.bf16.msra.mxu0 0
        %944 = vmatprep.subr.bf16.mxu0 0
        %945 = vmatpush1.bf16.msra.mxu0 0
        %946 = vmatprep.subr.bf16.mxu0 0
        %947 = vmatpush1.bf16.msra.mxu0 0
        %948 = vmatprep.subr.bf16.mxu0 0
        %949 = vmatpush1.bf16.msra.mxu0 0
        %950 = vmatprep.subr.bf16.mxu0 0
        %951 = vmatpush1.bf16.msra.mxu0 0
        %952 = vmatprep.subr.bf16.mxu0 0
        %953 = vmatpush1.bf16.msra.mxu0 0
        %954 = vmatprep.subr.bf16.mxu0 0
        %955 = vmatpush1.bf16.msra.mxu0 0
        %956 = vmatprep.subr.bf16.mxu0 0
        %957 = vmatpush1.bf16.msra.mxu0 0
        %958 = vmatprep.subr.bf16.mxu0 0
        %959 = vmatpush1.bf16.msra.mxu0 0
        %960 = vmatprep.subr.bf16.mxu0 0
        %961 = vmatpush1.bf16.msra.mxu0 0
        %962 = vmatprep.subr.bf16.mxu0 0
        %963 = vmatpush1.bf16.msra.mxu0 0
        %964 = vmatprep.mubr.bf16.mxu0 0
        %965 = vmatmul.mubr.bf16.gmra.mrb[0].mxu0 %v927
        %v966 = vpop.f32.mrb[0].mxu0
        %v967 = vadd.f32 %v924, %v966
        %v968 = vpop.f32.mrb[0].mxu0
        %v969 = vpop.f32.mrb[0].mxu0
        %v970 = vadd.f32 %v925, %v969
        %v971 = vpop.f32.mrb[0].mxu0
        %972 = vdwg.mxu0
        %s973 = scalar_lea.vmem %s305, 80 [#allocation10]
        %974 = vst.msk [vmem:[%s973] sm:$0xff] %vm418, %v967
        %975 = vst.msk [vmem:[%s973 + $0x8] sm:$0xff] %vm418, %v970
        %v976 = vld [vmem:[#allocation7] sm:$0xf]
        %v977 = vld [vmem:[#allocation7 + $0x4] sm:$0xf]
        %s978 = scalar_lea.vmem %s259, 24 [#allocation2]
        %v979 = vld [vmem:[%s978] sm:$0xf]
        %v982 = vunpack.c.l.b16 %v976
        %v983 = vunpack.c.l.b16 %v977
        %v984 = vpack.c.b16 %v983, %v982
        %v986 = vsel %vm318, %v984, 0
        %v989 = vsel %vm322, %v979, 0
        %991 = vmatprep.subr.bf16.mxu0 0
        %992 = vmatpush1.bf16.msra.mxu0 %v989
        %993 = vmatprep.subr.bf16.mxu0 0
        %994 = vmatpush1.bf16.msra.mxu0 0
        %995 = vmatprep.subr.bf16.mxu0 0
        %996 = vmatpush1.bf16.msra.mxu0 0
        %997 = vmatprep.subr.bf16.mxu0 0
        %998 = vmatpush1.bf16.msra.mxu0 0
        %999 = vmatprep.subr.bf16.mxu0 0
        %1000 = vmatpush1.bf16.msra.mxu0 0
        %1001 = vmatprep.subr.bf16.mxu0 0
        %1002 = vmatpush1.bf16.msra.mxu0 0
        %1003 = vmatprep.subr.bf16.mxu0 0
        %1004 = vmatpush1.bf16.msra.mxu0 0
        %1005 = vmatprep.subr.bf16.mxu0 0
        %1006 = vmatpush1.bf16.msra.mxu0 0
        %1007 = vmatprep.subr.bf16.mxu0 0
        %1008 = vmatpush1.bf16.msra.mxu0 0
        %1009 = vmatprep.subr.bf16.mxu0 0
        %1010 = vmatpush1.bf16.msra.mxu0 0
        %1011 = vmatprep.subr.bf16.mxu0 0
        %1012 = vmatpush1.bf16.msra.mxu0 0
        %1013 = vmatprep.subr.bf16.mxu0 0
        %1014 = vmatpush1.bf16.msra.mxu0 0
        %1015 = vmatprep.subr.bf16.mxu0 0
        %1016 = vmatpush1.bf16.msra.mxu0 0
        %1017 = vmatprep.subr.bf16.mxu0 0
        %1018 = vmatpush1.bf16.msra.mxu0 0
        %1019 = vmatprep.subr.bf16.mxu0 0
        %1020 = vmatpush1.bf16.msra.mxu0 0
        %1021 = vmatprep.subr.bf16.mxu0 0
        %1022 = vmatpush1.bf16.msra.mxu0 0
        %1023 = vmatprep.mubr.bf16.mxu0 0
        %1024 = vmatmul.mubr.bf16.gmra.mrb[0].mxu0 %v986
        %v1025 = vpop.f32.mrb[0].mxu0
        %v1026 = vadd.f32 0.0, %v1025
        %v1027 = vpop.f32.mrb[0].mxu0
        %v1028 = vpop.f32.mrb[0].mxu0
        %v1029 = vadd.f32 0.0, %v1028
        %v1030 = vpop.f32.mrb[0].mxu0
        %1031 = vdwg.mxu0
        %v1032 = vpack.c.bf16 %v1029, %v1026
        %v1033 = vld [vmem:[#allocation8] sm:$0xf]
        %s1034 = scalar_lea.vmem %s268, 96 [#allocation5]
        %v1035 = vld [vmem:[%s1034] sm:$0xff]
        %v1036 = vld [vmem:[%s1034 + $0x8] sm:$0xff]
        %v1038 = vsel %vm318, %v1032, 0
        %v1041 = vsel %vm322, %v1033, 0
        %1043 = vmatprep.subr.bf16.mxu0 0
        %1044 = vmatpush1.bf16.msra.mxu0 %v1041
        %1045 = vmatprep.subr.bf16.mxu0 0
        %1046 = vmatpush1.bf16.msra.mxu0 0
        %1047 = vmatprep.subr.bf16.mxu0 0
        %1048 = vmatpush1.bf16.msra.mxu0 0
        %1049 = vmatprep.subr.bf16.mxu0 0
        %1050 = vmatpush1.bf16.msra.mxu0 0
        %1051 = vmatprep.subr.bf16.mxu0 0
        %1052 = vmatpush1.bf16.msra.mxu0 0
        %1053 = vmatprep.subr.bf16.mxu0 0
        %1054 = vmatpush1.bf16.msra.mxu0 0
        %1055 = vmatprep.subr.bf16.mxu0 0
        %1056 = vmatpush1.bf16.msra.mxu0 0
        %1057 = vmatprep.subr.bf16.mxu0 0
        %1058 = vmatpush1.bf16.msra.mxu0 0
        %1059 = vmatprep.subr.bf16.mxu0 0
        %1060 = vmatpush1.bf16.msra.mxu0 0
        %1061 = vmatprep.subr.bf16.mxu0 0
        %1062 = vmatpush1.bf16.msra.mxu0 0
        %1063 = vmatprep.subr.bf16.mxu0 0
        %1064 = vmatpush1.bf16.msra.mxu0 0
        %1065 = vmatprep.subr.bf16.mxu0 0
        %1066 = vmatpush1.bf16.msra.mxu0 0
        %1067 = vmatprep.subr.bf16.mxu0 0
        %1068 = vmatpush1.bf16.msra.mxu0 0
        %1069 = vmatprep.subr.bf16.mxu0 0
        %1070 = vmatpush1.bf16.msra.mxu0 0
        %1071 = vmatprep.subr.bf16.mxu0 0
        %1072 = vmatpush1.bf16.msra.mxu0 0
        %1073 = vmatprep.subr.bf16.mxu0 0
        %1074 = vmatpush1.bf16.msra.mxu0 0
        %1075 = vmatprep.mubr.bf16.mxu0 0
        %1076 = vmatmul.mubr.bf16.gmra.mrb[0].mxu0 %v1038
        %v1077 = vpop.f32.mrb[0].mxu0
        %v1078 = vadd.f32 %v1035, %v1077
        %v1079 = vpop.f32.mrb[0].mxu0
        %v1080 = vpop.f32.mrb[0].mxu0
        %v1081 = vadd.f32 %v1036, %v1080
        %v1082 = vpop.f32.mrb[0].mxu0
        %1083 = vdwg.mxu0
        %s1084 = scalar_lea.vmem %s305, 96 [#allocation10]
        %1085 = vst.msk [vmem:[%s1084] sm:$0xff] %vm418, %v1078
        %1086 = vst.msk [vmem:[%s1084 + $0x8] sm:$0xff] %vm418, %v1081
        %v1087 = vld [vmem:[#allocation7] sm:$0xf]
        %v1088 = vld [vmem:[#allocation7 + $0x4] sm:$0xf]
        %s1089 = scalar_lea.vmem %s259, 28 [#allocation2]
        %v1090 = vld [vmem:[%s1089] sm:$0xf]
        %v1093 = vunpack.c.l.b16 %v1087
        %v1094 = vunpack.c.l.b16 %v1088
        %v1095 = vpack.c.b16 %v1094, %v1093
        %v1097 = vsel %vm318, %v1095, 0
        %v1100 = vsel %vm322, %v1090, 0
        %1102 = vmatprep.subr.bf16.mxu0 0
        %1103 = vmatpush1.bf16.msra.mxu0 %v1100
        %1104 = vmatprep.subr.bf16.mxu0 0
        %1105 = vmatpush1.bf16.msra.mxu0 0
        %1106 = vmatprep.subr.bf16.mxu0 0
        %1107 = vmatpush1.bf16.msra.mxu0 0
        %1108 = vmatprep.subr.bf16.mxu0 0
        %1109 = vmatpush1.bf16.msra.mxu0 0
        %1110 = vmatprep.subr.bf16.mxu0 0
        %1111 = vmatpush1.bf16.msra.mxu0 0
        %1112 = vmatprep.subr.bf16.mxu0 0
        %1113 = vmatpush1.bf16.msra.mxu0 0
        %1114 = vmatprep.subr.bf16.mxu0 0
        %1115 = vmatpush1.bf16.msra.mxu0 0
        %1116 = vmatprep.subr.bf16.mxu0 0
        %1117 = vmatpush1.bf16.msra.mxu0 0
        %1118 = vmatprep.subr.bf16.mxu0 0
        %1119 = vmatpush1.bf16.msra.mxu0 0
        %1120 = vmatprep.subr.bf16.mxu0 0
        %1121 = vmatpush1.bf16.msra.mxu0 0
        %1122 = vmatprep.subr.bf16.mxu0 0
        %1123 = vmatpush1.bf16.msra.mxu0 0
        %1124 = vmatprep.subr.bf16.mxu0 0
        %1125 = vmatpush1.bf16.msra.mxu0 0
        %1126 = vmatprep.subr.bf16.mxu0 0
        %1127 = vmatpush1.bf16.msra.mxu0 0
        %1128 = vmatprep.subr.bf16.mxu0 0
        %1129 = vmatpush1.bf16.msra.mxu0 0
        %1130 = vmatprep.subr.bf16.mxu0 0
        %1131 = vmatpush1.bf16.msra.mxu0 0
        %1132 = vmatprep.subr.bf16.mxu0 0
        %1133 = vmatpush1.bf16.msra.mxu0 0
        %1134 = vmatprep.mubr.bf16.mxu0 0
        %1135 = vmatmul.mubr.bf16.gmra.mrb[0].mxu0 %v1097
        %v1136 = vpop.f32.mrb[0].mxu0
        %v1137 = vadd.f32 0.0, %v1136
        %v1138 = vpop.f32.mrb[0].mxu0
        %v1139 = vpop.f32.mrb[0].mxu0
        %v1140 = vadd.f32 0.0, %v1139
        %v1141 = vpop.f32.mrb[0].mxu0
        %1142 = vdwg.mxu0
        %v1143 = vpack.c.bf16 %v1140, %v1137
        %v1144 = vld [vmem:[#allocation8] sm:$0xf]
        %s1145 = scalar_lea.vmem %s268, 112 [#allocation5]
        %v1146 = vld [vmem:[%s1145] sm:$0xff]
        %v1147 = vld [vmem:[%s1145 + $0x8] sm:$0xff]
        %v1149 = vsel %vm318, %v1143, 0
        %v1152 = vsel %vm322, %v1144, 0
        %1154 = vmatprep.subr.bf16.mxu0 0
        %1155 = vmatpush1.bf16.msra.mxu0 %v1152
        %1156 = vmatprep.subr.bf16.mxu0 0
        %1157 = vmatpush1.bf16.msra.mxu0 0
        %1158 = vmatprep.subr.bf16.mxu0 0
        %1159 = vmatpush1.bf16.msra.mxu0 0
        %1160 = vmatprep.subr.bf16.mxu0 0
        %1161 = vmatpush1.bf16.msra.mxu0 0
        %1162 = vmatprep.subr.bf16.mxu0 0
        %1163 = vmatpush1.bf16.msra.mxu0 0
        %1164 = vmatprep.subr.bf16.mxu0 0
        %1165 = vmatpush1.bf16.msra.mxu0 0
        %1166 = vmatprep.subr.bf16.mxu0 0
        %1167 = vmatpush1.bf16.msra.mxu0 0
        %1168 = vmatprep.subr.bf16.mxu0 0
        %1169 = vmatpush1.bf16.msra.mxu0 0
        %1170 = vmatprep.subr.bf16.mxu0 0
        %1171 = vmatpush1.bf16.msra.mxu0 0
        %1172 = vmatprep.subr.bf16.mxu0 0
        %1173 = vmatpush1.bf16.msra.mxu0 0
        %1174 = vmatprep.subr.bf16.mxu0 0
        %1175 = vmatpush1.bf16.msra.mxu0 0
        %1176 = vmatprep.subr.bf16.mxu0 0
        %1177 = vmatpush1.bf16.msra.mxu0 0
        %1178 = vmatprep.subr.bf16.mxu0 0
        %1179 = vmatpush1.bf16.msra.mxu0 0
        %1180 = vmatprep.subr.bf16.mxu0 0
        %1181 = vmatpush1.bf16.msra.mxu0 0
        %1182 = vmatprep.subr.bf16.mxu0 0
        %1183 = vmatpush1.bf16.msra.mxu0 0
        %1184 = vmatprep.subr.bf16.mxu0 0
        %1185 = vmatpush1.bf16.msra.mxu0 0
        %1186 = vmatprep.mubr.bf16.mxu0 0
        %1187 = vmatmul.mubr.bf16.gmra.mrb[0].mxu0 %v1149
        %v1188 = vpop.f32.mrb[0].mxu0
        %v1189 = vadd.f32 %v1146, %v1188
        %v1190 = vpop.f32.mrb[0].mxu0
        %v1191 = vpop.f32.mrb[0].mxu0
        %v1192 = vadd.f32 %v1147, %v1191
        %v1193 = vpop.f32.mrb[0].mxu0
        %1194 = vdwg.mxu0
        %s1195 = scalar_lea.vmem %s305, 112 [#allocation10]
        %1196 = vst.msk [vmem:[%s1195] sm:$0xff] %vm418, %v1189
        %1197 = vst.msk [vmem:[%s1195 + $0x8] sm:$0xff] %vm418, %v1192
        %s1198 = sand.u32 %s145, 1
        %s1199 = scalar_lea.sflag [#allocation4], %s1198
        %s1200 = sand.u32 %s145, 1
        %s1201 = smul.addr %s1200, 128
        %s1202 = scalar_lea.vmem [#allocation10], %s1201
        // Predicated region
        $region53: #{residual_block_forward.5} parent=35 // pred_check
          %p1203 = pneg %p155
        $region54: #{residual_block_forward.5} parent=35 // pred_check_branch
          %1205 = sbr.rel (%p1203) target = $region56
        $region55: #{residual_block_forward.5} parent=35 // pred_region
          %s1206 = smul.u32 8, %s30
          %s1208 = ssub.s32 2048, 2048
          %1209 = vsyncadd %s1199, %s1208
          %s1210 = smul.addr %s1206, 2
          %s1211 = smul.addr %s29, 32
          %s1212 = sadd.s32 %s1210, %s1211
          %s1213 = smul.addr %s1212, 128
          %s1214 = scalar_lea.hbm %s4, %s1213
          %s1215 = sshll.u32 %s1202, 4
          %s1216 = int_to_ptr.vmem [resolvable:$true] %s1215
          %1221 = dma.vmem_to_hbm [thread:$0]  %s1216, 2048, %s1214, %s1199, 128, 128, 8
        $region56: #{residual_block_forward.5} parent=35 // pred_fallthru
          _
      $region36: #{residual_block_forward.5} parent=5 // pred_fallthru
        _
      %p1222 = scmp.le.s32.totalorder 2, %s20
      // Predicated region
      $region57: #{residual_block_forward.5} parent=5 // pred_check
        %p1223 = pneg %p1222
      $region58: #{residual_block_forward.5} parent=5 // pred_check_branch
        %1225 = sbr.rel (%p1223) target = $region60
      $region59: #{residual_block_forward.5} parent=5 // pred_region
        %s1226 = ssub.s32 %s20, 2
        // Predicated region
        $region61: #{residual_block_forward.5} parent=59 // pred_check
          %p1227 = pneg %p161
        $region62: #{residual_block_forward.5} parent=59 // pred_check_branch
          %1229 = sbr.rel (%p1227) target = $region64
        $region63: #{residual_block_forward.5} parent=59 // pred_region
          %s1230 = sand.u32 %s146, 1
          %s1231 = scalar_lea.sflag [#allocation4], %s1230
          %s1232 = sand.u32 %s146, 1
          %s1233 = smul.addr %s1232, 128
          %s1234 = scalar_lea.vmem [#allocation10], %s1233
          %1235 = dma.done %s1231, 2048
        $region64: #{residual_block_forward.5} parent=59 // pred_fallthru
          _
      $region60: #{residual_block_forward.5} parent=5 // pred_fallthru
        _
    $region6: #{residual_block_forward.5} parent=1 // loop_footer
      %s24 = sadd.s32 1, %s20
    $region7: #{residual_block_forward.5} parent=1 // loop_footer_branch
      %19 = sbr.rel target = $region3
    $region8: #{residual_block_forward.5} parent=1 // loop_exit
      _
    %1236 = vsyncpa [#allocation3], 1
    %s1237 = scalar_lea.sflag [#allocation3], 1
    %1238 = vsyncpa %s1237, 1
    %1239 = vsyncpa [#allocation6], 1
    %s1240 = scalar_lea.sflag [#allocation6], 1
    %1241 = vsyncpa %s1240, 1
    %1242 = vsyncpa [#allocation9], 1
    %1243 = vsyncpa [#allocation4], 1
    %s1244 = scalar_lea.sflag [#allocation4], 1
    %1245 = vsyncpa %s1244, 1

</llo_original>
